<compile_context>
chip_gen: v7x
topology: tpu7x:2x2x1
jax: 0.10.0
libtpu: 0.0.40
codegen_flags: <defaults>
</compile_context>

<pallas_src>
import functools

import jax
import jax.numpy as jnp
from jax.experimental import pallas as pl
from jax.experimental.pallas import tpu as pltpu


def _subgraph_kernel(x_ref, w1_ref, b1_ref, w2_ref, b2_ref, o_ref,
                     *, tb, n, cout, compute_dtype):
    # ---- MLP on the stacked [tb*n, Cin] block (M = tb*n, 512-1024 at defaults).
    # Matmul operands are `compute_dtype` (bf16 by default), accumulation in f32.
    x = x_ref[...]
    h = jnp.dot(x, w1_ref[...], preferred_element_type=jnp.float32) + b1_ref[...]
    h = jnp.maximum(h, 0.0)
    y = (jnp.dot(h.astype(compute_dtype), w2_ref[...],
                 preferred_element_type=jnp.float32) + b2_ref[...])

    # ---- Per-subgraph LayerNorm over all (n, cout) elements (global mean/var),
    # eps = 1e-5, no affine.  Fused stats: sum and sum-of-squares are independent
    # reductions (no mean -> var serial dependency).  All math in f32.
    yb = y.reshape(tb, n, cout)                                   # [tb, n, cout]
    s1 = jnp.sum(jnp.sum(yb, axis=2, keepdims=True), axis=1, keepdims=True)
    s2 = jnp.sum(jnp.sum(yb * yb, axis=2, keepdims=True), axis=1, keepdims=True)
    inv_cnt = 1.0 / float(n * cout)
    mean = s1 * inv_cnt
    var = jnp.maximum(s2 * inv_cnt - mean * mean, 0.0)            # guard cancellation
    inv_std = jax.lax.rsqrt(var + 1e-5)                           # EUP slot
    enc = jnp.maximum((yb - mean) * inv_std, 0.0)                 # [tb, n, cout]

    # ---- MaxPool1d(kernel_size=n) over the node axis, broadcast back to rows.
    pooled = jnp.max(enc, axis=1, keepdims=True)                  # [tb, 1, cout]
    pooled_rep = jnp.broadcast_to(pooled, enc.shape)              # [tb, n, cout]

    # ---- torch.cat([enc, pooled_rep], dim=1): build the full 2*cout-wide slab in
    # registers and emit ONE lane-dense store (2*cout = 128 lanes, unmasked vst).
    out = jnp.concatenate([enc, pooled_rep], axis=-1)             # [tb, n, 2*cout]
    o_ref[...] = out.reshape(tb * n, 2 * cout)


def _choose_tb(b_total, n, *, max_rows=1024, min_grid=2):
    """Largest subgraphs-per-step tile with tb*n <= max_rows and grid >= min_grid."""
    fallback = None
    for tb in range(b_total, 0, -1):
        if b_total % tb:
            continue
        rows = tb * n
        if rows > max_rows:
            continue
        if tb != b_total and rows % 8 != 0:   # sublane alignment unless full-array block
            continue
        if fallback is None:
            fallback = tb                     # biggest tile even if grid collapses to 1
        if b_total // tb >= min_grid:
            return tb
    return fallback if fallback is not None else b_total


def subgraph_layer_batched(x, w1, b1, w2, b2, *, tb=None,
                           compute_dtype=jnp.bfloat16):
    """x: [B, N, Cin] -> [B, N, 2*Cout]; each subgraph processed independently.

    w1/w2 are the already-transposed (in, out) matmul weights; b1/b2 may be
    (C,) or (1, C).  compute_dtype is the MXU operand dtype (bf16 default);
    all normalization / activation math and the output remain f32.
    """
    b_total, n, cin = x.shape
    ch = w1.shape[1]
    cout = w2.shape[1]
    b1 = jnp.asarray(b1, jnp.float32).reshape(1, ch)
    b2 = jnp.asarray(b2, jnp.float32).reshape(1, cout)

    if tb is None:
        tb = _choose_tb(b_total, n)
    tb = min(tb, b_total)
    assert b_total % tb == 0, (b_total, tb)
    rows = tb * n
    grid = (b_total // tb,)

    # Cast the streamed input + weights to the MXU operand dtype.  In real
    # pipelines the producer should already emit bf16 so this cast is free.
    x_flat = x.reshape(b_total * n, cin).astype(compute_dtype)
    w1c = w1.astype(compute_dtype)
    w2c = w2.astype(compute_dtype)

    out_flat = pl.pallas_call(
        functools.partial(_subgraph_kernel, tb=tb, n=n, cout=cout,
                          compute_dtype=compute_dtype),
        out_shape=jax.ShapeDtypeStruct((b_total * n, 2 * cout), jnp.float32),
        grid_spec=pltpu.PrefetchScalarGridSpec(
            num_scalar_prefetch=0,
            grid=grid,
            in_specs=[
                pl.BlockSpec((rows, cin), lambda i: (i, 0)),   # x tiles per step
                pl.BlockSpec((cin, ch), lambda i: (0, 0)),      # weights/biases stay
                pl.BlockSpec((1, ch), lambda i: (0, 0)),        # resident (constant
                pl.BlockSpec((ch, cout), lambda i: (0, 0)),     # block index => single
                pl.BlockSpec((1, cout), lambda i: (0, 0)),      # DMA across the grid)
            ],
            out_specs=pl.BlockSpec((rows, 2 * cout), lambda i: (i, 0)),
        ),
        compiler_params=pltpu.CompilerParams(
            dimension_semantics=("parallel",)),  # batch axis sharded across TCs (v7x)
    )(x_flat, w1c, b1, w2c, b2)
    return out_flat.reshape(b_total, n, 2 * cout)


def reference(x, w1, b1, w2, b2):
    # Pure-JAX reference mirroring the PyTorch forward (two-pass layer_norm).
    b1 = jnp.asarray(b1).reshape(1, -1)
    b2 = jnp.asarray(b2).reshape(1, -1)
    h = jnp.maximum(x @ w1 + b1, 0.0)
    y = h @ w2 + b2
    mean = jnp.mean(y)
    var = jnp.mean((y - mean) ** 2)
    enc = jnp.maximum((y - mean) / jnp.sqrt(var + 1e-5), 0.0)
    pooled = jnp.max(enc, axis=0, keepdims=True)
    return jnp.concatenate([enc, jnp.broadcast_to(pooled, enc.shape)], axis=1)


def subgraph_layer(x, w1, b1, w2, b2):
    """Single-subgraph forward matching the PyTorch module: x [N, Cin] -> [N, 2*Cout].

    An (N=8, Cin=128) subgraph is ~4 KiB of work, so a pallas_call would be pure
    launch/per-step overhead -- route this path through plain XLA and reserve the
    Pallas kernel for batched work (subgraph_layer_batched).
    """
    return reference(x, w1, b1, w2, b2)


if __name__ == "__main__":
    # Module defaults: input_channels=128, hidden_channels=32, out_channels=64.
    N, C_IN, C_HID, C_OUT = 8, 128, 32, 64
    B = 128  # subgraphs; tb auto-chosen = 64 -> 512-row blocks, 2 parallel grid steps

    key = jax.random.PRNGKey(0)
    kx, kw1, kb1, kw2, kb2 = jax.random.split(key, 5)

    xb = jax.random.normal(kx, (B, N, C_IN), dtype=jnp.float32)
    w1 = jax.random.normal(kw1, (C_IN, C_HID), dtype=jnp.float32) * 0.05
    b1 = jax.random.normal(kb1, (C_HID,), dtype=jnp.float32) * 0.05
    w2 = jax.random.normal(kw2, (C_HID, C_OUT), dtype=jnp.float32) * 0.05
    b2 = jax.random.normal(kb2, (C_OUT,), dtype=jnp.float32) * 0.05

    ref_b = jax.vmap(lambda xi: reference(xi, w1, b1, w2, b2))(xb)

    # f32 operand path: bit-for-bit-ish match against the two-pass reference.
    out_f32 = subgraph_layer_batched(xb, w1, b1, w2, b2, compute_dtype=jnp.float32)
    jax.block_until_ready(out_f32)
    assert out_f32.shape == (B, N, 2 * C_OUT), out_f32.shape
    assert jnp.allclose(out_f32, ref_b, atol=1e-4, rtol=1e-4), float(
        jnp.max(jnp.abs(out_f32 - ref_b)))

    # Default bf16-operand path: halves HBM read traffic for x/w1/w2, f32 accum +
    # f32 LN/ReLU, so only small MXU-operand rounding vs. the f32 reference.
    out_bf16 = subgraph_layer_batched(xb, w1, b1, w2, b2)
    jax.block_until_ready(out_bf16)
    assert out_bf16.shape == (B, N, 2 * C_OUT), out_bf16.shape
    assert jnp.allclose(out_bf16, ref_b, atol=5e-2, rtol=5e-2), float(
        jnp.max(jnp.abs(out_bf16 - ref_b)))

    # Single-subgraph path (exact signature of the PyTorch module's forward).
    out_1 = subgraph_layer(xb[0], w1, b1, w2, b2)
    jax.block_until_ready(out_1)
    assert out_1.shape == (N, 2 * C_OUT)
    assert jnp.allclose(out_1, ref_b[0], atol=1e-4, rtol=1e-4)

    print("KERNEL_OK")
</pallas_src>

<mosaic_0001>
module attributes {stable_mosaic.version = 11 : i64} {
  func.func @_subgraph_kernel(%arg0: i32, %arg1: memref<512x128xf32, #tpu.memory_space<vmem>>, %arg2: memref<128x32xf32, #tpu.memory_space<vmem>>, %arg3: memref<1x32xf32, #tpu.memory_space<vmem>>, %arg4: memref<32x64xf32, #tpu.memory_space<vmem>>, %arg5: memref<1x64xf32, #tpu.memory_space<vmem>>, %arg6: memref<512x128xf32, #tpu.memory_space<vmem>>) attributes {dimension_semantics = [#tpu.dimension_semantics<parallel>], iteration_bounds = array<i64: 2>, scalar_prefetch = 0 : i64, scratch_operands = 0 : i64, tpu.core_type = #tpu.core_type<tc>, window_params = [{transform_indices = @transform_0, window_bounds = array<i64: 512, 128>}, {pipeline_mode = #tpu.pipeline_mode<synchronous>, transform_indices = @transform_1, window_bounds = array<i64: 128, 32>}, {pipeline_mode = #tpu.pipeline_mode<synchronous>, transform_indices = @transform_2, window_bounds = array<i64: 1, 32>}, {pipeline_mode = #tpu.pipeline_mode<synchronous>, transform_indices = @transform_3, window_bounds = array<i64: 32, 64>}, {pipeline_mode = #tpu.pipeline_mode<synchronous>, transform_indices = @transform_4, window_bounds = array<i64: 1, 64>}, {transform_indices = @transform_5, window_bounds = array<i64: 512, 128>}]} {
    %c0 = arith.constant 0 : index
    %c0_0 = arith.constant 0 : index
    %0 = vector.load %arg1[%c0, %c0_0] : memref<512x128xf32, #tpu.memory_space<vmem>>, vector<512x128xf32>
    %c0_1 = arith.constant 0 : index
    %c0_2 = arith.constant 0 : index
    %1 = vector.load %arg2[%c0_1, %c0_2] : memref<128x32xf32, #tpu.memory_space<vmem>>, vector<128x32xf32>
    %cst = arith.constant dense<0.000000e+00> : vector<512x32xf32>
    %2 = tpu.matmul %0, %1, %cst {dimension_numbers = #tpu.dot_dimension_numbers<[1], [0], [0], [1], [0, 0, 1, 1], [], []>} : vector<512x128xf32>, vector<128x32xf32>, vector<512x32xf32> -> vector<512x32xf32>
    %c0_3 = arith.constant 0 : index
    %c0_4 = arith.constant 0 : index
    %3 = vector.load %arg3[%c0_3, %c0_4] : memref<1x32xf32, #tpu.memory_space<vmem>>, vector<1x32xf32>
    %4 = vector.broadcast %3 : vector<1x32xf32> to vector<512x32xf32>
    %5 = arith.addf %2, %4 : vector<512x32xf32>
    %cst_5 = arith.constant 0.000000e+00 : f32
    %6 = vector.broadcast %cst_5 : f32 to vector<512x32xf32>
    %7 = arith.maximumf %5, %6 : vector<512x32xf32>
    %c0_6 = arith.constant 0 : index
    %c0_7 = arith.constant 0 : index
    %8 = vector.load %arg4[%c0_6, %c0_7] : memref<32x64xf32, #tpu.memory_space<vmem>>, vector<32x64xf32>
    %cst_8 = arith.constant dense<0.000000e+00> : vector<512x64xf32>
    %9 = tpu.matmul %7, %8, %cst_8 {dimension_numbers = #tpu.dot_dimension_numbers<[1], [0], [0], [1], [0, 0, 1, 1], [], []>} : vector<512x32xf32>, vector<32x64xf32>, vector<512x64xf32> -> vector<512x64xf32>
    %c0_9 = arith.constant 0 : index
    %c0_10 = arith.constant 0 : index
    %10 = vector.load %arg5[%c0_9, %c0_10] : memref<1x64xf32, #tpu.memory_space<vmem>>, vector<1x64xf32>
    %11 = vector.broadcast %10 : vector<1x64xf32> to vector<512x64xf32>
    %12 = arith.addf %9, %11 : vector<512x64xf32>
    %13 = vector.shape_cast %12 : vector<512x64xf32> to vector<64x8x64xf32>
    %cst_11 = arith.constant dense<0.000000e+00> : vector<64x8xf32>
    %14 = vector.multi_reduction <add>, %13, %cst_11 [2] : vector<64x8x64xf32> to vector<64x8xf32>
    %15 = vector.shape_cast %14 : vector<64x8xf32> to vector<64x8x1xf32>
    %cst_12 = arith.constant dense<0.000000e+00> : vector<64x1xf32>
    %16 = vector.multi_reduction <add>, %15, %cst_12 [1] : vector<64x8x1xf32> to vector<64x1xf32>
    %17 = vector.shape_cast %16 : vector<64x1xf32> to vector<64x1x1xf32>
    %18 = arith.mulf %13, %13 : vector<64x8x64xf32>
    %cst_13 = arith.constant dense<0.000000e+00> : vector<64x8xf32>
    %19 = vector.multi_reduction <add>, %18, %cst_13 [2] : vector<64x8x64xf32> to vector<64x8xf32>
    %20 = vector.shape_cast %19 : vector<64x8xf32> to vector<64x8x1xf32>
    %cst_14 = arith.constant dense<0.000000e+00> : vector<64x1xf32>
    %21 = vector.multi_reduction <add>, %20, %cst_14 [1] : vector<64x8x1xf32> to vector<64x1xf32>
    %22 = vector.shape_cast %21 : vector<64x1xf32> to vector<64x1x1xf32>
    %cst_15 = arith.constant 0.001953125 : f32
    %23 = vector.broadcast %cst_15 : f32 to vector<64x1x1xf32>
    %24 = arith.mulf %17, %23 : vector<64x1x1xf32>
    %cst_16 = arith.constant 0.001953125 : f32
    %25 = vector.broadcast %cst_16 : f32 to vector<64x1x1xf32>
    %26 = arith.mulf %22, %25 : vector<64x1x1xf32>
    %27 = arith.mulf %24, %24 : vector<64x1x1xf32>
    %28 = arith.subf %26, %27 : vector<64x1x1xf32>
    %cst_17 = arith.constant 0.000000e+00 : f32
    %29 = vector.broadcast %cst_17 : f32 to vector<64x1x1xf32>
    %30 = arith.maximumf %28, %29 : vector<64x1x1xf32>
    %cst_18 = arith.constant 9.99999974E-6 : f32
    %31 = vector.broadcast %cst_18 : f32 to vector<64x1x1xf32>
    %32 = arith.addf %30, %31 : vector<64x1x1xf32>
    %33 = math.rsqrt %32 : vector<64x1x1xf32>
    %34 = vector.broadcast %24 : vector<64x1x1xf32> to vector<64x8x64xf32>
    %35 = arith.subf %13, %34 : vector<64x8x64xf32>
    %36 = vector.broadcast %33 : vector<64x1x1xf32> to vector<64x8x64xf32>
    %37 = arith.mulf %35, %36 : vector<64x8x64xf32>
    %cst_19 = arith.constant 0.000000e+00 : f32
    %38 = vector.broadcast %cst_19 : f32 to vector<64x8x64xf32>
    %39 = arith.maximumf %37, %38 : vector<64x8x64xf32>
    %cst_20 = arith.constant dense<0xFF800000> : vector<64x64xf32>
    %40 = vector.multi_reduction <maximumf>, %39, %cst_20 [1] : vector<64x8x64xf32> to vector<64x64xf32>
    %41 = vector.shape_cast %40 : vector<64x64xf32> to vector<64x1x64xf32>
    %42 = vector.shape_cast %41 : vector<64x1x64xf32> to vector<64x1x64xf32>
    %43 = vector.broadcast %42 : vector<64x1x64xf32> to vector<64x8x64xf32>
    %44 = tpu.concatenate %39, %43 in 2 : vector<64x8x64xf32>, vector<64x8x64xf32> -> vector<64x8x128xf32>
    %45 = vector.shape_cast %44 : vector<64x8x128xf32> to vector<512x128xf32>
    %c0_21 = arith.constant 0 : index
    %c0_22 = arith.constant 0 : index
    %46 = vector.load %arg6[%c0_21, %c0_22] : memref<512x128xf32, #tpu.memory_space<vmem>>, vector<512x128xf32>
    tpu.vector_store %arg6[%c0_21, %c0_22], %45 {strides = array<i32>} : memref<512x128xf32, #tpu.memory_space<vmem>>, vector<512x128xf32>,
    return
  }
  func.func @transform_0(%arg0: i32) -> (i32, i32) {
    %c0_i32 = arith.constant 0 : i32
    %c0_i32_0 = arith.constant 0 : i32
    return %arg0, %c0_i32 : i32, i32
  }
  func.func @transform_1(%arg0: i32) -> (i32, i32) {
    %c0_i32 = arith.constant 0 : i32
    %c0_i32_0 = arith.constant 0 : i32
    %c0_i32_1 = arith.constant 0 : i32
    return %c0_i32, %c0_i32_0 : i32, i32
  }
  func.func @transform_2(%arg0: i32) -> (i32, i32) {
    %c0_i32 = arith.constant 0 : i32
    %c0_i32_0 = arith.constant 0 : i32
    %c0_i32_1 = arith.constant 0 : i32
    return %c0_i32, %c0_i32_0 : i32, i32
  }
  func.func @transform_3(%arg0: i32) -> (i32, i32) {
    %c0_i32 = arith.constant 0 : i32
    %c0_i32_0 = arith.constant 0 : i32
    %c0_i32_1 = arith.constant 0 : i32
    return %c0_i32, %c0_i32_0 : i32, i32
  }
  func.func @transform_4(%arg0: i32) -> (i32, i32) {
    %c0_i32 = arith.constant 0 : i32
    %c0_i32_0 = arith.constant 0 : i32
    %c0_i32_1 = arith.constant 0 : i32
    return %c0_i32, %c0_i32_0 : i32, i32
  }
  func.func @transform_5(%arg0: i32) -> (i32, i32) {
    %c0_i32 = arith.constant 0 : i32
    %c0_i32_0 = arith.constant 0 : i32
    return %arg0, %c0_i32 : i32, i32
  }
}

</mosaic_0001>

<llo_original>
// kernel: tpu_custom_call.1
$region0: #{tpu_custom_call.1}
  #allocation0 [shape = 'u32[]', space=smem, size = 0x4, offset = 0x4, fixed_abs, tag = 'smem constant byte address 0x4 - core index']
  #allocation1 [shape = 'u32[144,128]{1,0:T(1,128)}', space=vmem, size = 0x12000, scoped, tag = 'internal scratch']
  %s0 = inlined_call_operand.hbm [shape: f32[1024,128], index: 0, kind: input, shape index: {}]
  %s1 = inlined_call_operand.vmem [shape: f32[128,32], index: 1, kind: input, shape index: {}]
  %s2 = inlined_call_operand.vmem [shape: f32[1,32], index: 2, kind: input, shape index: {}]
  %s3 = inlined_call_operand.vmem [shape: f32[32,64], index: 3, kind: input, shape index: {}]
  %s4 = inlined_call_operand.vmem [shape: f32[1,64], index: 4, kind: input, shape index: {}]
  %s5 = inlined_call_operand.hbm [shape: f32[1024,128], index: 5, kind: output, shape index: {}]
  %s6 = sld [smem:[#allocation0]]
  $region57: #{tpu_custom_call.1} parent=0
    _
  %s8 = ssub.s32 1, %s6
  %s9 = scalar_select 0, %s8, %s6
  $region1: #{tpu_custom_call.1} parent=0
    #allocation2 [shape = 'u8[524288]{0}', space=vmem, size = 0x80000, scoped, tag = 'input window, operand 0']
    #allocation3 [shape = 's32[2]{0}', space=sflag, size = 0x8, scoped, tag = 'scoped memory for tpu_custom_call.1']
    #allocation4 [shape = 's32[2]{0}', space=sflag, size = 0x8, scoped, tag = 'scoped memory for tpu_custom_call.1']
    #allocation5 [shape = 'u8[524288]{0}', space=vmem, size = 0x80000, scoped, tag = 'output window, operand 0']
    %10 = vsyncpa [#allocation3], 0
    %s11 = scalar_lea.sflag [#allocation3], 1
    %12 = vsyncpa %s11, 0
    %13 = vsyncpa [#allocation4], 0
    %s14 = scalar_lea.sflag [#allocation4], 1
    %15 = vsyncpa %s14, 0
    loop: start=0, step=1, limit=4
    $region2: #{tpu_custom_call.1} parent=1 // loop_pre_header
      _
    $region3: #{tpu_custom_call.1} parent=1 // loop_header
      %s17 = sphi 0, %s21
      %p18 = scmp.ge.s32.totalorder %s17, 4
      %s27 = sphi 0, %s29
      %s30 = sphi 0, %s27
      %s31 = sphi 0, %s30
      %s47 = sphi 0, %s31
      %s51 = sphi 0, %s51
      %s53 = sphi 0, %s51
      %s54 = sphi 0, %s53
      %s68 = sphi 0, %s54
      %s72 = sphi 0, %s72
      %s74 = sphi 0, %s72
      %s75 = sphi 0, %s74
      %s89 = sphi 0, %s75
      %s93 = sphi 0, %s93
      %s95 = sphi 0, %s93
      %s96 = sphi 0, %s95
      %s110 = sphi 0, %s96
      %s114 = sphi 0, %s114
      %s116 = sphi 0, %s114
      %s117 = sphi 0, %s116
      %s131 = sphi 0, %s117
      %s137 = sphi 0, %s139
      %s140 = sphi 0, %s137
      %s141 = sphi 0, %s140
      %s157 = sphi 0, %s141
    $region4: #{tpu_custom_call.1} parent=1 // loop_header_branch
      %20 = sbr.rel (%p18) target = $region8
    $region5: #{tpu_custom_call.1} parent=1 // loop_body
      %s22 = ssub.s32 %s17, 1
      %s23 = ssub.s32 %s17, 2
      %s24 = sadd.s32 %s17, 1
      %s25 = ssub.s32 %s17, %s24
      %p26 = scmp.eq.s32.totalorder %s25, 0
      %s28 = sadd.s32 %s27, 1
      %s29 = scalar_select %p26, %s27, %s28
      %p32 = pneg %p26
      %p33 = scmp.eq.s32.totalorder %s17, 1
      %p34 = por %p32, %p33
      %p35 = scmp.ne.s32.totalorder %s27, %s30
      %p36 = scmp.eq.s32.totalorder %s17, 0
      %p37 = por %p35, %p36
      %p38 = scmp.ne.s32.totalorder %s27, %s30
      %p39 = scmp.eq.s32.totalorder %s22, 1
      %p40 = por %p38, %p39
      %p41 = scmp.ne.s32.totalorder %s30, %s31
      %p42 = scmp.eq.s32.totalorder %s22, 0
      %p43 = por %p41, %p42
      %p44 = scmp.ne.s32.totalorder %s30, %s31
      %p45 = scmp.eq.s32.totalorder %s23, 1
      %p46 = por %p44, %p45
      %p48 = scmp.ne.s32.totalorder %s31, %s47
      %p49 = scmp.eq.s32.totalorder %s23, 0
      %p50 = por %p48, %p49
      %s52 = sadd.s32 %s51, 1
      %p55 = scmp.eq.s32.totalorder %s17, 1
      %p56 = scmp.ne.s32.totalorder %s51, %s53
      %p57 = scmp.eq.s32.totalorder %s17, 0
      %p58 = por %p56, %p57
      %p59 = scmp.ne.s32.totalorder %s51, %s53
      %p60 = scmp.eq.s32.totalorder %s22, 1
      %p61 = por %p59, %p60
      %p62 = scmp.ne.s32.totalorder %s53, %s54
      %p63 = scmp.eq.s32.totalorder %s22, 0
      %p64 = por %p62, %p63
      %p65 = scmp.ne.s32.totalorder %s53, %s54
      %p66 = scmp.eq.s32.totalorder %s23, 1
      %p67 = por %p65, %p66
      %p69 = scmp.ne.s32.totalorder %s54, %s68
      %p70 = scmp.eq.s32.totalorder %s23, 0
      %p71 = por %p69, %p70
      %s73 = sadd.s32 %s72, 1
      %p76 = scmp.eq.s32.totalorder %s17, 1
      %p77 = scmp.ne.s32.totalorder %s72, %s74
      %p78 = scmp.eq.s32.totalorder %s17, 0
      %p79 = por %p77, %p78
      %p80 = scmp.ne.s32.totalorder %s72, %s74
      %p81 = scmp.eq.s32.totalorder %s22, 1
      %p82 = por %p80, %p81
      %p83 = scmp.ne.s32.totalorder %s74, %s75
      %p84 = scmp.eq.s32.totalorder %s22, 0
      %p85 = por %p83, %p84
      %p86 = scmp.ne.s32.totalorder %s74, %s75
      %p87 = scmp.eq.s32.totalorder %s23, 1
      %p88 = por %p86, %p87
      %p90 = scmp.ne.s32.totalorder %s75, %s89
      %p91 = scmp.eq.s32.totalorder %s23, 0
      %p92 = por %p90, %p91
      %s94 = sadd.s32 %s93, 1
      %p97 = scmp.eq.s32.totalorder %s17, 1
      %p98 = scmp.ne.s32.totalorder %s93, %s95
      %p99 = scmp.eq.s32.totalorder %s17, 0
      %p100 = por %p98, %p99
      %p101 = scmp.ne.s32.totalorder %s93, %s95
      %p102 = scmp.eq.s32.totalorder %s22, 1
      %p103 = por %p101, %p102
      %p104 = scmp.ne.s32.totalorder %s95, %s96
      %p105 = scmp.eq.s32.totalorder %s22, 0
      %p106 = por %p104, %p105
      %p107 = scmp.ne.s32.totalorder %s95, %s96
      %p108 = scmp.eq.s32.totalorder %s23, 1
      %p109 = por %p107, %p108
      %p111 = scmp.ne.s32.totalorder %s96, %s110
      %p112 = scmp.eq.s32.totalorder %s23, 0
      %p113 = por %p111, %p112
      %s115 = sadd.s32 %s114, 1
      %p118 = scmp.eq.s32.totalorder %s17, 1
      %p119 = scmp.ne.s32.totalorder %s114, %s116
      %p120 = scmp.eq.s32.totalorder %s17, 0
      %p121 = por %p119, %p120
      %p122 = scmp.ne.s32.totalorder %s114, %s116
      %p123 = scmp.eq.s32.totalorder %s22, 1
      %p124 = por %p122, %p123
      %p125 = scmp.ne.s32.totalorder %s116, %s117
      %p126 = scmp.eq.s32.totalorder %s22, 0
      %p127 = por %p125, %p126
      %p128 = scmp.ne.s32.totalorder %s116, %s117
      %p129 = scmp.eq.s32.totalorder %s23, 1
      %p130 = por %p128, %p129
      %p132 = scmp.ne.s32.totalorder %s117, %s131
      %p133 = scmp.eq.s32.totalorder %s23, 0
      %p134 = por %p132, %p133
      %s135 = ssub.s32 %s17, %s24
      %p136 = scmp.eq.s32.totalorder %s135, 0
      %s138 = sadd.s32 %s137, 1
      %s139 = scalar_select %p136, %s137, %s138
      %p142 = pneg %p136
      %p143 = scmp.eq.s32.totalorder %s17, 1
      %p144 = por %p142, %p143
      %p145 = scmp.ne.s32.totalorder %s137, %s140
      %p146 = scmp.eq.s32.totalorder %s17, 0
      %p147 = por %p145, %p146
      %p148 = scmp.ne.s32.totalorder %s137, %s140
      %p149 = scmp.eq.s32.totalorder %s22, 1
      %p150 = por %p148, %p149
      %p151 = scmp.ne.s32.totalorder %s140, %s141
      %p152 = scmp.eq.s32.totalorder %s22, 0
      %p153 = por %p151, %p152
      %p154 = scmp.ne.s32.totalorder %s140, %s141
      %p155 = scmp.eq.s32.totalorder %s23, 1
      %p156 = por %p154, %p155
      %p158 = scmp.ne.s32.totalorder %s141, %s157
      %p159 = scmp.eq.s32.totalorder %s23, 0
      %p160 = por %p158, %p159
      %p161 = scmp.le.s32.totalorder 1, %s17
      %p162 = scmp.lt.s32.totalorder %s17, 3
      %p163 = pnand %p161, %p162
      %p164 = pneg %p163
      // Predicated region
      $region9: #{tpu_custom_call.1} parent=5 // pred_check
        _
      $region10: #{tpu_custom_call.1} parent=5 // pred_check_branch
        %166 = sbr.rel (%p163) target = $region12
      $region11: #{tpu_custom_call.1} parent=5 // pred_region
        %s167 = ssub.s32 %s17, 1
        // Predicated region
        $region13: #{tpu_custom_call.1} parent=11 // pred_check
          %p168 = pneg %p64
        $region14: #{tpu_custom_call.1} parent=11 // pred_check_branch
          %170 = sbr.rel (%p168) target = $region16
        $region15: #{tpu_custom_call.1} parent=11 // pred_region
          _
        $region16: #{tpu_custom_call.1} parent=11 // pred_fallthru
          _
        // Predicated region
        $region17: #{tpu_custom_call.1} parent=11 // pred_check
          %p171 = pneg %p85
        $region18: #{tpu_custom_call.1} parent=11 // pred_check_branch
          %173 = sbr.rel (%p171) target = $region20
        $region19: #{tpu_custom_call.1} parent=11 // pred_region
          _
        $region20: #{tpu_custom_call.1} parent=11 // pred_fallthru
          _
        // Predicated region
        $region21: #{tpu_custom_call.1} parent=11 // pred_check
          %p174 = pneg %p106
        $region22: #{tpu_custom_call.1} parent=11 // pred_check_branch
          %176 = sbr.rel (%p174) target = $region24
        $region23: #{tpu_custom_call.1} parent=11 // pred_region
          _
        $region24: #{tpu_custom_call.1} parent=11 // pred_fallthru
          _
        // Predicated region
        $region25: #{tpu_custom_call.1} parent=11 // pred_check
          %p177 = pneg %p127
        $region26: #{tpu_custom_call.1} parent=11 // pred_check_branch
          %179 = sbr.rel (%p177) target = $region28
        $region27: #{tpu_custom_call.1} parent=11 // pred_region
          _
        $region28: #{tpu_custom_call.1} parent=11 // pred_fallthru
          _
      $region12: #{tpu_custom_call.1} parent=5 // pred_fallthru
        _
      %p180 = scmp.lt.s32.totalorder %s17, 2
      // Predicated region
      $region29: #{tpu_custom_call.1} parent=5 // pred_check
        %p181 = pneg %p180
      $region30: #{tpu_custom_call.1} parent=5 // pred_check_branch
        %183 = sbr.rel (%p181) target = $region32
      $region31: #{tpu_custom_call.1} parent=5 // pred_region
        // Predicated region
        $region33: #{tpu_custom_call.1} parent=31 // pred_check
          %p184 = pneg %p37
        $region34: #{tpu_custom_call.1} parent=31 // pred_check_branch
          %186 = sbr.rel (%p184) target = $region36
        $region35: #{tpu_custom_call.1} parent=31 // pred_region
          %s187 = sand.u32 %s27, 1
          %s188 = scalar_lea.sflag [#allocation3], %s187
          %s189 = sand.u32 %s27, 1
          %s190 = smul.addr %s189, 512
          %s191 = scalar_lea.vmem [#allocation2], %s190
          %s192 = smul.u32 64, %s17
          %s194 = ssub.s32 8192, 8192
          %195 = vsyncadd %s188, %s194
          %s196 = smul.addr %s192, 128
          %s197 = scalar_lea.hbm %s0, %s196
          %s198 = sshll.u32 %s191, 4
          %s199 = int_to_ptr.vmem [resolvable:$true] %s198
          %204 = dma.hbm_to_vmem [thread:$0]  %s197, 8192, %s199, %s188, 128, 128, 8
        $region36: #{tpu_custom_call.1} parent=31 // pred_fallthru
          _
      $region32: #{tpu_custom_call.1} parent=5 // pred_fallthru
        _
      %p205 = scmp.le.s32.totalorder 1, %s17
      %p206 = scmp.lt.s32.totalorder %s17, 3
      %p207 = pnand %p205, %p206
      %p208 = pneg %p207
      // Predicated region
      $region37: #{tpu_custom_call.1} parent=5 // pred_check
        _
      $region38: #{tpu_custom_call.1} parent=5 // pred_check_branch
        %210 = sbr.rel (%p207) target = $region40
      $region39: #{tpu_custom_call.1} parent=5 // pred_region
        %s211 = ssub.s32 %s17, 1
        %s212 = sand.u32 %s30, 1
        %s213 = scalar_lea.sflag [#allocation3], %s212
        %s214 = sand.u32 %s30, 1
        %s215 = smul.addr %s214, 512
        %s216 = scalar_lea.vmem [#allocation2], %s215
        // Predicated region
        $region41: #{tpu_custom_call.1} parent=39 // pred_check
          %p217 = pneg %p43
        $region42: #{tpu_custom_call.1} parent=39 // pred_check_branch
          %219 = sbr.rel (%p217) target = $region44
        $region43: #{tpu_custom_call.1} parent=39 // pred_region
          %220 = dma.done %s213, 8192
        $region44: #{tpu_custom_call.1} parent=39 // pred_fallthru
          _
        %s221 = sand.u32 %s30, 1
        %s222 = scalar_lea.sflag [#allocation3], %s221
        %s223 = sand.u32 %s30, 1
        %s224 = smul.addr %s223, 512
        %s225 = scalar_lea.vmem [#allocation2], %s224
        %p226 = pneg %p43
        %p227 = pneg %p40
        %p228 = pneg %p64
        %p229 = pneg %p61
        %p230 = pneg %p85
        %p231 = pneg %p82
        %p232 = pneg %p106
        %p233 = pneg %p103
        %p234 = pneg %p127
        %p235 = pneg %p124
        %p236 = pneg %p153
        %p237 = pneg %p150
        %s238 = sand.u32 %s140, 1
        %s239 = scalar_lea.sflag [#allocation4], %s238
        %s240 = sand.u32 %s140, 1
        %s241 = smul.addr %s240, 512
        %s242 = scalar_lea.vmem [#allocation5], %s241
        %s243 = smul.u32 64, %s22
        %s244 = smul.u32 64, %s22
        %v245 = vld [vmem:[%s216] sm:$0xff]
        %v246 = vld [vmem:[%s216 + $0x8] sm:$0xff]
        %v247 = vld [vmem:[%s216 + $0x10] sm:$0xff]
        %v248 = vld [vmem:[%s216 + $0x18] sm:$0xff]
        %v249 = vld [vmem:[%s216 + $0x20] sm:$0xff]
        %v250 = vld [vmem:[%s216 + $0x28] sm:$0xff]
        %v251 = vld [vmem:[%s216 + $0x30] sm:$0xff]
        %v252 = vld [vmem:[%s216 + $0x38] sm:$0xff]
        %v253 = vld [vmem:[%s216 + $0x40] sm:$0xff]
        %v254 = vld [vmem:[%s216 + $0x48] sm:$0xff]
        %v255 = vld [vmem:[%s216 + $0x50] sm:$0xff]
        %v256 = vld [vmem:[%s216 + $0x58] sm:$0xff]
        %v257 = vld [vmem:[%s216 + $0x60] sm:$0xff]
        %v258 = vld [vmem:[%s216 + $0x68] sm:$0xff]
        %v259 = vld [vmem:[%s216 + $0x70] sm:$0xff]
        %v260 = vld [vmem:[%s216 + $0x78] sm:$0xff]
        %v261 = vld [vmem:[%s216 + $0x80] sm:$0xff]
        %v262 = vld [vmem:[%s216 + $0x88] sm:$0xff]
        %v263 = vld [vmem:[%s216 + $0x90] sm:$0xff]
        %v264 = vld [vmem:[%s216 + $0x98] sm:$0xff]
        %v265 = vld [vmem:[%s216 + $0xa0] sm:$0xff]
        %v266 = vld [vmem:[%s216 + $0xa8] sm:$0xff]
        %v267 = vld [vmem:[%s216 + $0xb0] sm:$0xff]
        %v268 = vld [vmem:[%s216 + $0xb8] sm:$0xff]
        %v269 = vld [vmem:[%s216 + $0xc0] sm:$0xff]
        %v270 = vld [vmem:[%s216 + $0xc8] sm:$0xff]
        %v271 = vld [vmem:[%s216 + $0xd0] sm:$0xff]
        %v272 = vld [vmem:[%s216 + $0xd8] sm:$0xff]
        %v273 = vld [vmem:[%s216 + $0xe0] sm:$0xff]
        %v274 = vld [vmem:[%s216 + $0xe8] sm:$0xff]
        %v275 = vld [vmem:[%s216 + $0xf0] sm:$0xff]
        %v276 = vld [vmem:[%s216 + $0xf8] sm:$0xff]
        %v277 = vld [vmem:[%s216 + $0x100] sm:$0xff]
        %v278 = vld [vmem:[%s216 + $0x108] sm:$0xff]
        %v279 = vld [vmem:[%s216 + $0x110] sm:$0xff]
        %v280 = vld [vmem:[%s216 + $0x118] sm:$0xff]
        %v281 = vld [vmem:[%s216 + $0x120] sm:$0xff]
        %v282 = vld [vmem:[%s216 + $0x128] sm:$0xff]
        %v283 = vld [vmem:[%s216 + $0x130] sm:$0xff]
        %v284 = vld [vmem:[%s216 + $0x138] sm:$0xff]
        %v285 = vld [vmem:[%s216 + $0x140] sm:$0xff]
        %v286 = vld [vmem:[%s216 + $0x148] sm:$0xff]
        %v287 = vld [vmem:[%s216 + $0x150] sm:$0xff]
        %v288 = vld [vmem:[%s216 + $0x158] sm:$0xff]
        %v289 = vld [vmem:[%s216 + $0x160] sm:$0xff]
        %v290 = vld [vmem:[%s216 + $0x168] sm:$0xff]
        %v291 = vld [vmem:[%s216 + $0x170] sm:$0xff]
        %v292 = vld [vmem:[%s216 + $0x178] sm:$0xff]
        %v293 = vld [vmem:[%s216 + $0x180] sm:$0xff]
        %v294 = vld [vmem:[%s216 + $0x188] sm:$0xff]
        %v295 = vld [vmem:[%s216 + $0x190] sm:$0xff]
        %v296 = vld [vmem:[%s216 + $0x198] sm:$0xff]
        %v297 = vld [vmem:[%s216 + $0x1a0] sm:$0xff]
        %v298 = vld [vmem:[%s216 + $0x1a8] sm:$0xff]
        %v299 = vld [vmem:[%s216 + $0x1b0] sm:$0xff]
        %v300 = vld [vmem:[%s216 + $0x1b8] sm:$0xff]
        %v301 = vld [vmem:[%s216 + $0x1c0] sm:$0xff]
        %v302 = vld [vmem:[%s216 + $0x1c8] sm:$0xff]
        %v303 = vld [vmem:[%s216 + $0x1d0] sm:$0xff]
        %v304 = vld [vmem:[%s216 + $0x1d8] sm:$0xff]
        %v305 = vld [vmem:[%s216 + $0x1e0] sm:$0xff]
        %v306 = vld [vmem:[%s216 + $0x1e8] sm:$0xff]
        %v307 = vld [vmem:[%s216 + $0x1f0] sm:$0xff]
        %v308 = vld [vmem:[%s216 + $0x1f8] sm:$0xff]
        %v309 = vld [vmem:[%s1] sm:$0xff]
        %v310 = vld [vmem:[%s1 + $0x8] sm:$0xff]
        %v311 = vld [vmem:[%s1 + $0x10] sm:$0xff]
        %v312 = vld [vmem:[%s1 + $0x18] sm:$0xff]
        %v313 = vld [vmem:[%s1 + $0x20] sm:$0xff]
        %v314 = vld [vmem:[%s1 + $0x28] sm:$0xff]
        %v315 = vld [vmem:[%s1 + $0x30] sm:$0xff]
        %v316 = vld [vmem:[%s1 + $0x38] sm:$0xff]
        %v317 = vld [vmem:[%s1 + $0x40] sm:$0xff]
        %v318 = vld [vmem:[%s1 + $0x48] sm:$0xff]
        %v319 = vld [vmem:[%s1 + $0x50] sm:$0xff]
        %v320 = vld [vmem:[%s1 + $0x58] sm:$0xff]
        %v321 = vld [vmem:[%s1 + $0x60] sm:$0xff]
        %v322 = vld [vmem:[%s1 + $0x68] sm:$0xff]
        %v323 = vld [vmem:[%s1 + $0x70] sm:$0xff]
        %v324 = vld [vmem:[%s1 + $0x78] sm:$0xff]
        %v325 = vld [vmem:[%s2] sm:$0x1]
        %v327 = vlaneseq
        %v328 = vshrl.u32 %v327, 7
        %v329 = vsub.s32 0, %v328
        %v330 = vrot.slane %v325, %v329
        %332 = vmatprep.subr.mxu0 0.0
        %333 = vmatpush1.msra.mxu0 %v309
        %334 = vmatprep.subr.mxu0 0.0
        %335 = vmatpush1.msra.mxu0 %v310
        %336 = vmatprep.subr.mxu0 0.0
        %337 = vmatpush1.msra.mxu0 %v311
        %338 = vmatprep.subr.mxu0 0.0
        %339 = vmatpush1.msra.mxu0 %v312
        %340 = vmatprep.subr.mxu0 0.0
        %341 = vmatpush1.msra.mxu0 %v313
        %342 = vmatprep.subr.mxu0 0.0
        %343 = vmatpush1.msra.mxu0 %v314
        %344 = vmatprep.subr.mxu0 0.0
        %345 = vmatpush1.msra.mxu0 %v315
        %346 = vmatprep.subr.mxu0 0.0
        %347 = vmatpush1.msra.mxu0 %v316
        %348 = vmatprep.subr.mxu0 0.0
        %349 = vmatpush1.msra.mxu0 %v317
        %350 = vmatprep.subr.mxu0 0.0
        %351 = vmatpush1.msra.mxu0 %v318
        %352 = vmatprep.subr.mxu0 0.0
        %353 = vmatpush1.msra.mxu0 %v319
        %354 = vmatprep.subr.mxu0 0.0
        %355 = vmatpush1.msra.mxu0 %v320
        %356 = vmatprep.subr.mxu0 0.0
        %357 = vmatpush1.msra.mxu0 %v321
        %358 = vmatprep.subr.mxu0 0.0
        %359 = vmatpush1.msra.mxu0 %v322
        %360 = vmatprep.subr.mxu0 0.0
        %361 = vmatpush1.msra.mxu0 %v323
        %362 = vmatprep.subr.mxu0 0.0
        %363 = vmatpush1.msra.mxu0 %v324
        %364 = vmatprep.subr.mxu0 0.0
        %365 = vmatpush1.msra.mxu0 0.0
        %366 = vmatprep.subr.mxu0 0.0
        %367 = vmatpush1.msra.mxu0 0.0
        %368 = vmatprep.subr.mxu0 0.0
        %369 = vmatpush1.msra.mxu0 0.0
        %370 = vmatprep.subr.mxu0 0.0
        %371 = vmatpush1.msra.mxu0 0.0
        %372 = vmatprep.subr.mxu0 0.0
        %373 = vmatpush1.msra.mxu0 0.0
        %374 = vmatprep.subr.mxu0 0.0
        %375 = vmatpush1.msra.mxu0 0.0
        %376 = vmatprep.subr.mxu0 0.0
        %377 = vmatpush1.msra.mxu0 0.0
        %378 = vmatprep.subr.mxu0 0.0
        %379 = vmatpush1.msra.mxu0 0.0
        %380 = vmatprep.subr.mxu0 0.0
        %381 = vmatpush1.msra.mxu0 0.0
        %382 = vmatprep.subr.mxu0 0.0
        %383 = vmatpush1.msra.mxu0 0.0
        %384 = vmatprep.subr.mxu0 0.0
        %385 = vmatpush1.msra.mxu0 0.0
        %386 = vmatprep.subr.mxu0 0.0
        %387 = vmatpush1.msra.mxu0 0.0
        %388 = vmatprep.subr.mxu0 0.0
        %389 = vmatpush1.msra.mxu0 0.0
        %390 = vmatprep.subr.mxu0 0.0
        %391 = vmatpush1.msra.mxu0 0.0
        %392 = vmatprep.subr.mxu0 0.0
        %393 = vmatpush1.msra.mxu0 0.0
        %394 = vmatprep.subr.mxu0 0.0
        %395 = vmatpush1.msra.mxu0 0.0
        %396 = vmatprep.mubr.f32.mxu0 0.0
        %397 = vmatmul.mubr.f32.gmra.mrb[0].mxu0 %v245
        %v398 = vpop.f32.mrb[0].mxu0
        %v399 = vadd.f32 %v330, %v398
        %v400 = vpop.f32.mrb[0].mxu0
        %401 = vmatprep.mubr.f32.mxu0 0.0
        %402 = vmatmul.mubr.f32.gmra.mrb[0].mxu0 %v246
        %v403 = vpop.f32.mrb[0].mxu0
        %v404 = vadd.f32 %v330, %v403
        %v405 = vpop.f32.mrb[0].mxu0
        %406 = vmatprep.mubr.f32.mxu0 0.0
        %407 = vmatmul.mubr.f32.gmra.mrb[0].mxu0 %v247
        %v408 = vpop.f32.mrb[0].mxu0
        %v409 = vadd.f32 %v330, %v408
        %v410 = vpop.f32.mrb[0].mxu0
        %411 = vmatprep.mubr.f32.mxu0 0.0
        %412 = vmatmul.mubr.f32.gmra.mrb[0].mxu0 %v248
        %v413 = vpop.f32.mrb[0].mxu0
        %v414 = vadd.f32 %v330, %v413
        %v415 = vpop.f32.mrb[0].mxu0
        %416 = vmatprep.mubr.f32.mxu0 0.0
        %417 = vmatmul.mubr.f32.gmra.mrb[0].mxu0 %v249
        %v418 = vpop.f32.mrb[0].mxu0
        %v419 = vadd.f32 %v330, %v418
        %v420 = vpop.f32.mrb[0].mxu0
        %421 = vmatprep.mubr.f32.mxu0 0.0
        %422 = vmatmul.mubr.f32.gmra.mrb[0].mxu0 %v250
        %v423 = vpop.f32.mrb[0].mxu0
        %v424 = vadd.f32 %v330, %v423
        %v425 = vpop.f32.mrb[0].mxu0
        %426 = vmatprep.mubr.f32.mxu0 0.0
        %427 = vmatmul.mubr.f32.gmra.mrb[0].mxu0 %v251
        %v428 = vpop.f32.mrb[0].mxu0
        %v429 = vadd.f32 %v330, %v428
        %v430 = vpop.f32.mrb[0].mxu0
        %431 = vmatprep.mubr.f32.mxu0 0.0
        %432 = vmatmul.mubr.f32.gmra.mrb[0].mxu0 %v252
        %v433 = vpop.f32.mrb[0].mxu0
        %v434 = vadd.f32 %v330, %v433
        %v435 = vpop.f32.mrb[0].mxu0
        %436 = vmatprep.mubr.f32.mxu0 0.0
        %437 = vmatmul.mubr.f32.gmra.mrb[0].mxu0 %v253
        %v438 = vpop.f32.mrb[0].mxu0
        %v439 = vadd.f32 %v330, %v438
        %v440 = vpop.f32.mrb[0].mxu0
        %441 = vmatprep.mubr.f32.mxu0 0.0
        %442 = vmatmul.mubr.f32.gmra.mrb[0].mxu0 %v254
        %v443 = vpop.f32.mrb[0].mxu0
        %v444 = vadd.f32 %v330, %v443
        %v445 = vpop.f32.mrb[0].mxu0
        %446 = vmatprep.mubr.f32.mxu0 0.0
        %447 = vmatmul.mubr.f32.gmra.mrb[0].mxu0 %v255
        %v448 = vpop.f32.mrb[0].mxu0
        %v449 = vadd.f32 %v330, %v448
        %v450 = vpop.f32.mrb[0].mxu0
        %451 = vmatprep.mubr.f32.mxu0 0.0
        %452 = vmatmul.mubr.f32.gmra.mrb[0].mxu0 %v256
        %v453 = vpop.f32.mrb[0].mxu0
        %v454 = vadd.f32 %v330, %v453
        %v455 = vpop.f32.mrb[0].mxu0
        %456 = vmatprep.mubr.f32.mxu0 0.0
        %457 = vmatmul.mubr.f32.gmra.mrb[0].mxu0 %v257
        %v458 = vpop.f32.mrb[0].mxu0
        %v459 = vadd.f32 %v330, %v458
        %v460 = vpop.f32.mrb[0].mxu0
        %461 = vmatprep.mubr.f32.mxu0 0.0
        %462 = vmatmul.mubr.f32.gmra.mrb[0].mxu0 %v258
        %v463 = vpop.f32.mrb[0].mxu0
        %v464 = vadd.f32 %v330, %v463
        %v465 = vpop.f32.mrb[0].mxu0
        %466 = vmatprep.mubr.f32.mxu0 0.0
        %467 = vmatmul.mubr.f32.gmra.mrb[0].mxu0 %v259
        %v468 = vpop.f32.mrb[0].mxu0
        %v469 = vadd.f32 %v330, %v468
        %v470 = vpop.f32.mrb[0].mxu0
        %471 = vmatprep.mubr.f32.mxu0 0.0
        %472 = vmatmul.mubr.f32.gmra.mrb[0].mxu0 %v260
        %v473 = vpop.f32.mrb[0].mxu0
        %v474 = vadd.f32 %v330, %v473
        %v475 = vpop.f32.mrb[0].mxu0
        %476 = vmatprep.mubr.f32.mxu0 0.0
        %477 = vmatmul.mubr.f32.gmra.mrb[0].mxu0 %v261
        %v478 = vpop.f32.mrb[0].mxu0
        %v479 = vadd.f32 %v330, %v478
        %v480 = vpop.f32.mrb[0].mxu0
        %481 = vmatprep.mubr.f32.mxu0 0.0
        %482 = vmatmul.mubr.f32.gmra.mrb[0].mxu0 %v262
        %v483 = vpop.f32.mrb[0].mxu0
        %v484 = vadd.f32 %v330, %v483
        %v485 = vpop.f32.mrb[0].mxu0
        %486 = vmatprep.mubr.f32.mxu0 0.0
        %487 = vmatmul.mubr.f32.gmra.mrb[0].mxu0 %v263
        %v488 = vpop.f32.mrb[0].mxu0
        %v489 = vadd.f32 %v330, %v488
        %v490 = vpop.f32.mrb[0].mxu0
        %491 = vmatprep.mubr.f32.mxu0 0.0
        %492 = vmatmul.mubr.f32.gmra.mrb[0].mxu0 %v264
        %v493 = vpop.f32.mrb[0].mxu0
        %v494 = vadd.f32 %v330, %v493
        %v495 = vpop.f32.mrb[0].mxu0
        %496 = vmatprep.mubr.f32.mxu0 0.0
        %497 = vmatmul.mubr.f32.gmra.mrb[0].mxu0 %v265
        %v498 = vpop.f32.mrb[0].mxu0
        %v499 = vadd.f32 %v330, %v498
        %v500 = vpop.f32.mrb[0].mxu0
        %501 = vmatprep.mubr.f32.mxu0 0.0
        %502 = vmatmul.mubr.f32.gmra.mrb[0].mxu0 %v266
        %v503 = vpop.f32.mrb[0].mxu0
        %v504 = vadd.f32 %v330, %v503
        %v505 = vpop.f32.mrb[0].mxu0
        %506 = vmatprep.mubr.f32.mxu0 0.0
        %507 = vmatmul.mubr.f32.gmra.mrb[0].mxu0 %v267
        %v508 = vpop.f32.mrb[0].mxu0
        %v509 = vadd.f32 %v330, %v508
        %v510 = vpop.f32.mrb[0].mxu0
        %511 = vmatprep.mubr.f32.mxu0 0.0
        %512 = vmatmul.mubr.f32.gmra.mrb[0].mxu0 %v268
        %v513 = vpop.f32.mrb[0].mxu0
        %v514 = vadd.f32 %v330, %v513
        %v515 = vpop.f32.mrb[0].mxu0
        %516 = vmatprep.mubr.f32.mxu0 0.0
        %517 = vmatmul.mubr.f32.gmra.mrb[0].mxu0 %v269
        %v518 = vpop.f32.mrb[0].mxu0
        %v519 = vadd.f32 %v330, %v518
        %v520 = vpop.f32.mrb[0].mxu0
        %521 = vmatprep.mubr.f32.mxu0 0.0
        %522 = vmatmul.mubr.f32.gmra.mrb[0].mxu0 %v270
        %v523 = vpop.f32.mrb[0].mxu0
        %v524 = vadd.f32 %v330, %v523
        %v525 = vpop.f32.mrb[0].mxu0
        %526 = vmatprep.mubr.f32.mxu0 0.0
        %527 = vmatmul.mubr.f32.gmra.mrb[0].mxu0 %v271
        %v528 = vpop.f32.mrb[0].mxu0
        %v529 = vadd.f32 %v330, %v528
        %v530 = vpop.f32.mrb[0].mxu0
        %531 = vmatprep.mubr.f32.mxu0 0.0
        %532 = vmatmul.mubr.f32.gmra.mrb[0].mxu0 %v272
        %v533 = vpop.f32.mrb[0].mxu0
        %v534 = vadd.f32 %v330, %v533
        %v535 = vpop.f32.mrb[0].mxu0
        %536 = vmatprep.mubr.f32.mxu0 0.0
        %537 = vmatmul.mubr.f32.gmra.mrb[0].mxu0 %v273
        %v538 = vpop.f32.mrb[0].mxu0
        %v539 = vadd.f32 %v330, %v538
        %v540 = vpop.f32.mrb[0].mxu0
        %541 = vmatprep.mubr.f32.mxu0 0.0
        %542 = vmatmul.mubr.f32.gmra.mrb[0].mxu0 %v274
        %v543 = vpop.f32.mrb[0].mxu0
        %v544 = vadd.f32 %v330, %v543
        %v545 = vpop.f32.mrb[0].mxu0
        %546 = vmatprep.mubr.f32.mxu0 0.0
        %547 = vmatmul.mubr.f32.gmra.mrb[0].mxu0 %v275
        %v548 = vpop.f32.mrb[0].mxu0
        %v549 = vadd.f32 %v330, %v548
        %v550 = vpop.f32.mrb[0].mxu0
        %551 = vmatprep.mubr.f32.mxu0 0.0
        %552 = vmatmul.mubr.f32.gmra.mrb[0].mxu0 %v276
        %v553 = vpop.f32.mrb[0].mxu0
        %v554 = vadd.f32 %v330, %v553
        %v555 = vpop.f32.mrb[0].mxu0
        %556 = vmatprep.mubr.f32.mxu0 0.0
        %557 = vmatmul.mubr.f32.gmra.mrb[0].mxu0 %v277
        %v558 = vpop.f32.mrb[0].mxu0
        %v559 = vadd.f32 %v330, %v558
        %v560 = vpop.f32.mrb[0].mxu0
        %561 = vmatprep.mubr.f32.mxu0 0.0
        %562 = vmatmul.mubr.f32.gmra.mrb[0].mxu0 %v278
        %v563 = vpop.f32.mrb[0].mxu0
        %v564 = vadd.f32 %v330, %v563
        %v565 = vpop.f32.mrb[0].mxu0
        %566 = vmatprep.mubr.f32.mxu0 0.0
        %567 = vmatmul.mubr.f32.gmra.mrb[0].mxu0 %v279
        %v568 = vpop.f32.mrb[0].mxu0
        %v569 = vadd.f32 %v330, %v568
        %v570 = vpop.f32.mrb[0].mxu0
        %571 = vmatprep.mubr.f32.mxu0 0.0
        %572 = vmatmul.mubr.f32.gmra.mrb[0].mxu0 %v280
        %v573 = vpop.f32.mrb[0].mxu0
        %v574 = vadd.f32 %v330, %v573
        %v575 = vpop.f32.mrb[0].mxu0
        %576 = vmatprep.mubr.f32.mxu0 0.0
        %577 = vmatmul.mubr.f32.gmra.mrb[0].mxu0 %v281
        %v578 = vpop.f32.mrb[0].mxu0
        %v579 = vadd.f32 %v330, %v578
        %v580 = vpop.f32.mrb[0].mxu0
        %581 = vmatprep.mubr.f32.mxu0 0.0
        %582 = vmatmul.mubr.f32.gmra.mrb[0].mxu0 %v282
        %v583 = vpop.f32.mrb[0].mxu0
        %v584 = vadd.f32 %v330, %v583
        %v585 = vpop.f32.mrb[0].mxu0
        %586 = vmatprep.mubr.f32.mxu0 0.0
        %587 = vmatmul.mubr.f32.gmra.mrb[0].mxu0 %v283
        %v588 = vpop.f32.mrb[0].mxu0
        %v589 = vadd.f32 %v330, %v588
        %v590 = vpop.f32.mrb[0].mxu0
        %591 = vmatprep.mubr.f32.mxu0 0.0
        %592 = vmatmul.mubr.f32.gmra.mrb[0].mxu0 %v284
        %v593 = vpop.f32.mrb[0].mxu0
        %v594 = vadd.f32 %v330, %v593
        %v595 = vpop.f32.mrb[0].mxu0
        %596 = vmatprep.mubr.f32.mxu0 0.0
        %597 = vmatmul.mubr.f32.gmra.mrb[0].mxu0 %v285
        %v598 = vpop.f32.mrb[0].mxu0
        %v599 = vadd.f32 %v330, %v598
        %v600 = vpop.f32.mrb[0].mxu0
        %601 = vmatprep.mubr.f32.mxu0 0.0
        %602 = vmatmul.mubr.f32.gmra.mrb[0].mxu0 %v286
        %v603 = vpop.f32.mrb[0].mxu0
        %v604 = vadd.f32 %v330, %v603
        %v605 = vpop.f32.mrb[0].mxu0
        %606 = vmatprep.mubr.f32.mxu0 0.0
        %607 = vmatmul.mubr.f32.gmra.mrb[0].mxu0 %v287
        %v608 = vpop.f32.mrb[0].mxu0
        %v609 = vadd.f32 %v330, %v608
        %v610 = vpop.f32.mrb[0].mxu0
        %611 = vmatprep.mubr.f32.mxu0 0.0
        %612 = vmatmul.mubr.f32.gmra.mrb[0].mxu0 %v288
        %v613 = vpop.f32.mrb[0].mxu0
        %v614 = vadd.f32 %v330, %v613
        %v615 = vpop.f32.mrb[0].mxu0
        %616 = vmatprep.mubr.f32.mxu0 0.0
        %617 = vmatmul.mubr.f32.gmra.mrb[0].mxu0 %v289
        %v618 = vpop.f32.mrb[0].mxu0
        %v619 = vadd.f32 %v330, %v618
        %v620 = vpop.f32.mrb[0].mxu0
        %621 = vmatprep.mubr.f32.mxu0 0.0
        %622 = vmatmul.mubr.f32.gmra.mrb[0].mxu0 %v290
        %v623 = vpop.f32.mrb[0].mxu0
        %v624 = vadd.f32 %v330, %v623
        %v625 = vpop.f32.mrb[0].mxu0
        %626 = vmatprep.mubr.f32.mxu0 0.0
        %627 = vmatmul.mubr.f32.gmra.mrb[0].mxu0 %v291
        %v628 = vpop.f32.mrb[0].mxu0
        %v629 = vadd.f32 %v330, %v628
        %v630 = vpop.f32.mrb[0].mxu0
        %631 = vmatprep.mubr.f32.mxu0 0.0
        %632 = vmatmul.mubr.f32.gmra.mrb[0].mxu0 %v292
        %v633 = vpop.f32.mrb[0].mxu0
        %v634 = vadd.f32 %v330, %v633
        %v635 = vpop.f32.mrb[0].mxu0
        %636 = vmatprep.mubr.f32.mxu0 0.0
        %637 = vmatmul.mubr.f32.gmra.mrb[0].mxu0 %v293
        %v638 = vpop.f32.mrb[0].mxu0
        %v639 = vadd.f32 %v330, %v638
        %v640 = vpop.f32.mrb[0].mxu0
        %641 = vmatprep.mubr.f32.mxu0 0.0
        %642 = vmatmul.mubr.f32.gmra.mrb[0].mxu0 %v294
        %v643 = vpop.f32.mrb[0].mxu0
        %v644 = vadd.f32 %v330, %v643
        %v645 = vpop.f32.mrb[0].mxu0
        %646 = vmatprep.mubr.f32.mxu0 0.0
        %647 = vmatmul.mubr.f32.gmra.mrb[0].mxu0 %v295
        %v648 = vpop.f32.mrb[0].mxu0
        %v649 = vadd.f32 %v330, %v648
        %v650 = vpop.f32.mrb[0].mxu0
        %651 = vmatprep.mubr.f32.mxu0 0.0
        %652 = vmatmul.mubr.f32.gmra.mrb[0].mxu0 %v296
        %v653 = vpop.f32.mrb[0].mxu0
        %v654 = vadd.f32 %v330, %v653
        %v655 = vpop.f32.mrb[0].mxu0
        %656 = vmatprep.mubr.f32.mxu0 0.0
        %657 = vmatmul.mubr.f32.gmra.mrb[0].mxu0 %v297
        %v658 = vpop.f32.mrb[0].mxu0
        %v659 = vadd.f32 %v330, %v658
        %v660 = vpop.f32.mrb[0].mxu0
        %661 = vmatprep.mubr.f32.mxu0 0.0
        %662 = vmatmul.mubr.f32.gmra.mrb[0].mxu0 %v298
        %v663 = vpop.f32.mrb[0].mxu0
        %v664 = vadd.f32 %v330, %v663
        %v665 = vpop.f32.mrb[0].mxu0
        %666 = vmatprep.mubr.f32.mxu0 0.0
        %667 = vmatmul.mubr.f32.gmra.mrb[0].mxu0 %v299
        %v668 = vpop.f32.mrb[0].mxu0
        %v669 = vadd.f32 %v330, %v668
        %v670 = vpop.f32.mrb[0].mxu0
        %671 = vmatprep.mubr.f32.mxu0 0.0
        %672 = vmatmul.mubr.f32.gmra.mrb[0].mxu0 %v300
        %v673 = vpop.f32.mrb[0].mxu0
        %v674 = vadd.f32 %v330, %v673
        %v675 = vpop.f32.mrb[0].mxu0
        %676 = vmatprep.mubr.f32.mxu0 0.0
        %677 = vmatmul.mubr.f32.gmra.mrb[0].mxu0 %v301
        %v678 = vpop.f32.mrb[0].mxu0
        %v679 = vadd.f32 %v330, %v678
        %v680 = vpop.f32.mrb[0].mxu0
        %681 = vmatprep.mubr.f32.mxu0 0.0
        %682 = vmatmul.mubr.f32.gmra.mrb[0].mxu0 %v302
        %v683 = vpop.f32.mrb[0].mxu0
        %v684 = vadd.f32 %v330, %v683
        %v685 = vpop.f32.mrb[0].mxu0
        %686 = vmatprep.mubr.f32.mxu0 0.0
        %687 = vmatmul.mubr.f32.gmra.mrb[0].mxu0 %v303
        %v688 = vpop.f32.mrb[0].mxu0
        %v689 = vadd.f32 %v330, %v688
        %v690 = vpop.f32.mrb[0].mxu0
        %691 = vmatprep.mubr.f32.mxu0 0.0
        %692 = vmatmul.mubr.f32.gmra.mrb[0].mxu0 %v304
        %v693 = vpop.f32.mrb[0].mxu0
        %v694 = vadd.f32 %v330, %v693
        %v695 = vpop.f32.mrb[0].mxu0
        %696 = vmatprep.mubr.f32.mxu0 0.0
        %697 = vmatmul.mubr.f32.gmra.mrb[0].mxu0 %v305
        %v698 = vpop.f32.mrb[0].mxu0
        %v699 = vadd.f32 %v330, %v698
        %v700 = vpop.f32.mrb[0].mxu0
        %701 = vmatprep.mubr.f32.mxu0 0.0
        %702 = vmatmul.mubr.f32.gmra.mrb[0].mxu0 %v306
        %v703 = vpop.f32.mrb[0].mxu0
        %v704 = vadd.f32 %v330, %v703
        %v705 = vpop.f32.mrb[0].mxu0
        %706 = vmatprep.mubr.f32.mxu0 0.0
        %707 = vmatmul.mubr.f32.gmra.mrb[0].mxu0 %v307
        %v708 = vpop.f32.mrb[0].mxu0
        %v709 = vadd.f32 %v330, %v708
        %v710 = vpop.f32.mrb[0].mxu0
        %711 = vmatprep.mubr.f32.mxu0 0.0
        %712 = vmatmul.mubr.f32.gmra.mrb[0].mxu0 %v308
        %v713 = vpop.f32.mrb[0].mxu0
        %v714 = vadd.f32 %v330, %v713
        %v715 = vpop.f32.mrb[0].mxu0
        %716 = vdwg.mxu0
        %v717 = vmax.f32 %v399, 0.0
        %v718 = vmax.f32 %v404, 0.0
        %v719 = vmax.f32 %v409, 0.0
        %v720 = vmax.f32 %v414, 0.0
        %v721 = vmax.f32 %v419, 0.0
        %v722 = vmax.f32 %v424, 0.0
        %v723 = vmax.f32 %v429, 0.0
        %v724 = vmax.f32 %v434, 0.0
        %v725 = vmax.f32 %v439, 0.0
        %v726 = vmax.f32 %v444, 0.0
        %v727 = vmax.f32 %v449, 0.0
        %v728 = vmax.f32 %v454, 0.0
        %v729 = vmax.f32 %v459, 0.0
        %v730 = vmax.f32 %v464, 0.0
        %v731 = vmax.f32 %v469, 0.0
        %v732 = vmax.f32 %v474, 0.0
        %v733 = vmax.f32 %v479, 0.0
        %v734 = vmax.f32 %v484, 0.0
        %v735 = vmax.f32 %v489, 0.0
        %v736 = vmax.f32 %v494, 0.0
        %v737 = vmax.f32 %v499, 0.0
        %v738 = vmax.f32 %v504, 0.0
        %v739 = vmax.f32 %v509, 0.0
        %v740 = vmax.f32 %v514, 0.0
        %v741 = vmax.f32 %v519, 0.0
        %v742 = vmax.f32 %v524, 0.0
        %v743 = vmax.f32 %v529, 0.0
        %v744 = vmax.f32 %v534, 0.0
        %v745 = vmax.f32 %v539, 0.0
        %v746 = vmax.f32 %v544, 0.0
        %v747 = vmax.f32 %v549, 0.0
        %v748 = vmax.f32 %v554, 0.0
        %v749 = vmax.f32 %v559, 0.0
        %v750 = vmax.f32 %v564, 0.0
        %v751 = vmax.f32 %v569, 0.0
        %v752 = vmax.f32 %v574, 0.0
        %v753 = vmax.f32 %v579, 0.0
        %v754 = vmax.f32 %v584, 0.0
        %v755 = vmax.f32 %v589, 0.0
        %v756 = vmax.f32 %v594, 0.0
        %v757 = vmax.f32 %v599, 0.0
        %v758 = vmax.f32 %v604, 0.0
        %v759 = vmax.f32 %v609, 0.0
        %v760 = vmax.f32 %v614, 0.0
        %v761 = vmax.f32 %v619, 0.0
        %v762 = vmax.f32 %v624, 0.0
        %v763 = vmax.f32 %v629, 0.0
        %v764 = vmax.f32 %v634, 0.0
        %v765 = vmax.f32 %v639, 0.0
        %v766 = vmax.f32 %v644, 0.0
        %v767 = vmax.f32 %v649, 0.0
        %v768 = vmax.f32 %v654, 0.0
        %v769 = vmax.f32 %v659, 0.0
        %v770 = vmax.f32 %v664, 0.0
        %v771 = vmax.f32 %v669, 0.0
        %v772 = vmax.f32 %v674, 0.0
        %v773 = vmax.f32 %v679, 0.0
        %v774 = vmax.f32 %v684, 0.0
        %v775 = vmax.f32 %v689, 0.0
        %v776 = vmax.f32 %v694, 0.0
        %v777 = vmax.f32 %v699, 0.0
        %v778 = vmax.f32 %v704, 0.0
        %v779 = vmax.f32 %v709, 0.0
        %v780 = vmax.f32 %v714, 0.0
        %v781 = vld [vmem:[%s3] sm:$0xff]
        %v782 = vld [vmem:[%s3 + $0x8] sm:$0xff]
        %v783 = vld [vmem:[%s3 + $0x10] sm:$0xff]
        %v784 = vld [vmem:[%s3 + $0x18] sm:$0xff]
        %v785 = vld [vmem:[%s4] sm:$0x1]
        %v787 = vlaneseq
        %v788 = vshrl.u32 %v787, 7
        %v789 = vsub.s32 0, %v788
        %v790 = vrot.slane %v785, %v789
        %vm792 = vcmask 261120
        %v794 = vsel %vm792, %v717, 0
        %v797 = vsel %vm792, %v718, 0
        %v800 = vsel %vm792, %v719, 0
        %v803 = vsel %vm792, %v720, 0
        %v806 = vsel %vm792, %v721, 0
        %v809 = vsel %vm792, %v722, 0
        %v812 = vsel %vm792, %v723, 0
        %v815 = vsel %vm792, %v724, 0
        %v818 = vsel %vm792, %v725, 0
        %v821 = vsel %vm792, %v726, 0
        %v824 = vsel %vm792, %v727, 0
        %v827 = vsel %vm792, %v728, 0
        %v830 = vsel %vm792, %v729, 0
        %v833 = vsel %vm792, %v730, 0
        %v836 = vsel %vm792, %v731, 0
        %v839 = vsel %vm792, %v732, 0
        %v842 = vsel %vm792, %v733, 0
        %v845 = vsel %vm792, %v734, 0
        %v848 = vsel %vm792, %v735, 0
        %v851 = vsel %vm792, %v736, 0
        %v854 = vsel %vm792, %v737, 0
        %v857 = vsel %vm792, %v738, 0
        %v860 = vsel %vm792, %v739, 0
        %v863 = vsel %vm792, %v740, 0
        %v866 = vsel %vm792, %v741, 0
        %v869 = vsel %vm792, %v742, 0
        %v872 = vsel %vm792, %v743, 0
        %v875 = vsel %vm792, %v744, 0
        %v878 = vsel %vm792, %v745, 0
        %v881 = vsel %vm792, %v746, 0
        %v884 = vsel %vm792, %v747, 0
        %v887 = vsel %vm792, %v748, 0
        %v890 = vsel %vm792, %v749, 0
        %v893 = vsel %vm792, %v750, 0
        %v896 = vsel %vm792, %v751, 0
        %v899 = vsel %vm792, %v752, 0
        %v902 = vsel %vm792, %v753, 0
        %v905 = vsel %vm792, %v754, 0
        %v908 = vsel %vm792, %v755, 0
        %v911 = vsel %vm792, %v756, 0
        %v914 = vsel %vm792, %v757, 0
        %v917 = vsel %vm792, %v758, 0
        %v920 = vsel %vm792, %v759, 0
        %v923 = vsel %vm792, %v760, 0
        %v926 = vsel %vm792, %v761, 0
        %v929 = vsel %vm792, %v762, 0
        %v932 = vsel %vm792, %v763, 0
        %v935 = vsel %vm792, %v764, 0
        %v938 = vsel %vm792, %v765, 0
        %v941 = vsel %vm792, %v766, 0
        %v944 = vsel %vm792, %v767, 0
        %v947 = vsel %vm792, %v768, 0
        %v950 = vsel %vm792, %v769, 0
        %v953 = vsel %vm792, %v770, 0
        %v956 = vsel %vm792, %v771, 0
        %v959 = vsel %vm792, %v772, 0
        %v962 = vsel %vm792, %v773, 0
        %v965 = vsel %vm792, %v774, 0
        %v968 = vsel %vm792, %v775, 0
        %v971 = vsel %vm792, %v776, 0
        %v974 = vsel %vm792, %v777, 0
        %v977 = vsel %vm792, %v778, 0
        %v980 = vsel %vm792, %v779, 0
        %v983 = vsel %vm792, %v780, 0
        %985 = vmatprep.subr.mxu0 0.0
        %986 = vmatpush1.msra.mxu0 %v781
        %987 = vmatprep.subr.mxu0 0.0
        %988 = vmatpush1.msra.mxu0 %v782
        %989 = vmatprep.subr.mxu0 0.0
        %990 = vmatpush1.msra.mxu0 %v783
        %991 = vmatprep.subr.mxu0 0.0
        %992 = vmatpush1.msra.mxu0 %v784
        %993 = vmatprep.subr.mxu0 0.0
        %994 = vmatpush1.msra.mxu0 0.0
        %995 = vmatprep.subr.mxu0 0.0
        %996 = vmatpush1.msra.mxu0 0.0
        %997 = vmatprep.subr.mxu0 0.0
        %998 = vmatpush1.msra.mxu0 0.0
        %999 = vmatprep.subr.mxu0 0.0
        %1000 = vmatpush1.msra.mxu0 0.0
        %1001 = vmatprep.subr.mxu0 0.0
        %1002 = vmatpush1.msra.mxu0 0.0
        %1003 = vmatprep.subr.mxu0 0.0
        %1004 = vmatpush1.msra.mxu0 0.0
        %1005 = vmatprep.subr.mxu0 0.0
        %1006 = vmatpush1.msra.mxu0 0.0
        %1007 = vmatprep.subr.mxu0 0.0
        %1008 = vmatpush1.msra.mxu0 0.0
        %1009 = vmatprep.subr.mxu0 0.0
        %1010 = vmatpush1.msra.mxu0 0.0
        %1011 = vmatprep.subr.mxu0 0.0
        %1012 = vmatpush1.msra.mxu0 0.0
        %1013 = vmatprep.subr.mxu0 0.0
        %1014 = vmatpush1.msra.mxu0 0.0
        %1015 = vmatprep.subr.mxu0 0.0
        %1016 = vmatpush1.msra.mxu0 0.0
        %1017 = vmatprep.subr.mxu0 0.0
        %1018 = vmatpush1.msra.mxu0 0.0
        %1019 = vmatprep.subr.mxu0 0.0
        %1020 = vmatpush1.msra.mxu0 0.0
        %1021 = vmatprep.subr.mxu0 0.0
        %1022 = vmatpush1.msra.mxu0 0.0
        %1023 = vmatprep.subr.mxu0 0.0
        %1024 = vmatpush1.msra.mxu0 0.0
        %1025 = vmatprep.subr.mxu0 0.0
        %1026 = vmatpush1.msra.mxu0 0.0
        %1027 = vmatprep.subr.mxu0 0.0
        %1028 = vmatpush1.msra.mxu0 0.0
        %1029 = vmatprep.subr.mxu0 0.0
        %1030 = vmatpush1.msra.mxu0 0.0
        %1031 = vmatprep.subr.mxu0 0.0
        %1032 = vmatpush1.msra.mxu0 0.0
        %1033 = vmatprep.subr.mxu0 0.0
        %1034 = vmatpush1.msra.mxu0 0.0
        %1035 = vmatprep.subr.mxu0 0.0
        %1036 = vmatpush1.msra.mxu0 0.0
        %1037 = vmatprep.subr.mxu0 0.0
        %1038 = vmatpush1.msra.mxu0 0.0
        %1039 = vmatprep.subr.mxu0 0.0
        %1040 = vmatpush1.msra.mxu0 0.0
        %1041 = vmatprep.subr.mxu0 0.0
        %1042 = vmatpush1.msra.mxu0 0.0
        %1043 = vmatprep.subr.mxu0 0.0
        %1044 = vmatpush1.msra.mxu0 0.0
        %1045 = vmatprep.subr.mxu0 0.0
        %1046 = vmatpush1.msra.mxu0 0.0
        %1047 = vmatprep.subr.mxu0 0.0
        %1048 = vmatpush1.msra.mxu0 0.0
        %1049 = vmatprep.mubr.f32.mxu0 0.0
        %1050 = vmatmul.mubr.f32.gmra.mrb[0].mxu0 %v794
        %v1051 = vpop.f32.mrb[0].mxu0
        %v1052 = vadd.f32 %v790, %v1051
        %v1053 = vpop.f32.mrb[0].mxu0
        %1054 = vmatprep.mubr.f32.mxu0 0.0
        %1055 = vmatmul.mubr.f32.gmra.mrb[0].mxu0 %v797
        %v1056 = vpop.f32.mrb[0].mxu0
        %v1057 = vadd.f32 %v790, %v1056
        %v1058 = vpop.f32.mrb[0].mxu0
        %1059 = vmatprep.mubr.f32.mxu0 0.0
        %1060 = vmatmul.mubr.f32.gmra.mrb[0].mxu0 %v800
        %v1061 = vpop.f32.mrb[0].mxu0
        %v1062 = vadd.f32 %v790, %v1061
        %v1063 = vpop.f32.mrb[0].mxu0
        %1064 = vmatprep.mubr.f32.mxu0 0.0
        %1065 = vmatmul.mubr.f32.gmra.mrb[0].mxu0 %v803
        %v1066 = vpop.f32.mrb[0].mxu0
        %v1067 = vadd.f32 %v790, %v1066
        %v1068 = vpop.f32.mrb[0].mxu0
        %1069 = vmatprep.mubr.f32.mxu0 0.0
        %1070 = vmatmul.mubr.f32.gmra.mrb[0].mxu0 %v806
        %v1071 = vpop.f32.mrb[0].mxu0
        %v1072 = vadd.f32 %v790, %v1071
        %v1073 = vpop.f32.mrb[0].mxu0
        %1074 = vmatprep.mubr.f32.mxu0 0.0
        %1075 = vmatmul.mubr.f32.gmra.mrb[0].mxu0 %v809
        %v1076 = vpop.f32.mrb[0].mxu0
        %v1077 = vadd.f32 %v790, %v1076
        %v1078 = vpop.f32.mrb[0].mxu0
        %1079 = vmatprep.mubr.f32.mxu0 0.0
        %1080 = vmatmul.mubr.f32.gmra.mrb[0].mxu0 %v812
        %v1081 = vpop.f32.mrb[0].mxu0
        %v1082 = vadd.f32 %v790, %v1081
        %v1083 = vpop.f32.mrb[0].mxu0
        %1084 = vmatprep.mubr.f32.mxu0 0.0
        %1085 = vmatmul.mubr.f32.gmra.mrb[0].mxu0 %v815
        %v1086 = vpop.f32.mrb[0].mxu0
        %v1087 = vadd.f32 %v790, %v1086
        %v1088 = vpop.f32.mrb[0].mxu0
        %1089 = vmatprep.mubr.f32.mxu0 0.0
        %1090 = vmatmul.mubr.f32.gmra.mrb[0].mxu0 %v818
        %v1091 = vpop.f32.mrb[0].mxu0
        %v1092 = vadd.f32 %v790, %v1091
        %v1093 = vpop.f32.mrb[0].mxu0
        %1094 = vmatprep.mubr.f32.mxu0 0.0
        %1095 = vmatmul.mubr.f32.gmra.mrb[0].mxu0 %v821
        %v1096 = vpop.f32.mrb[0].mxu0
        %v1097 = vadd.f32 %v790, %v1096
        %v1098 = vpop.f32.mrb[0].mxu0
        %1099 = vmatprep.mubr.f32.mxu0 0.0
        %1100 = vmatmul.mubr.f32.gmra.mrb[0].mxu0 %v824
        %v1101 = vpop.f32.mrb[0].mxu0
        %v1102 = vadd.f32 %v790, %v1101
        %v1103 = vpop.f32.mrb[0].mxu0
        %1104 = vmatprep.mubr.f32.mxu0 0.0
        %1105 = vmatmul.mubr.f32.gmra.mrb[0].mxu0 %v827
        %v1106 = vpop.f32.mrb[0].mxu0
        %v1107 = vadd.f32 %v790, %v1106
        %v1108 = vpop.f32.mrb[0].mxu0
        %1109 = vmatprep.mubr.f32.mxu0 0.0
        %1110 = vmatmul.mubr.f32.gmra.mrb[0].mxu0 %v830
        %v1111 = vpop.f32.mrb[0].mxu0
        %v1112 = vadd.f32 %v790, %v1111
        %v1113 = vpop.f32.mrb[0].mxu0
        %1114 = vmatprep.mubr.f32.mxu0 0.0
        %1115 = vmatmul.mubr.f32.gmra.mrb[0].mxu0 %v833
        %v1116 = vpop.f32.mrb[0].mxu0
        %v1117 = vadd.f32 %v790, %v1116
        %v1118 = vpop.f32.mrb[0].mxu0
        %1119 = vmatprep.mubr.f32.mxu0 0.0
        %1120 = vmatmul.mubr.f32.gmra.mrb[0].mxu0 %v836
        %v1121 = vpop.f32.mrb[0].mxu0
        %v1122 = vadd.f32 %v790, %v1121
        %v1123 = vpop.f32.mrb[0].mxu0
        %1124 = vmatprep.mubr.f32.mxu0 0.0
        %1125 = vmatmul.mubr.f32.gmra.mrb[0].mxu0 %v839
        %v1126 = vpop.f32.mrb[0].mxu0
        %v1127 = vadd.f32 %v790, %v1126
        %v1128 = vpop.f32.mrb[0].mxu0
        %1129 = vmatprep.mubr.f32.mxu0 0.0
        %1130 = vmatmul.mubr.f32.gmra.mrb[0].mxu0 %v842
        %v1131 = vpop.f32.mrb[0].mxu0
        %v1132 = vadd.f32 %v790, %v1131
        %v1133 = vpop.f32.mrb[0].mxu0
        %1134 = vmatprep.mubr.f32.mxu0 0.0
        %1135 = vmatmul.mubr.f32.gmra.mrb[0].mxu0 %v845
        %v1136 = vpop.f32.mrb[0].mxu0
        %v1137 = vadd.f32 %v790, %v1136
        %v1138 = vpop.f32.mrb[0].mxu0
        %1139 = vmatprep.mubr.f32.mxu0 0.0
        %1140 = vmatmul.mubr.f32.gmra.mrb[0].mxu0 %v848
        %v1141 = vpop.f32.mrb[0].mxu0
        %v1142 = vadd.f32 %v790, %v1141
        %v1143 = vpop.f32.mrb[0].mxu0
        %1144 = vmatprep.mubr.f32.mxu0 0.0
        %1145 = vmatmul.mubr.f32.gmra.mrb[0].mxu0 %v851
        %v1146 = vpop.f32.mrb[0].mxu0
        %v1147 = vadd.f32 %v790, %v1146
        %v1148 = vpop.f32.mrb[0].mxu0
        %1149 = vmatprep.mubr.f32.mxu0 0.0
        %1150 = vmatmul.mubr.f32.gmra.mrb[0].mxu0 %v854
        %v1151 = vpop.f32.mrb[0].mxu0
        %v1152 = vadd.f32 %v790, %v1151
        %v1153 = vpop.f32.mrb[0].mxu0
        %1154 = vmatprep.mubr.f32.mxu0 0.0
        %1155 = vmatmul.mubr.f32.gmra.mrb[0].mxu0 %v857
        %v1156 = vpop.f32.mrb[0].mxu0
        %v1157 = vadd.f32 %v790, %v1156
        %v1158 = vpop.f32.mrb[0].mxu0
        %1159 = vmatprep.mubr.f32.mxu0 0.0
        %1160 = vmatmul.mubr.f32.gmra.mrb[0].mxu0 %v860
        %v1161 = vpop.f32.mrb[0].mxu0
        %v1162 = vadd.f32 %v790, %v1161
        %v1163 = vpop.f32.mrb[0].mxu0
        %1164 = vmatprep.mubr.f32.mxu0 0.0
        %1165 = vmatmul.mubr.f32.gmra.mrb[0].mxu0 %v863
        %v1166 = vpop.f32.mrb[0].mxu0
        %v1167 = vadd.f32 %v790, %v1166
        %v1168 = vpop.f32.mrb[0].mxu0
        %1169 = vmatprep.mubr.f32.mxu0 0.0
        %1170 = vmatmul.mubr.f32.gmra.mrb[0].mxu0 %v866
        %v1171 = vpop.f32.mrb[0].mxu0
        %v1172 = vadd.f32 %v790, %v1171
        %v1173 = vpop.f32.mrb[0].mxu0
        %1174 = vmatprep.mubr.f32.mxu0 0.0
        %1175 = vmatmul.mubr.f32.gmra.mrb[0].mxu0 %v869
        %v1176 = vpop.f32.mrb[0].mxu0
        %v1177 = vadd.f32 %v790, %v1176
        %v1178 = vpop.f32.mrb[0].mxu0
        %1179 = vmatprep.mubr.f32.mxu0 0.0
        %1180 = vmatmul.mubr.f32.gmra.mrb[0].mxu0 %v872
        %v1181 = vpop.f32.mrb[0].mxu0
        %v1182 = vadd.f32 %v790, %v1181
        %v1183 = vpop.f32.mrb[0].mxu0
        %1184 = vmatprep.mubr.f32.mxu0 0.0
        %1185 = vmatmul.mubr.f32.gmra.mrb[0].mxu0 %v875
        %v1186 = vpop.f32.mrb[0].mxu0
        %v1187 = vadd.f32 %v790, %v1186
        %v1188 = vpop.f32.mrb[0].mxu0
        %1189 = vmatprep.mubr.f32.mxu0 0.0
        %1190 = vmatmul.mubr.f32.gmra.mrb[0].mxu0 %v878
        %v1191 = vpop.f32.mrb[0].mxu0
        %v1192 = vadd.f32 %v790, %v1191
        %v1193 = vpop.f32.mrb[0].mxu0
        %1194 = vmatprep.mubr.f32.mxu0 0.0
        %1195 = vmatmul.mubr.f32.gmra.mrb[0].mxu0 %v881
        %v1196 = vpop.f32.mrb[0].mxu0
        %v1197 = vadd.f32 %v790, %v1196
        %v1198 = vpop.f32.mrb[0].mxu0
        %1199 = vmatprep.mubr.f32.mxu0 0.0
        %1200 = vmatmul.mubr.f32.gmra.mrb[0].mxu0 %v884
        %v1201 = vpop.f32.mrb[0].mxu0
        %v1202 = vadd.f32 %v790, %v1201
        %v1203 = vpop.f32.mrb[0].mxu0
        %1204 = vmatprep.mubr.f32.mxu0 0.0
        %1205 = vmatmul.mubr.f32.gmra.mrb[0].mxu0 %v887
        %v1206 = vpop.f32.mrb[0].mxu0
        %v1207 = vadd.f32 %v790, %v1206
        %v1208 = vpop.f32.mrb[0].mxu0
        %1209 = vmatprep.mubr.f32.mxu0 0.0
        %1210 = vmatmul.mubr.f32.gmra.mrb[0].mxu0 %v890
        %v1211 = vpop.f32.mrb[0].mxu0
        %v1212 = vadd.f32 %v790, %v1211
        %v1213 = vpop.f32.mrb[0].mxu0
        %1214 = vmatprep.mubr.f32.mxu0 0.0
        %1215 = vmatmul.mubr.f32.gmra.mrb[0].mxu0 %v893
        %v1216 = vpop.f32.mrb[0].mxu0
        %v1217 = vadd.f32 %v790, %v1216
        %v1218 = vpop.f32.mrb[0].mxu0
        %1219 = vmatprep.mubr.f32.mxu0 0.0
        %1220 = vmatmul.mubr.f32.gmra.mrb[0].mxu0 %v896
        %v1221 = vpop.f32.mrb[0].mxu0
        %v1222 = vadd.f32 %v790, %v1221
        %v1223 = vpop.f32.mrb[0].mxu0
        %1224 = vmatprep.mubr.f32.mxu0 0.0
        %1225 = vmatmul.mubr.f32.gmra.mrb[0].mxu0 %v899
        %v1226 = vpop.f32.mrb[0].mxu0
        %v1227 = vadd.f32 %v790, %v1226
        %v1228 = vpop.f32.mrb[0].mxu0
        %1229 = vmatprep.mubr.f32.mxu0 0.0
        %1230 = vmatmul.mubr.f32.gmra.mrb[0].mxu0 %v902
        %v1231 = vpop.f32.mrb[0].mxu0
        %v1232 = vadd.f32 %v790, %v1231
        %v1233 = vpop.f32.mrb[0].mxu0
        %1234 = vmatprep.mubr.f32.mxu0 0.0
        %1235 = vmatmul.mubr.f32.gmra.mrb[0].mxu0 %v905
        %v1236 = vpop.f32.mrb[0].mxu0
        %v1237 = vadd.f32 %v790, %v1236
        %v1238 = vpop.f32.mrb[0].mxu0
        %1239 = vmatprep.mubr.f32.mxu0 0.0
        %1240 = vmatmul.mubr.f32.gmra.mrb[0].mxu0 %v908
        %v1241 = vpop.f32.mrb[0].mxu0
        %v1242 = vadd.f32 %v790, %v1241
        %v1243 = vpop.f32.mrb[0].mxu0
        %1244 = vmatprep.mubr.f32.mxu0 0.0
        %1245 = vmatmul.mubr.f32.gmra.mrb[0].mxu0 %v911
        %v1246 = vpop.f32.mrb[0].mxu0
        %v1247 = vadd.f32 %v790, %v1246
        %v1248 = vpop.f32.mrb[0].mxu0
        %1249 = vmatprep.mubr.f32.mxu0 0.0
        %1250 = vmatmul.mubr.f32.gmra.mrb[0].mxu0 %v914
        %v1251 = vpop.f32.mrb[0].mxu0
        %v1252 = vadd.f32 %v790, %v1251
        %v1253 = vpop.f32.mrb[0].mxu0
        %1254 = vmatprep.mubr.f32.mxu0 0.0
        %1255 = vmatmul.mubr.f32.gmra.mrb[0].mxu0 %v917
        %v1256 = vpop.f32.mrb[0].mxu0
        %v1257 = vadd.f32 %v790, %v1256
        %v1258 = vpop.f32.mrb[0].mxu0
        %1259 = vmatprep.mubr.f32.mxu0 0.0
        %1260 = vmatmul.mubr.f32.gmra.mrb[0].mxu0 %v920
        %v1261 = vpop.f32.mrb[0].mxu0
        %v1262 = vadd.f32 %v790, %v1261
        %v1263 = vpop.f32.mrb[0].mxu0
        %1264 = vmatprep.mubr.f32.mxu0 0.0
        %1265 = vmatmul.mubr.f32.gmra.mrb[0].mxu0 %v923
        %v1266 = vpop.f32.mrb[0].mxu0
        %v1267 = vadd.f32 %v790, %v1266
        %v1268 = vpop.f32.mrb[0].mxu0
        %1269 = vmatprep.mubr.f32.mxu0 0.0
        %1270 = vmatmul.mubr.f32.gmra.mrb[0].mxu0 %v926
        %v1271 = vpop.f32.mrb[0].mxu0
        %v1272 = vadd.f32 %v790, %v1271
        %v1273 = vpop.f32.mrb[0].mxu0
        %1274 = vmatprep.mubr.f32.mxu0 0.0
        %1275 = vmatmul.mubr.f32.gmra.mrb[0].mxu0 %v929
        %v1276 = vpop.f32.mrb[0].mxu0
        %v1277 = vadd.f32 %v790, %v1276
        %v1278 = vpop.f32.mrb[0].mxu0
        %1279 = vmatprep.mubr.f32.mxu0 0.0
        %1280 = vmatmul.mubr.f32.gmra.mrb[0].mxu0 %v932
        %v1281 = vpop.f32.mrb[0].mxu0
        %v1282 = vadd.f32 %v790, %v1281
        %v1283 = vpop.f32.mrb[0].mxu0
        %1284 = vmatprep.mubr.f32.mxu0 0.0
        %1285 = vmatmul.mubr.f32.gmra.mrb[0].mxu0 %v935
        %v1286 = vpop.f32.mrb[0].mxu0
        %v1287 = vadd.f32 %v790, %v1286
        %v1288 = vpop.f32.mrb[0].mxu0
        %1289 = vmatprep.mubr.f32.mxu0 0.0
        %1290 = vmatmul.mubr.f32.gmra.mrb[0].mxu0 %v938
        %v1291 = vpop.f32.mrb[0].mxu0
        %v1292 = vadd.f32 %v790, %v1291
        %v1293 = vpop.f32.mrb[0].mxu0
        %1294 = vmatprep.mubr.f32.mxu0 0.0
        %1295 = vmatmul.mubr.f32.gmra.mrb[0].mxu0 %v941
        %v1296 = vpop.f32.mrb[0].mxu0
        %v1297 = vadd.f32 %v790, %v1296
        %v1298 = vpop.f32.mrb[0].mxu0
        %1299 = vmatprep.mubr.f32.mxu0 0.0
        %1300 = vmatmul.mubr.f32.gmra.mrb[0].mxu0 %v944
        %v1301 = vpop.f32.mrb[0].mxu0
        %v1302 = vadd.f32 %v790, %v1301
        %v1303 = vpop.f32.mrb[0].mxu0
        %1304 = vmatprep.mubr.f32.mxu0 0.0
        %1305 = vmatmul.mubr.f32.gmra.mrb[0].mxu0 %v947
        %v1306 = vpop.f32.mrb[0].mxu0
        %v1307 = vadd.f32 %v790, %v1306
        %v1308 = vpop.f32.mrb[0].mxu0
        %1309 = vmatprep.mubr.f32.mxu0 0.0
        %1310 = vmatmul.mubr.f32.gmra.mrb[0].mxu0 %v950
        %v1311 = vpop.f32.mrb[0].mxu0
        %v1312 = vadd.f32 %v790, %v1311
        %v1313 = vpop.f32.mrb[0].mxu0
        %1314 = vmatprep.mubr.f32.mxu0 0.0
        %1315 = vmatmul.mubr.f32.gmra.mrb[0].mxu0 %v953
        %v1316 = vpop.f32.mrb[0].mxu0
        %v1317 = vadd.f32 %v790, %v1316
        %v1318 = vpop.f32.mrb[0].mxu0
        %1319 = vmatprep.mubr.f32.mxu0 0.0
        %1320 = vmatmul.mubr.f32.gmra.mrb[0].mxu0 %v956
        %v1321 = vpop.f32.mrb[0].mxu0
        %v1322 = vadd.f32 %v790, %v1321
        %v1323 = vpop.f32.mrb[0].mxu0
        %1324 = vmatprep.mubr.f32.mxu0 0.0
        %1325 = vmatmul.mubr.f32.gmra.mrb[0].mxu0 %v959
        %v1326 = vpop.f32.mrb[0].mxu0
        %v1327 = vadd.f32 %v790, %v1326
        %v1328 = vpop.f32.mrb[0].mxu0
        %1329 = vmatprep.mubr.f32.mxu0 0.0
        %1330 = vmatmul.mubr.f32.gmra.mrb[0].mxu0 %v962
        %v1331 = vpop.f32.mrb[0].mxu0
        %v1332 = vadd.f32 %v790, %v1331
        %v1333 = vpop.f32.mrb[0].mxu0
        %1334 = vmatprep.mubr.f32.mxu0 0.0
        %1335 = vmatmul.mubr.f32.gmra.mrb[0].mxu0 %v965
        %v1336 = vpop.f32.mrb[0].mxu0
        %v1337 = vadd.f32 %v790, %v1336
        %v1338 = vpop.f32.mrb[0].mxu0
        %1339 = vmatprep.mubr.f32.mxu0 0.0
        %1340 = vmatmul.mubr.f32.gmra.mrb[0].mxu0 %v968
        %v1341 = vpop.f32.mrb[0].mxu0
        %v1342 = vadd.f32 %v790, %v1341
        %v1343 = vpop.f32.mrb[0].mxu0
        %1344 = vmatprep.mubr.f32.mxu0 0.0
        %1345 = vmatmul.mubr.f32.gmra.mrb[0].mxu0 %v971
        %v1346 = vpop.f32.mrb[0].mxu0
        %v1347 = vadd.f32 %v790, %v1346
        %v1348 = vpop.f32.mrb[0].mxu0
        %1349 = vmatprep.mubr.f32.mxu0 0.0
        %1350 = vmatmul.mubr.f32.gmra.mrb[0].mxu0 %v974
        %v1351 = vpop.f32.mrb[0].mxu0
        %v1352 = vadd.f32 %v790, %v1351
        %v1353 = vpop.f32.mrb[0].mxu0
        %1354 = vmatprep.mubr.f32.mxu0 0.0
        %1355 = vmatmul.mubr.f32.gmra.mrb[0].mxu0 %v977
        %v1356 = vpop.f32.mrb[0].mxu0
        %v1357 = vadd.f32 %v790, %v1356
        %v1358 = vpop.f32.mrb[0].mxu0
        %1359 = vmatprep.mubr.f32.mxu0 0.0
        %1360 = vmatmul.mubr.f32.gmra.mrb[0].mxu0 %v980
        %v1361 = vpop.f32.mrb[0].mxu0
        %v1362 = vadd.f32 %v790, %v1361
        %v1363 = vpop.f32.mrb[0].mxu0
        %1364 = vmatprep.mubr.f32.mxu0 0.0
        %1365 = vmatmul.mubr.f32.gmra.mrb[0].mxu0 %v983
        %v1366 = vpop.f32.mrb[0].mxu0
        %v1367 = vadd.f32 %v790, %v1366
        %v1368 = vpop.f32.mrb[0].mxu0
        %1369 = vdwg.mxu0
        %vm1370 = vcmask 523264
        %v1371 = vsel %vm1370, %v1052, 0.0
        %1372 = vadd.xlane.f32.xlu0 %v1371
        %v1373 = vpop.xlane.xlu0 %1372
        %v1374 = vsel %vm1370, %v1057, 0.0
        %1375 = vadd.xlane.f32.xlu0 %v1374
        %v1376 = vpop.xlane.xlu0 %1375
        %v1377 = vsel %vm1370, %v1062, 0.0
        %1378 = vadd.xlane.f32.xlu0 %v1377
        %v1379 = vpop.xlane.xlu0 %1378
        %v1380 = vsel %vm1370, %v1067, 0.0
        %1381 = vadd.xlane.f32.xlu0 %v1380
        %v1382 = vpop.xlane.xlu0 %1381
        %v1383 = vsel %vm1370, %v1072, 0.0
        %1384 = vadd.xlane.f32.xlu0 %v1383
        %v1385 = vpop.xlane.xlu0 %1384
        %v1386 = vsel %vm1370, %v1077, 0.0
        %1387 = vadd.xlane.f32.xlu0 %v1386
        %v1388 = vpop.xlane.xlu0 %1387
        %v1389 = vsel %vm1370, %v1082, 0.0
        %1390 = vadd.xlane.f32.xlu0 %v1389
        %v1391 = vpop.xlane.xlu0 %1390
        %v1392 = vsel %vm1370, %v1087, 0.0
        %1393 = vadd.xlane.f32.xlu0 %v1392
        %v1394 = vpop.xlane.xlu0 %1393
        %v1395 = vsel %vm1370, %v1092, 0.0
        %1396 = vadd.xlane.f32.xlu0 %v1395
        %v1397 = vpop.xlane.xlu0 %1396
        %v1398 = vsel %vm1370, %v1097, 0.0
        %1399 = vadd.xlane.f32.xlu0 %v1398
        %v1400 = vpop.xlane.xlu0 %1399
        %v1401 = vsel %vm1370, %v1102, 0.0
        %1402 = vadd.xlane.f32.xlu0 %v1401
        %v1403 = vpop.xlane.xlu0 %1402
        %v1404 = vsel %vm1370, %v1107, 0.0
        %1405 = vadd.xlane.f32.xlu0 %v1404
        %v1406 = vpop.xlane.xlu0 %1405
        %v1407 = vsel %vm1370, %v1112, 0.0
        %1408 = vadd.xlane.f32.xlu0 %v1407
        %v1409 = vpop.xlane.xlu0 %1408
        %v1410 = vsel %vm1370, %v1117, 0.0
        %1411 = vadd.xlane.f32.xlu0 %v1410
        %v1412 = vpop.xlane.xlu0 %1411
        %v1413 = vsel %vm1370, %v1122, 0.0
        %1414 = vadd.xlane.f32.xlu0 %v1413
        %v1415 = vpop.xlane.xlu0 %1414
        %v1416 = vsel %vm1370, %v1127, 0.0
        %1417 = vadd.xlane.f32.xlu0 %v1416
        %v1418 = vpop.xlane.xlu0 %1417
        %v1419 = vsel %vm1370, %v1132, 0.0
        %1420 = vadd.xlane.f32.xlu0 %v1419
        %v1421 = vpop.xlane.xlu0 %1420
        %v1422 = vsel %vm1370, %v1137, 0.0
        %1423 = vadd.xlane.f32.xlu0 %v1422
        %v1424 = vpop.xlane.xlu0 %1423
        %v1425 = vsel %vm1370, %v1142, 0.0
        %1426 = vadd.xlane.f32.xlu0 %v1425
        %v1427 = vpop.xlane.xlu0 %1426
        %v1428 = vsel %vm1370, %v1147, 0.0
        %1429 = vadd.xlane.f32.xlu0 %v1428
        %v1430 = vpop.xlane.xlu0 %1429
        %v1431 = vsel %vm1370, %v1152, 0.0
        %1432 = vadd.xlane.f32.xlu0 %v1431
        %v1433 = vpop.xlane.xlu0 %1432
        %v1434 = vsel %vm1370, %v1157, 0.0
        %1435 = vadd.xlane.f32.xlu0 %v1434
        %v1436 = vpop.xlane.xlu0 %1435
        %v1437 = vsel %vm1370, %v1162, 0.0
        %1438 = vadd.xlane.f32.xlu0 %v1437
        %v1439 = vpop.xlane.xlu0 %1438
        %v1440 = vsel %vm1370, %v1167, 0.0
        %1441 = vadd.xlane.f32.xlu0 %v1440
        %v1442 = vpop.xlane.xlu0 %1441
        %v1443 = vsel %vm1370, %v1172, 0.0
        %1444 = vadd.xlane.f32.xlu0 %v1443
        %v1445 = vpop.xlane.xlu0 %1444
        %v1446 = vsel %vm1370, %v1177, 0.0
        %1447 = vadd.xlane.f32.xlu0 %v1446
        %v1448 = vpop.xlane.xlu0 %1447
        %v1449 = vsel %vm1370, %v1182, 0.0
        %1450 = vadd.xlane.f32.xlu0 %v1449
        %v1451 = vpop.xlane.xlu0 %1450
        %v1452 = vsel %vm1370, %v1187, 0.0
        %1453 = vadd.xlane.f32.xlu0 %v1452
        %v1454 = vpop.xlane.xlu0 %1453
        %v1455 = vsel %vm1370, %v1192, 0.0
        %1456 = vadd.xlane.f32.xlu0 %v1455
        %v1457 = vpop.xlane.xlu0 %1456
        %v1458 = vsel %vm1370, %v1197, 0.0
        %1459 = vadd.xlane.f32.xlu0 %v1458
        %v1460 = vpop.xlane.xlu0 %1459
        %v1461 = vsel %vm1370, %v1202, 0.0
        %1462 = vadd.xlane.f32.xlu0 %v1461
        %v1463 = vpop.xlane.xlu0 %1462
        %v1464 = vsel %vm1370, %v1207, 0.0
        %1465 = vadd.xlane.f32.xlu0 %v1464
        %v1466 = vpop.xlane.xlu0 %1465
        %v1467 = vsel %vm1370, %v1212, 0.0
        %1468 = vadd.xlane.f32.xlu0 %v1467
        %v1469 = vpop.xlane.xlu0 %1468
        %v1470 = vsel %vm1370, %v1217, 0.0
        %1471 = vadd.xlane.f32.xlu0 %v1470
        %v1472 = vpop.xlane.xlu0 %1471
        %v1473 = vsel %vm1370, %v1222, 0.0
        %1474 = vadd.xlane.f32.xlu0 %v1473
        %v1475 = vpop.xlane.xlu0 %1474
        %v1476 = vsel %vm1370, %v1227, 0.0
        %1477 = vadd.xlane.f32.xlu0 %v1476
        %v1478 = vpop.xlane.xlu0 %1477
        %v1479 = vsel %vm1370, %v1232, 0.0
        %1480 = vadd.xlane.f32.xlu0 %v1479
        %v1481 = vpop.xlane.xlu0 %1480
        %v1482 = vsel %vm1370, %v1237, 0.0
        %1483 = vadd.xlane.f32.xlu0 %v1482
        %v1484 = vpop.xlane.xlu0 %1483
        %v1485 = vsel %vm1370, %v1242, 0.0
        %1486 = vadd.xlane.f32.xlu0 %v1485
        %v1487 = vpop.xlane.xlu0 %1486
        %v1488 = vsel %vm1370, %v1247, 0.0
        %1489 = vadd.xlane.f32.xlu0 %v1488
        %v1490 = vpop.xlane.xlu0 %1489
        %v1491 = vsel %vm1370, %v1252, 0.0
        %1492 = vadd.xlane.f32.xlu0 %v1491
        %v1493 = vpop.xlane.xlu0 %1492
        %v1494 = vsel %vm1370, %v1257, 0.0
        %1495 = vadd.xlane.f32.xlu0 %v1494
        %v1496 = vpop.xlane.xlu0 %1495
        %v1497 = vsel %vm1370, %v1262, 0.0
        %1498 = vadd.xlane.f32.xlu0 %v1497
        %v1499 = vpop.xlane.xlu0 %1498
        %v1500 = vsel %vm1370, %v1267, 0.0
        %1501 = vadd.xlane.f32.xlu0 %v1500
        %v1502 = vpop.xlane.xlu0 %1501
        %v1503 = vsel %vm1370, %v1272, 0.0
        %1504 = vadd.xlane.f32.xlu0 %v1503
        %v1505 = vpop.xlane.xlu0 %1504
        %v1506 = vsel %vm1370, %v1277, 0.0
        %1507 = vadd.xlane.f32.xlu0 %v1506
        %v1508 = vpop.xlane.xlu0 %1507
        %v1509 = vsel %vm1370, %v1282, 0.0
        %1510 = vadd.xlane.f32.xlu0 %v1509
        %v1511 = vpop.xlane.xlu0 %1510
        %v1512 = vsel %vm1370, %v1287, 0.0
        %1513 = vadd.xlane.f32.xlu0 %v1512
        %v1514 = vpop.xlane.xlu0 %1513
        %v1515 = vsel %vm1370, %v1292, 0.0
        %1516 = vadd.xlane.f32.xlu0 %v1515
        %v1517 = vpop.xlane.xlu0 %1516
        %v1518 = vsel %vm1370, %v1297, 0.0
        %1519 = vadd.xlane.f32.xlu0 %v1518
        %v1520 = vpop.xlane.xlu0 %1519
        %v1521 = vsel %vm1370, %v1302, 0.0
        %1522 = vadd.xlane.f32.xlu0 %v1521
        %v1523 = vpop.xlane.xlu0 %1522
        %v1524 = vsel %vm1370, %v1307, 0.0
        %1525 = vadd.xlane.f32.xlu0 %v1524
        %v1526 = vpop.xlane.xlu0 %1525
        %v1527 = vsel %vm1370, %v1312, 0.0
        %1528 = vadd.xlane.f32.xlu0 %v1527
        %v1529 = vpop.xlane.xlu0 %1528
        %v1530 = vsel %vm1370, %v1317, 0.0
        %1531 = vadd.xlane.f32.xlu0 %v1530
        %v1532 = vpop.xlane.xlu0 %1531
        %v1533 = vsel %vm1370, %v1322, 0.0
        %1534 = vadd.xlane.f32.xlu0 %v1533
        %v1535 = vpop.xlane.xlu0 %1534
        %v1536 = vsel %vm1370, %v1327, 0.0
        %1537 = vadd.xlane.f32.xlu0 %v1536
        %v1538 = vpop.xlane.xlu0 %1537
        %v1539 = vsel %vm1370, %v1332, 0.0
        %1540 = vadd.xlane.f32.xlu0 %v1539
        %v1541 = vpop.xlane.xlu0 %1540
        %v1542 = vsel %vm1370, %v1337, 0.0
        %1543 = vadd.xlane.f32.xlu0 %v1542
        %v1544 = vpop.xlane.xlu0 %1543
        %v1545 = vsel %vm1370, %v1342, 0.0
        %1546 = vadd.xlane.f32.xlu0 %v1545
        %v1547 = vpop.xlane.xlu0 %1546
        %v1548 = vsel %vm1370, %v1347, 0.0
        %1549 = vadd.xlane.f32.xlu0 %v1548
        %v1550 = vpop.xlane.xlu0 %1549
        %v1551 = vsel %vm1370, %v1352, 0.0
        %1552 = vadd.xlane.f32.xlu0 %v1551
        %v1553 = vpop.xlane.xlu0 %1552
        %v1554 = vsel %vm1370, %v1357, 0.0
        %1555 = vadd.xlane.f32.xlu0 %v1554
        %v1556 = vpop.xlane.xlu0 %1555
        %v1557 = vsel %vm1370, %v1362, 0.0
        %1558 = vadd.xlane.f32.xlu0 %v1557
        %v1559 = vpop.xlane.xlu0 %1558
        %v1560 = vsel %vm1370, %v1367, 0.0
        %1561 = vadd.xlane.f32.xlu0 %v1560
        %v1562 = vpop.xlane.xlu0 %1561
        %v1563 = vrot.slane %v1373, 4
        %v1564 = vadd.f32 %v1373, %v1563
        %v1565 = vrot.slane %v1564, 2
        %v1566 = vadd.f32 %v1564, %v1565
        %v1567 = vrot.slane %v1566, 1
        %v1568 = vadd.f32 %v1566, %v1567
        %v1569 = vrot.slane %v1376, 4
        %v1570 = vadd.f32 %v1376, %v1569
        %v1571 = vrot.slane %v1570, 2
        %v1572 = vadd.f32 %v1570, %v1571
        %v1573 = vrot.slane %v1572, 1
        %v1574 = vadd.f32 %v1572, %v1573
        %v1575 = vrot.slane %v1379, 4
        %v1576 = vadd.f32 %v1379, %v1575
        %v1577 = vrot.slane %v1576, 2
        %v1578 = vadd.f32 %v1576, %v1577
        %v1579 = vrot.slane %v1578, 1
        %v1580 = vadd.f32 %v1578, %v1579
        %v1581 = vrot.slane %v1382, 4
        %v1582 = vadd.f32 %v1382, %v1581
        %v1583 = vrot.slane %v1582, 2
        %v1584 = vadd.f32 %v1582, %v1583
        %v1585 = vrot.slane %v1584, 1
        %v1586 = vadd.f32 %v1584, %v1585
        %v1587 = vrot.slane %v1385, 4
        %v1588 = vadd.f32 %v1385, %v1587
        %v1589 = vrot.slane %v1588, 2
        %v1590 = vadd.f32 %v1588, %v1589
        %v1591 = vrot.slane %v1590, 1
        %v1592 = vadd.f32 %v1590, %v1591
        %v1593 = vrot.slane %v1388, 4
        %v1594 = vadd.f32 %v1388, %v1593
        %v1595 = vrot.slane %v1594, 2
        %v1596 = vadd.f32 %v1594, %v1595
        %v1597 = vrot.slane %v1596, 1
        %v1598 = vadd.f32 %v1596, %v1597
        %v1599 = vrot.slane %v1391, 4
        %v1600 = vadd.f32 %v1391, %v1599
        %v1601 = vrot.slane %v1600, 2
        %v1602 = vadd.f32 %v1600, %v1601
        %v1603 = vrot.slane %v1602, 1
        %v1604 = vadd.f32 %v1602, %v1603
        %v1605 = vrot.slane %v1394, 4
        %v1606 = vadd.f32 %v1394, %v1605
        %v1607 = vrot.slane %v1606, 2
        %v1608 = vadd.f32 %v1606, %v1607
        %v1609 = vrot.slane %v1608, 1
        %v1610 = vadd.f32 %v1608, %v1609
        %v1611 = vrot.slane %v1397, 4
        %v1612 = vadd.f32 %v1397, %v1611
        %v1613 = vrot.slane %v1612, 2
        %v1614 = vadd.f32 %v1612, %v1613
        %v1615 = vrot.slane %v1614, 1
        %v1616 = vadd.f32 %v1614, %v1615
        %v1617 = vrot.slane %v1400, 4
        %v1618 = vadd.f32 %v1400, %v1617
        %v1619 = vrot.slane %v1618, 2
        %v1620 = vadd.f32 %v1618, %v1619
        %v1621 = vrot.slane %v1620, 1
        %v1622 = vadd.f32 %v1620, %v1621
        %v1623 = vrot.slane %v1403, 4
        %v1624 = vadd.f32 %v1403, %v1623
        %v1625 = vrot.slane %v1624, 2
        %v1626 = vadd.f32 %v1624, %v1625
        %v1627 = vrot.slane %v1626, 1
        %v1628 = vadd.f32 %v1626, %v1627
        %v1629 = vrot.slane %v1406, 4
        %v1630 = vadd.f32 %v1406, %v1629
        %v1631 = vrot.slane %v1630, 2
        %v1632 = vadd.f32 %v1630, %v1631
        %v1633 = vrot.slane %v1632, 1
        %v1634 = vadd.f32 %v1632, %v1633
        %v1635 = vrot.slane %v1409, 4
        %v1636 = vadd.f32 %v1409, %v1635
        %v1637 = vrot.slane %v1636, 2
        %v1638 = vadd.f32 %v1636, %v1637
        %v1639 = vrot.slane %v1638, 1
        %v1640 = vadd.f32 %v1638, %v1639
        %v1641 = vrot.slane %v1412, 4
        %v1642 = vadd.f32 %v1412, %v1641
        %v1643 = vrot.slane %v1642, 2
        %v1644 = vadd.f32 %v1642, %v1643
        %v1645 = vrot.slane %v1644, 1
        %v1646 = vadd.f32 %v1644, %v1645
        %v1647 = vrot.slane %v1415, 4
        %v1648 = vadd.f32 %v1415, %v1647
        %v1649 = vrot.slane %v1648, 2
        %v1650 = vadd.f32 %v1648, %v1649
        %v1651 = vrot.slane %v1650, 1
        %v1652 = vadd.f32 %v1650, %v1651
        %v1653 = vrot.slane %v1418, 4
        %v1654 = vadd.f32 %v1418, %v1653
        %v1655 = vrot.slane %v1654, 2
        %v1656 = vadd.f32 %v1654, %v1655
        %v1657 = vrot.slane %v1656, 1
        %v1658 = vadd.f32 %v1656, %v1657
        %v1659 = vrot.slane %v1421, 4
        %v1660 = vadd.f32 %v1421, %v1659
        %v1661 = vrot.slane %v1660, 2
        %v1662 = vadd.f32 %v1660, %v1661
        %v1663 = vrot.slane %v1662, 1
        %v1664 = vadd.f32 %v1662, %v1663
        %v1665 = vrot.slane %v1424, 4
        %v1666 = vadd.f32 %v1424, %v1665
        %v1667 = vrot.slane %v1666, 2
        %v1668 = vadd.f32 %v1666, %v1667
        %v1669 = vrot.slane %v1668, 1
        %v1670 = vadd.f32 %v1668, %v1669
        %v1671 = vrot.slane %v1427, 4
        %v1672 = vadd.f32 %v1427, %v1671
        %v1673 = vrot.slane %v1672, 2
        %v1674 = vadd.f32 %v1672, %v1673
        %v1675 = vrot.slane %v1674, 1
        %v1676 = vadd.f32 %v1674, %v1675
        %v1677 = vrot.slane %v1430, 4
        %v1678 = vadd.f32 %v1430, %v1677
        %v1679 = vrot.slane %v1678, 2
        %v1680 = vadd.f32 %v1678, %v1679
        %v1681 = vrot.slane %v1680, 1
        %v1682 = vadd.f32 %v1680, %v1681
        %v1683 = vrot.slane %v1433, 4
        %v1684 = vadd.f32 %v1433, %v1683
        %v1685 = vrot.slane %v1684, 2
        %v1686 = vadd.f32 %v1684, %v1685
        %v1687 = vrot.slane %v1686, 1
        %v1688 = vadd.f32 %v1686, %v1687
        %v1689 = vrot.slane %v1436, 4
        %v1690 = vadd.f32 %v1436, %v1689
        %v1691 = vrot.slane %v1690, 2
        %v1692 = vadd.f32 %v1690, %v1691
        %v1693 = vrot.slane %v1692, 1
        %v1694 = vadd.f32 %v1692, %v1693
        %v1695 = vrot.slane %v1439, 4
        %v1696 = vadd.f32 %v1439, %v1695
        %v1697 = vrot.slane %v1696, 2
        %v1698 = vadd.f32 %v1696, %v1697
        %v1699 = vrot.slane %v1698, 1
        %v1700 = vadd.f32 %v1698, %v1699
        %v1701 = vrot.slane %v1442, 4
        %v1702 = vadd.f32 %v1442, %v1701
        %v1703 = vrot.slane %v1702, 2
        %v1704 = vadd.f32 %v1702, %v1703
        %v1705 = vrot.slane %v1704, 1
        %v1706 = vadd.f32 %v1704, %v1705
        %v1707 = vrot.slane %v1445, 4
        %v1708 = vadd.f32 %v1445, %v1707
        %v1709 = vrot.slane %v1708, 2
        %v1710 = vadd.f32 %v1708, %v1709
        %v1711 = vrot.slane %v1710, 1
        %v1712 = vadd.f32 %v1710, %v1711
        %v1713 = vrot.slane %v1448, 4
        %v1714 = vadd.f32 %v1448, %v1713
        %v1715 = vrot.slane %v1714, 2
        %v1716 = vadd.f32 %v1714, %v1715
        %v1717 = vrot.slane %v1716, 1
        %v1718 = vadd.f32 %v1716, %v1717
        %v1719 = vrot.slane %v1451, 4
        %v1720 = vadd.f32 %v1451, %v1719
        %v1721 = vrot.slane %v1720, 2
        %v1722 = vadd.f32 %v1720, %v1721
        %v1723 = vrot.slane %v1722, 1
        %v1724 = vadd.f32 %v1722, %v1723
        %v1725 = vrot.slane %v1454, 4
        %v1726 = vadd.f32 %v1454, %v1725
        %v1727 = vrot.slane %v1726, 2
        %v1728 = vadd.f32 %v1726, %v1727
        %v1729 = vrot.slane %v1728, 1
        %v1730 = vadd.f32 %v1728, %v1729
        %v1731 = vrot.slane %v1457, 4
        %v1732 = vadd.f32 %v1457, %v1731
        %v1733 = vrot.slane %v1732, 2
        %v1734 = vadd.f32 %v1732, %v1733
        %v1735 = vrot.slane %v1734, 1
        %v1736 = vadd.f32 %v1734, %v1735
        %v1737 = vrot.slane %v1460, 4
        %v1738 = vadd.f32 %v1460, %v1737
        %v1739 = vrot.slane %v1738, 2
        %v1740 = vadd.f32 %v1738, %v1739
        %v1741 = vrot.slane %v1740, 1
        %v1742 = vadd.f32 %v1740, %v1741
        %v1743 = vrot.slane %v1463, 4
        %v1744 = vadd.f32 %v1463, %v1743
        %v1745 = vrot.slane %v1744, 2
        %v1746 = vadd.f32 %v1744, %v1745
        %v1747 = vrot.slane %v1746, 1
        %v1748 = vadd.f32 %v1746, %v1747
        %v1749 = vrot.slane %v1466, 4
        %v1750 = vadd.f32 %v1466, %v1749
        %v1751 = vrot.slane %v1750, 2
        %v1752 = vadd.f32 %v1750, %v1751
        %v1753 = vrot.slane %v1752, 1
        %v1754 = vadd.f32 %v1752, %v1753
        %v1755 = vrot.slane %v1469, 4
        %v1756 = vadd.f32 %v1469, %v1755
        %v1757 = vrot.slane %v1756, 2
        %v1758 = vadd.f32 %v1756, %v1757
        %v1759 = vrot.slane %v1758, 1
        %v1760 = vadd.f32 %v1758, %v1759
        %v1761 = vrot.slane %v1472, 4
        %v1762 = vadd.f32 %v1472, %v1761
        %v1763 = vrot.slane %v1762, 2
        %v1764 = vadd.f32 %v1762, %v1763
        %v1765 = vrot.slane %v1764, 1
        %v1766 = vadd.f32 %v1764, %v1765
        %v1767 = vrot.slane %v1475, 4
        %v1768 = vadd.f32 %v1475, %v1767
        %v1769 = vrot.slane %v1768, 2
        %v1770 = vadd.f32 %v1768, %v1769
        %v1771 = vrot.slane %v1770, 1
        %v1772 = vadd.f32 %v1770, %v1771
        %v1773 = vrot.slane %v1478, 4
        %v1774 = vadd.f32 %v1478, %v1773
        %v1775 = vrot.slane %v1774, 2
        %v1776 = vadd.f32 %v1774, %v1775
        %v1777 = vrot.slane %v1776, 1
        %v1778 = vadd.f32 %v1776, %v1777
        %v1779 = vrot.slane %v1481, 4
        %v1780 = vadd.f32 %v1481, %v1779
        %v1781 = vrot.slane %v1780, 2
        %v1782 = vadd.f32 %v1780, %v1781
        %v1783 = vrot.slane %v1782, 1
        %v1784 = vadd.f32 %v1782, %v1783
        %v1785 = vrot.slane %v1484, 4
        %v1786 = vadd.f32 %v1484, %v1785
        %v1787 = vrot.slane %v1786, 2
        %v1788 = vadd.f32 %v1786, %v1787
        %v1789 = vrot.slane %v1788, 1
        %v1790 = vadd.f32 %v1788, %v1789
        %v1791 = vrot.slane %v1487, 4
        %v1792 = vadd.f32 %v1487, %v1791
        %v1793 = vrot.slane %v1792, 2
        %v1794 = vadd.f32 %v1792, %v1793
        %v1795 = vrot.slane %v1794, 1
        %v1796 = vadd.f32 %v1794, %v1795
        %v1797 = vrot.slane %v1490, 4
        %v1798 = vadd.f32 %v1490, %v1797
        %v1799 = vrot.slane %v1798, 2
        %v1800 = vadd.f32 %v1798, %v1799
        %v1801 = vrot.slane %v1800, 1
        %v1802 = vadd.f32 %v1800, %v1801
        %v1803 = vrot.slane %v1493, 4
        %v1804 = vadd.f32 %v1493, %v1803
        %v1805 = vrot.slane %v1804, 2
        %v1806 = vadd.f32 %v1804, %v1805
        %v1807 = vrot.slane %v1806, 1
        %v1808 = vadd.f32 %v1806, %v1807
        %v1809 = vrot.slane %v1496, 4
        %v1810 = vadd.f32 %v1496, %v1809
        %v1811 = vrot.slane %v1810, 2
        %v1812 = vadd.f32 %v1810, %v1811
        %v1813 = vrot.slane %v1812, 1
        %v1814 = vadd.f32 %v1812, %v1813
        %v1815 = vrot.slane %v1499, 4
        %v1816 = vadd.f32 %v1499, %v1815
        %v1817 = vrot.slane %v1816, 2
        %v1818 = vadd.f32 %v1816, %v1817
        %v1819 = vrot.slane %v1818, 1
        %v1820 = vadd.f32 %v1818, %v1819
        %v1821 = vrot.slane %v1502, 4
        %v1822 = vadd.f32 %v1502, %v1821
        %v1823 = vrot.slane %v1822, 2
        %v1824 = vadd.f32 %v1822, %v1823
        %v1825 = vrot.slane %v1824, 1
        %v1826 = vadd.f32 %v1824, %v1825
        %v1827 = vrot.slane %v1505, 4
        %v1828 = vadd.f32 %v1505, %v1827
        %v1829 = vrot.slane %v1828, 2
        %v1830 = vadd.f32 %v1828, %v1829
        %v1831 = vrot.slane %v1830, 1
        %v1832 = vadd.f32 %v1830, %v1831
        %v1833 = vrot.slane %v1508, 4
        %v1834 = vadd.f32 %v1508, %v1833
        %v1835 = vrot.slane %v1834, 2
        %v1836 = vadd.f32 %v1834, %v1835
        %v1837 = vrot.slane %v1836, 1
        %v1838 = vadd.f32 %v1836, %v1837
        %v1839 = vrot.slane %v1511, 4
        %v1840 = vadd.f32 %v1511, %v1839
        %v1841 = vrot.slane %v1840, 2
        %v1842 = vadd.f32 %v1840, %v1841
        %v1843 = vrot.slane %v1842, 1
        %v1844 = vadd.f32 %v1842, %v1843
        %v1845 = vrot.slane %v1514, 4
        %v1846 = vadd.f32 %v1514, %v1845
        %v1847 = vrot.slane %v1846, 2
        %v1848 = vadd.f32 %v1846, %v1847
        %v1849 = vrot.slane %v1848, 1
        %v1850 = vadd.f32 %v1848, %v1849
        %v1851 = vrot.slane %v1517, 4
        %v1852 = vadd.f32 %v1517, %v1851
        %v1853 = vrot.slane %v1852, 2
        %v1854 = vadd.f32 %v1852, %v1853
        %v1855 = vrot.slane %v1854, 1
        %v1856 = vadd.f32 %v1854, %v1855
        %v1857 = vrot.slane %v1520, 4
        %v1858 = vadd.f32 %v1520, %v1857
        %v1859 = vrot.slane %v1858, 2
        %v1860 = vadd.f32 %v1858, %v1859
        %v1861 = vrot.slane %v1860, 1
        %v1862 = vadd.f32 %v1860, %v1861
        %v1863 = vrot.slane %v1523, 4
        %v1864 = vadd.f32 %v1523, %v1863
        %v1865 = vrot.slane %v1864, 2
        %v1866 = vadd.f32 %v1864, %v1865
        %v1867 = vrot.slane %v1866, 1
        %v1868 = vadd.f32 %v1866, %v1867
        %v1869 = vrot.slane %v1526, 4
        %v1870 = vadd.f32 %v1526, %v1869
        %v1871 = vrot.slane %v1870, 2
        %v1872 = vadd.f32 %v1870, %v1871
        %v1873 = vrot.slane %v1872, 1
        %v1874 = vadd.f32 %v1872, %v1873
        %v1875 = vrot.slane %v1529, 4
        %v1876 = vadd.f32 %v1529, %v1875
        %v1877 = vrot.slane %v1876, 2
        %v1878 = vadd.f32 %v1876, %v1877
        %v1879 = vrot.slane %v1878, 1
        %v1880 = vadd.f32 %v1878, %v1879
        %v1881 = vrot.slane %v1532, 4
        %v1882 = vadd.f32 %v1532, %v1881
        %v1883 = vrot.slane %v1882, 2
        %v1884 = vadd.f32 %v1882, %v1883
        %v1885 = vrot.slane %v1884, 1
        %v1886 = vadd.f32 %v1884, %v1885
        %v1887 = vrot.slane %v1535, 4
        %v1888 = vadd.f32 %v1535, %v1887
        %v1889 = vrot.slane %v1888, 2
        %v1890 = vadd.f32 %v1888, %v1889
        %v1891 = vrot.slane %v1890, 1
        %v1892 = vadd.f32 %v1890, %v1891
        %v1893 = vrot.slane %v1538, 4
        %v1894 = vadd.f32 %v1538, %v1893
        %v1895 = vrot.slane %v1894, 2
        %v1896 = vadd.f32 %v1894, %v1895
        %v1897 = vrot.slane %v1896, 1
        %v1898 = vadd.f32 %v1896, %v1897
        %v1899 = vrot.slane %v1541, 4
        %v1900 = vadd.f32 %v1541, %v1899
        %v1901 = vrot.slane %v1900, 2
        %v1902 = vadd.f32 %v1900, %v1901
        %v1903 = vrot.slane %v1902, 1
        %v1904 = vadd.f32 %v1902, %v1903
        %v1905 = vrot.slane %v1544, 4
        %v1906 = vadd.f32 %v1544, %v1905
        %v1907 = vrot.slane %v1906, 2
        %v1908 = vadd.f32 %v1906, %v1907
        %v1909 = vrot.slane %v1908, 1
        %v1910 = vadd.f32 %v1908, %v1909
        %v1911 = vrot.slane %v1547, 4
        %v1912 = vadd.f32 %v1547, %v1911
        %v1913 = vrot.slane %v1912, 2
        %v1914 = vadd.f32 %v1912, %v1913
        %v1915 = vrot.slane %v1914, 1
        %v1916 = vadd.f32 %v1914, %v1915
        %v1917 = vrot.slane %v1550, 4
        %v1918 = vadd.f32 %v1550, %v1917
        %v1919 = vrot.slane %v1918, 2
        %v1920 = vadd.f32 %v1918, %v1919
        %v1921 = vrot.slane %v1920, 1
        %v1922 = vadd.f32 %v1920, %v1921
        %v1923 = vrot.slane %v1553, 4
        %v1924 = vadd.f32 %v1553, %v1923
        %v1925 = vrot.slane %v1924, 2
        %v1926 = vadd.f32 %v1924, %v1925
        %v1927 = vrot.slane %v1926, 1
        %v1928 = vadd.f32 %v1926, %v1927
        %v1929 = vrot.slane %v1556, 4
        %v1930 = vadd.f32 %v1556, %v1929
        %v1931 = vrot.slane %v1930, 2
        %v1932 = vadd.f32 %v1930, %v1931
        %v1933 = vrot.slane %v1932, 1
        %v1934 = vadd.f32 %v1932, %v1933
        %v1935 = vrot.slane %v1559, 4
        %v1936 = vadd.f32 %v1559, %v1935
        %v1937 = vrot.slane %v1936, 2
        %v1938 = vadd.f32 %v1936, %v1937
        %v1939 = vrot.slane %v1938, 1
        %v1940 = vadd.f32 %v1938, %v1939
        %v1941 = vrot.slane %v1562, 4
        %v1942 = vadd.f32 %v1562, %v1941
        %v1943 = vrot.slane %v1942, 2
        %v1944 = vadd.f32 %v1942, %v1943
        %v1945 = vrot.slane %v1944, 1
        %v1946 = vadd.f32 %v1944, %v1945
        %v1947 = vmul.f32 %v1052, %v1052
        %v1948 = vmul.f32 %v1057, %v1057
        %v1949 = vmul.f32 %v1062, %v1062
        %v1950 = vmul.f32 %v1067, %v1067
        %v1951 = vmul.f32 %v1072, %v1072
        %v1952 = vmul.f32 %v1077, %v1077
        %v1953 = vmul.f32 %v1082, %v1082
        %v1954 = vmul.f32 %v1087, %v1087
        %v1955 = vmul.f32 %v1092, %v1092
        %v1956 = vmul.f32 %v1097, %v1097
        %v1957 = vmul.f32 %v1102, %v1102
        %v1958 = vmul.f32 %v1107, %v1107
        %v1959 = vmul.f32 %v1112, %v1112
        %v1960 = vmul.f32 %v1117, %v1117
        %v1961 = vmul.f32 %v1122, %v1122
        %v1962 = vmul.f32 %v1127, %v1127
        %v1963 = vmul.f32 %v1132, %v1132
        %v1964 = vmul.f32 %v1137, %v1137
        %v1965 = vmul.f32 %v1142, %v1142
        %v1966 = vmul.f32 %v1147, %v1147
        %v1967 = vmul.f32 %v1152, %v1152
        %v1968 = vmul.f32 %v1157, %v1157
        %v1969 = vmul.f32 %v1162, %v1162
        %v1970 = vmul.f32 %v1167, %v1167
        %v1971 = vmul.f32 %v1172, %v1172
        %v1972 = vmul.f32 %v1177, %v1177
        %v1973 = vmul.f32 %v1182, %v1182
        %v1974 = vmul.f32 %v1187, %v1187
        %v1975 = vmul.f32 %v1192, %v1192
        %v1976 = vmul.f32 %v1197, %v1197
        %v1977 = vmul.f32 %v1202, %v1202
        %v1978 = vmul.f32 %v1207, %v1207
        %v1979 = vmul.f32 %v1212, %v1212
        %v1980 = vmul.f32 %v1217, %v1217
        %v1981 = vmul.f32 %v1222, %v1222
        %v1982 = vmul.f32 %v1227, %v1227
        %v1983 = vmul.f32 %v1232, %v1232
        %v1984 = vmul.f32 %v1237, %v1237
        %v1985 = vmul.f32 %v1242, %v1242
        %v1986 = vmul.f32 %v1247, %v1247
        %v1987 = vmul.f32 %v1252, %v1252
        %v1988 = vmul.f32 %v1257, %v1257
        %v1989 = vmul.f32 %v1262, %v1262
        %v1990 = vmul.f32 %v1267, %v1267
        %v1991 = vmul.f32 %v1272, %v1272
        %v1992 = vmul.f32 %v1277, %v1277
        %v1993 = vmul.f32 %v1282, %v1282
        %v1994 = vmul.f32 %v1287, %v1287
        %v1995 = vmul.f32 %v1292, %v1292
        %v1996 = vmul.f32 %v1297, %v1297
        %v1997 = vmul.f32 %v1302, %v1302
        %v1998 = vmul.f32 %v1307, %v1307
        %v1999 = vmul.f32 %v1312, %v1312
        %v2000 = vmul.f32 %v1317, %v1317
        %v2001 = vmul.f32 %v1322, %v1322
        %v2002 = vmul.f32 %v1327, %v1327
        %v2003 = vmul.f32 %v1332, %v1332
        %v2004 = vmul.f32 %v1337, %v1337
        %v2005 = vmul.f32 %v1342, %v1342
        %v2006 = vmul.f32 %v1347, %v1347
        %v2007 = vmul.f32 %v1352, %v1352
        %v2008 = vmul.f32 %v1357, %v1357
        %v2009 = vmul.f32 %v1362, %v1362
        %v2010 = vmul.f32 %v1367, %v1367
        %v2011 = vsel %vm1370, %v1947, 0.0
        %2012 = vadd.xlane.f32.xlu0 %v2011
        %v2013 = vpop.xlane.xlu0 %2012
        %v2014 = vsel %vm1370, %v1948, 0.0
        %2015 = vadd.xlane.f32.xlu0 %v2014
        %v2016 = vpop.xlane.xlu0 %2015
        %v2017 = vsel %vm1370, %v1949, 0.0
        %2018 = vadd.xlane.f32.xlu0 %v2017
        %v2019 = vpop.xlane.xlu0 %2018
        %v2020 = vsel %vm1370, %v1950, 0.0
        %2021 = vadd.xlane.f32.xlu0 %v2020
        %v2022 = vpop.xlane.xlu0 %2021
        %v2023 = vsel %vm1370, %v1951, 0.0
        %2024 = vadd.xlane.f32.xlu0 %v2023
        %v2025 = vpop.xlane.xlu0 %2024
        %v2026 = vsel %vm1370, %v1952, 0.0
        %2027 = vadd.xlane.f32.xlu0 %v2026
        %v2028 = vpop.xlane.xlu0 %2027
        %v2029 = vsel %vm1370, %v1953, 0.0
        %2030 = vadd.xlane.f32.xlu0 %v2029
        %v2031 = vpop.xlane.xlu0 %2030
        %v2032 = vsel %vm1370, %v1954, 0.0
        %2033 = vadd.xlane.f32.xlu0 %v2032
        %v2034 = vpop.xlane.xlu0 %2033
        %v2035 = vsel %vm1370, %v1955, 0.0
        %2036 = vadd.xlane.f32.xlu0 %v2035
        %v2037 = vpop.xlane.xlu0 %2036
        %v2038 = vsel %vm1370, %v1956, 0.0
        %2039 = vadd.xlane.f32.xlu0 %v2038
        %v2040 = vpop.xlane.xlu0 %2039
        %v2041 = vsel %vm1370, %v1957, 0.0
        %2042 = vadd.xlane.f32.xlu0 %v2041
        %v2043 = vpop.xlane.xlu0 %2042
        %v2044 = vsel %vm1370, %v1958, 0.0
        %2045 = vadd.xlane.f32.xlu0 %v2044
        %v2046 = vpop.xlane.xlu0 %2045
        %v2047 = vsel %vm1370, %v1959, 0.0
        %2048 = vadd.xlane.f32.xlu0 %v2047
        %v2049 = vpop.xlane.xlu0 %2048
        %v2050 = vsel %vm1370, %v1960, 0.0
        %2051 = vadd.xlane.f32.xlu0 %v2050
        %v2052 = vpop.xlane.xlu0 %2051
        %v2053 = vsel %vm1370, %v1961, 0.0
        %2054 = vadd.xlane.f32.xlu0 %v2053
        %v2055 = vpop.xlane.xlu0 %2054
        %v2056 = vsel %vm1370, %v1962, 0.0
        %2057 = vadd.xlane.f32.xlu0 %v2056
        %v2058 = vpop.xlane.xlu0 %2057
        %v2059 = vsel %vm1370, %v1963, 0.0
        %2060 = vadd.xlane.f32.xlu0 %v2059
        %v2061 = vpop.xlane.xlu0 %2060
        %v2062 = vsel %vm1370, %v1964, 0.0
        %2063 = vadd.xlane.f32.xlu0 %v2062
        %v2064 = vpop.xlane.xlu0 %2063
        %v2065 = vsel %vm1370, %v1965, 0.0
        %2066 = vadd.xlane.f32.xlu0 %v2065
        %v2067 = vpop.xlane.xlu0 %2066
        %v2068 = vsel %vm1370, %v1966, 0.0
        %2069 = vadd.xlane.f32.xlu0 %v2068
        %v2070 = vpop.xlane.xlu0 %2069
        %v2071 = vsel %vm1370, %v1967, 0.0
        %2072 = vadd.xlane.f32.xlu0 %v2071
        %v2073 = vpop.xlane.xlu0 %2072
        %v2074 = vsel %vm1370, %v1968, 0.0
        %2075 = vadd.xlane.f32.xlu0 %v2074
        %v2076 = vpop.xlane.xlu0 %2075
        %v2077 = vsel %vm1370, %v1969, 0.0
        %2078 = vadd.xlane.f32.xlu0 %v2077
        %v2079 = vpop.xlane.xlu0 %2078
        %v2080 = vsel %vm1370, %v1970, 0.0
        %2081 = vadd.xlane.f32.xlu0 %v2080
        %v2082 = vpop.xlane.xlu0 %2081
        %v2083 = vsel %vm1370, %v1971, 0.0
        %2084 = vadd.xlane.f32.xlu0 %v2083
        %v2085 = vpop.xlane.xlu0 %2084
        %v2086 = vsel %vm1370, %v1972, 0.0
        %2087 = vadd.xlane.f32.xlu0 %v2086
        %v2088 = vpop.xlane.xlu0 %2087
        %v2089 = vsel %vm1370, %v1973, 0.0
        %2090 = vadd.xlane.f32.xlu0 %v2089
        %v2091 = vpop.xlane.xlu0 %2090
        %v2092 = vsel %vm1370, %v1974, 0.0
        %2093 = vadd.xlane.f32.xlu0 %v2092
        %v2094 = vpop.xlane.xlu0 %2093
        %v2095 = vsel %vm1370, %v1975, 0.0
        %2096 = vadd.xlane.f32.xlu0 %v2095
        %v2097 = vpop.xlane.xlu0 %2096
        %v2098 = vsel %vm1370, %v1976, 0.0
        %2099 = vadd.xlane.f32.xlu0 %v2098
        %v2100 = vpop.xlane.xlu0 %2099
        %v2101 = vsel %vm1370, %v1977, 0.0
        %2102 = vadd.xlane.f32.xlu0 %v2101
        %v2103 = vpop.xlane.xlu0 %2102
        %v2104 = vsel %vm1370, %v1978, 0.0
        %2105 = vadd.xlane.f32.xlu0 %v2104
        %v2106 = vpop.xlane.xlu0 %2105
        %v2107 = vsel %vm1370, %v1979, 0.0
        %2108 = vadd.xlane.f32.xlu0 %v2107
        %v2109 = vpop.xlane.xlu0 %2108
        %v2110 = vsel %vm1370, %v1980, 0.0
        %2111 = vadd.xlane.f32.xlu0 %v2110
        %v2112 = vpop.xlane.xlu0 %2111
        %v2113 = vsel %vm1370, %v1981, 0.0
        %2114 = vadd.xlane.f32.xlu0 %v2113
        %v2115 = vpop.xlane.xlu0 %2114
        %v2116 = vsel %vm1370, %v1982, 0.0
        %2117 = vadd.xlane.f32.xlu0 %v2116
        %v2118 = vpop.xlane.xlu0 %2117
        %v2119 = vsel %vm1370, %v1983, 0.0
        %2120 = vadd.xlane.f32.xlu0 %v2119
        %v2121 = vpop.xlane.xlu0 %2120
        %v2122 = vsel %vm1370, %v1984, 0.0
        %2123 = vadd.xlane.f32.xlu0 %v2122
        %v2124 = vpop.xlane.xlu0 %2123
        %v2125 = vsel %vm1370, %v1985, 0.0
        %2126 = vadd.xlane.f32.xlu0 %v2125
        %v2127 = vpop.xlane.xlu0 %2126
        %v2128 = vsel %vm1370, %v1986, 0.0
        %2129 = vadd.xlane.f32.xlu0 %v2128
        %v2130 = vpop.xlane.xlu0 %2129
        %v2131 = vsel %vm1370, %v1987, 0.0
        %2132 = vadd.xlane.f32.xlu0 %v2131
        %v2133 = vpop.xlane.xlu0 %2132
        %v2134 = vsel %vm1370, %v1988, 0.0
        %2135 = vadd.xlane.f32.xlu0 %v2134
        %v2136 = vpop.xlane.xlu0 %2135
        %v2137 = vsel %vm1370, %v1989, 0.0
        %2138 = vadd.xlane.f32.xlu0 %v2137
        %v2139 = vpop.xlane.xlu0 %2138
        %v2140 = vsel %vm1370, %v1990, 0.0
        %2141 = vadd.xlane.f32.xlu0 %v2140
        %v2142 = vpop.xlane.xlu0 %2141
        %v2143 = vsel %vm1370, %v1991, 0.0
        %2144 = vadd.xlane.f32.xlu0 %v2143
        %v2145 = vpop.xlane.xlu0 %2144
        %v2146 = vsel %vm1370, %v1992, 0.0
        %2147 = vadd.xlane.f32.xlu0 %v2146
        %v2148 = vpop.xlane.xlu0 %2147
        %v2149 = vsel %vm1370, %v1993, 0.0
        %2150 = vadd.xlane.f32.xlu0 %v2149
        %v2151 = vpop.xlane.xlu0 %2150
        %v2152 = vsel %vm1370, %v1994, 0.0
        %2153 = vadd.xlane.f32.xlu0 %v2152
        %v2154 = vpop.xlane.xlu0 %2153
        %v2155 = vsel %vm1370, %v1995, 0.0
        %2156 = vadd.xlane.f32.xlu0 %v2155
        %v2157 = vpop.xlane.xlu0 %2156
        %v2158 = vsel %vm1370, %v1996, 0.0
        %2159 = vadd.xlane.f32.xlu0 %v2158
        %v2160 = vpop.xlane.xlu0 %2159
        %v2161 = vsel %vm1370, %v1997, 0.0
        %2162 = vadd.xlane.f32.xlu0 %v2161
        %v2163 = vpop.xlane.xlu0 %2162
        %v2164 = vsel %vm1370, %v1998, 0.0
        %2165 = vadd.xlane.f32.xlu0 %v2164
        %v2166 = vpop.xlane.xlu0 %2165
        %v2167 = vsel %vm1370, %v1999, 0.0
        %2168 = vadd.xlane.f32.xlu0 %v2167
        %v2169 = vpop.xlane.xlu0 %2168
        %v2170 = vsel %vm1370, %v2000, 0.0
        %2171 = vadd.xlane.f32.xlu0 %v2170
        %v2172 = vpop.xlane.xlu0 %2171
        %v2173 = vsel %vm1370, %v2001, 0.0
        %2174 = vadd.xlane.f32.xlu0 %v2173
        %v2175 = vpop.xlane.xlu0 %2174
        %v2176 = vsel %vm1370, %v2002, 0.0
        %2177 = vadd.xlane.f32.xlu0 %v2176
        %v2178 = vpop.xlane.xlu0 %2177
        %v2179 = vsel %vm1370, %v2003, 0.0
        %2180 = vadd.xlane.f32.xlu0 %v2179
        %v2181 = vpop.xlane.xlu0 %2180
        %v2182 = vsel %vm1370, %v2004, 0.0
        %2183 = vadd.xlane.f32.xlu0 %v2182
        %v2184 = vpop.xlane.xlu0 %2183
        %v2185 = vsel %vm1370, %v2005, 0.0
        %2186 = vadd.xlane.f32.xlu0 %v2185
        %v2187 = vpop.xlane.xlu0 %2186
        %v2188 = vsel %vm1370, %v2006, 0.0
        %2189 = vadd.xlane.f32.xlu0 %v2188
        %v2190 = vpop.xlane.xlu0 %2189
        %v2191 = vsel %vm1370, %v2007, 0.0
        %2192 = vadd.xlane.f32.xlu0 %v2191
        %v2193 = vpop.xlane.xlu0 %2192
        %v2194 = vsel %vm1370, %v2008, 0.0
        %2195 = vadd.xlane.f32.xlu0 %v2194
        %v2196 = vpop.xlane.xlu0 %2195
        %v2197 = vsel %vm1370, %v2009, 0.0
        %2198 = vadd.xlane.f32.xlu0 %v2197
        %v2199 = vpop.xlane.xlu0 %2198
        %v2200 = vsel %vm1370, %v2010, 0.0
        %2201 = vadd.xlane.f32.xlu0 %v2200
        %v2202 = vpop.xlane.xlu0 %2201
        %v2203 = vrot.slane %v2013, 4
        %v2204 = vadd.f32 %v2013, %v2203
        %v2205 = vrot.slane %v2204, 2
        %v2206 = vadd.f32 %v2204, %v2205
        %v2207 = vrot.slane %v2206, 1
        %v2208 = vadd.f32 %v2206, %v2207
        %v2209 = vrot.slane %v2016, 4
        %v2210 = vadd.f32 %v2016, %v2209
        %v2211 = vrot.slane %v2210, 2
        %v2212 = vadd.f32 %v2210, %v2211
        %v2213 = vrot.slane %v2212, 1
        %v2214 = vadd.f32 %v2212, %v2213
        %v2215 = vrot.slane %v2019, 4
        %v2216 = vadd.f32 %v2019, %v2215
        %v2217 = vrot.slane %v2216, 2
        %v2218 = vadd.f32 %v2216, %v2217
        %v2219 = vrot.slane %v2218, 1
        %v2220 = vadd.f32 %v2218, %v2219
        %v2221 = vrot.slane %v2022, 4
        %v2222 = vadd.f32 %v2022, %v2221
        %v2223 = vrot.slane %v2222, 2
        %v2224 = vadd.f32 %v2222, %v2223
        %v2225 = vrot.slane %v2224, 1
        %v2226 = vadd.f32 %v2224, %v2225
        %v2227 = vrot.slane %v2025, 4
        %v2228 = vadd.f32 %v2025, %v2227
        %v2229 = vrot.slane %v2228, 2
        %v2230 = vadd.f32 %v2228, %v2229
        %v2231 = vrot.slane %v2230, 1
        %v2232 = vadd.f32 %v2230, %v2231
        %v2233 = vrot.slane %v2028, 4
        %v2234 = vadd.f32 %v2028, %v2233
        %v2235 = vrot.slane %v2234, 2
        %v2236 = vadd.f32 %v2234, %v2235
        %v2237 = vrot.slane %v2236, 1
        %v2238 = vadd.f32 %v2236, %v2237
        %v2239 = vrot.slane %v2031, 4
        %v2240 = vadd.f32 %v2031, %v2239
        %v2241 = vrot.slane %v2240, 2
        %v2242 = vadd.f32 %v2240, %v2241
        %v2243 = vrot.slane %v2242, 1
        %v2244 = vadd.f32 %v2242, %v2243
        %v2245 = vrot.slane %v2034, 4
        %v2246 = vadd.f32 %v2034, %v2245
        %v2247 = vrot.slane %v2246, 2
        %v2248 = vadd.f32 %v2246, %v2247
        %v2249 = vrot.slane %v2248, 1
        %v2250 = vadd.f32 %v2248, %v2249
        %v2251 = vrot.slane %v2037, 4
        %v2252 = vadd.f32 %v2037, %v2251
        %v2253 = vrot.slane %v2252, 2
        %v2254 = vadd.f32 %v2252, %v2253
        %v2255 = vrot.slane %v2254, 1
        %v2256 = vadd.f32 %v2254, %v2255
        %v2257 = vrot.slane %v2040, 4
        %v2258 = vadd.f32 %v2040, %v2257
        %v2259 = vrot.slane %v2258, 2
        %v2260 = vadd.f32 %v2258, %v2259
        %v2261 = vrot.slane %v2260, 1
        %v2262 = vadd.f32 %v2260, %v2261
        %v2263 = vrot.slane %v2043, 4
        %v2264 = vadd.f32 %v2043, %v2263
        %v2265 = vrot.slane %v2264, 2
        %v2266 = vadd.f32 %v2264, %v2265
        %v2267 = vrot.slane %v2266, 1
        %v2268 = vadd.f32 %v2266, %v2267
        %v2269 = vrot.slane %v2046, 4
        %v2270 = vadd.f32 %v2046, %v2269
        %v2271 = vrot.slane %v2270, 2
        %v2272 = vadd.f32 %v2270, %v2271
        %v2273 = vrot.slane %v2272, 1
        %v2274 = vadd.f32 %v2272, %v2273
        %v2275 = vrot.slane %v2049, 4
        %v2276 = vadd.f32 %v2049, %v2275
        %v2277 = vrot.slane %v2276, 2
        %v2278 = vadd.f32 %v2276, %v2277
        %v2279 = vrot.slane %v2278, 1
        %v2280 = vadd.f32 %v2278, %v2279
        %v2281 = vrot.slane %v2052, 4
        %v2282 = vadd.f32 %v2052, %v2281
        %v2283 = vrot.slane %v2282, 2
        %v2284 = vadd.f32 %v2282, %v2283
        %v2285 = vrot.slane %v2284, 1
        %v2286 = vadd.f32 %v2284, %v2285
        %v2287 = vrot.slane %v2055, 4
        %v2288 = vadd.f32 %v2055, %v2287
        %v2289 = vrot.slane %v2288, 2
        %v2290 = vadd.f32 %v2288, %v2289
        %v2291 = vrot.slane %v2290, 1
        %v2292 = vadd.f32 %v2290, %v2291
        %v2293 = vrot.slane %v2058, 4
        %v2294 = vadd.f32 %v2058, %v2293
        %v2295 = vrot.slane %v2294, 2
        %v2296 = vadd.f32 %v2294, %v2295
        %v2297 = vrot.slane %v2296, 1
        %v2298 = vadd.f32 %v2296, %v2297
        %v2299 = vrot.slane %v2061, 4
        %v2300 = vadd.f32 %v2061, %v2299
        %v2301 = vrot.slane %v2300, 2
        %v2302 = vadd.f32 %v2300, %v2301
        %v2303 = vrot.slane %v2302, 1
        %v2304 = vadd.f32 %v2302, %v2303
        %v2305 = vrot.slane %v2064, 4
        %v2306 = vadd.f32 %v2064, %v2305
        %v2307 = vrot.slane %v2306, 2
        %v2308 = vadd.f32 %v2306, %v2307
        %v2309 = vrot.slane %v2308, 1
        %v2310 = vadd.f32 %v2308, %v2309
        %v2311 = vrot.slane %v2067, 4
        %v2312 = vadd.f32 %v2067, %v2311
        %v2313 = vrot.slane %v2312, 2
        %v2314 = vadd.f32 %v2312, %v2313
        %v2315 = vrot.slane %v2314, 1
        %v2316 = vadd.f32 %v2314, %v2315
        %v2317 = vrot.slane %v2070, 4
        %v2318 = vadd.f32 %v2070, %v2317
        %v2319 = vrot.slane %v2318, 2
        %v2320 = vadd.f32 %v2318, %v2319
        %v2321 = vrot.slane %v2320, 1
        %v2322 = vadd.f32 %v2320, %v2321
        %v2323 = vrot.slane %v2073, 4
        %v2324 = vadd.f32 %v2073, %v2323
        %v2325 = vrot.slane %v2324, 2
        %v2326 = vadd.f32 %v2324, %v2325
        %v2327 = vrot.slane %v2326, 1
        %v2328 = vadd.f32 %v2326, %v2327
        %v2329 = vrot.slane %v2076, 4
        %v2330 = vadd.f32 %v2076, %v2329
        %v2331 = vrot.slane %v2330, 2
        %v2332 = vadd.f32 %v2330, %v2331
        %v2333 = vrot.slane %v2332, 1
        %v2334 = vadd.f32 %v2332, %v2333
        %v2335 = vrot.slane %v2079, 4
        %v2336 = vadd.f32 %v2079, %v2335
        %v2337 = vrot.slane %v2336, 2
        %v2338 = vadd.f32 %v2336, %v2337
        %v2339 = vrot.slane %v2338, 1
        %v2340 = vadd.f32 %v2338, %v2339
        %v2341 = vrot.slane %v2082, 4
        %v2342 = vadd.f32 %v2082, %v2341
        %v2343 = vrot.slane %v2342, 2
        %v2344 = vadd.f32 %v2342, %v2343
        %v2345 = vrot.slane %v2344, 1
        %v2346 = vadd.f32 %v2344, %v2345
        %v2347 = vrot.slane %v2085, 4
        %v2348 = vadd.f32 %v2085, %v2347
        %v2349 = vrot.slane %v2348, 2
        %v2350 = vadd.f32 %v2348, %v2349
        %v2351 = vrot.slane %v2350, 1
        %v2352 = vadd.f32 %v2350, %v2351
        %v2353 = vrot.slane %v2088, 4
        %v2354 = vadd.f32 %v2088, %v2353
        %v2355 = vrot.slane %v2354, 2
        %v2356 = vadd.f32 %v2354, %v2355
        %v2357 = vrot.slane %v2356, 1
        %v2358 = vadd.f32 %v2356, %v2357
        %v2359 = vrot.slane %v2091, 4
        %v2360 = vadd.f32 %v2091, %v2359
        %v2361 = vrot.slane %v2360, 2
        %v2362 = vadd.f32 %v2360, %v2361
        %v2363 = vrot.slane %v2362, 1
        %v2364 = vadd.f32 %v2362, %v2363
        %v2365 = vrot.slane %v2094, 4
        %v2366 = vadd.f32 %v2094, %v2365
        %v2367 = vrot.slane %v2366, 2
        %v2368 = vadd.f32 %v2366, %v2367
        %v2369 = vrot.slane %v2368, 1
        %v2370 = vadd.f32 %v2368, %v2369
        %v2371 = vrot.slane %v2097, 4
        %v2372 = vadd.f32 %v2097, %v2371
        %v2373 = vrot.slane %v2372, 2
        %v2374 = vadd.f32 %v2372, %v2373
        %v2375 = vrot.slane %v2374, 1
        %v2376 = vadd.f32 %v2374, %v2375
        %v2377 = vrot.slane %v2100, 4
        %v2378 = vadd.f32 %v2100, %v2377
        %v2379 = vrot.slane %v2378, 2
        %v2380 = vadd.f32 %v2378, %v2379
        %v2381 = vrot.slane %v2380, 1
        %v2382 = vadd.f32 %v2380, %v2381
        %v2383 = vrot.slane %v2103, 4
        %v2384 = vadd.f32 %v2103, %v2383
        %v2385 = vrot.slane %v2384, 2
        %v2386 = vadd.f32 %v2384, %v2385
        %v2387 = vrot.slane %v2386, 1
        %v2388 = vadd.f32 %v2386, %v2387
        %v2389 = vrot.slane %v2106, 4
        %v2390 = vadd.f32 %v2106, %v2389
        %v2391 = vrot.slane %v2390, 2
        %v2392 = vadd.f32 %v2390, %v2391
        %v2393 = vrot.slane %v2392, 1
        %v2394 = vadd.f32 %v2392, %v2393
        %v2395 = vrot.slane %v2109, 4
        %v2396 = vadd.f32 %v2109, %v2395
        %v2397 = vrot.slane %v2396, 2
        %v2398 = vadd.f32 %v2396, %v2397
        %v2399 = vrot.slane %v2398, 1
        %v2400 = vadd.f32 %v2398, %v2399
        %v2401 = vrot.slane %v2112, 4
        %v2402 = vadd.f32 %v2112, %v2401
        %v2403 = vrot.slane %v2402, 2
        %v2404 = vadd.f32 %v2402, %v2403
        %v2405 = vrot.slane %v2404, 1
        %v2406 = vadd.f32 %v2404, %v2405
        %v2407 = vrot.slane %v2115, 4
        %v2408 = vadd.f32 %v2115, %v2407
        %v2409 = vrot.slane %v2408, 2
        %v2410 = vadd.f32 %v2408, %v2409
        %v2411 = vrot.slane %v2410, 1
        %v2412 = vadd.f32 %v2410, %v2411
        %v2413 = vrot.slane %v2118, 4
        %v2414 = vadd.f32 %v2118, %v2413
        %v2415 = vrot.slane %v2414, 2
        %v2416 = vadd.f32 %v2414, %v2415
        %v2417 = vrot.slane %v2416, 1
        %v2418 = vadd.f32 %v2416, %v2417
        %v2419 = vrot.slane %v2121, 4
        %v2420 = vadd.f32 %v2121, %v2419
        %v2421 = vrot.slane %v2420, 2
        %v2422 = vadd.f32 %v2420, %v2421
        %v2423 = vrot.slane %v2422, 1
        %v2424 = vadd.f32 %v2422, %v2423
        %v2425 = vrot.slane %v2124, 4
        %v2426 = vadd.f32 %v2124, %v2425
        %v2427 = vrot.slane %v2426, 2
        %v2428 = vadd.f32 %v2426, %v2427
        %v2429 = vrot.slane %v2428, 1
        %v2430 = vadd.f32 %v2428, %v2429
        %v2431 = vrot.slane %v2127, 4
        %v2432 = vadd.f32 %v2127, %v2431
        %v2433 = vrot.slane %v2432, 2
        %v2434 = vadd.f32 %v2432, %v2433
        %v2435 = vrot.slane %v2434, 1
        %v2436 = vadd.f32 %v2434, %v2435
        %v2437 = vrot.slane %v2130, 4
        %v2438 = vadd.f32 %v2130, %v2437
        %v2439 = vrot.slane %v2438, 2
        %v2440 = vadd.f32 %v2438, %v2439
        %v2441 = vrot.slane %v2440, 1
        %v2442 = vadd.f32 %v2440, %v2441
        %v2443 = vrot.slane %v2133, 4
        %v2444 = vadd.f32 %v2133, %v2443
        %v2445 = vrot.slane %v2444, 2
        %v2446 = vadd.f32 %v2444, %v2445
        %v2447 = vrot.slane %v2446, 1
        %v2448 = vadd.f32 %v2446, %v2447
        %v2449 = vrot.slane %v2136, 4
        %v2450 = vadd.f32 %v2136, %v2449
        %v2451 = vrot.slane %v2450, 2
        %v2452 = vadd.f32 %v2450, %v2451
        %v2453 = vrot.slane %v2452, 1
        %v2454 = vadd.f32 %v2452, %v2453
        %v2455 = vrot.slane %v2139, 4
        %v2456 = vadd.f32 %v2139, %v2455
        %v2457 = vrot.slane %v2456, 2
        %v2458 = vadd.f32 %v2456, %v2457
        %v2459 = vrot.slane %v2458, 1
        %v2460 = vadd.f32 %v2458, %v2459
        %v2461 = vrot.slane %v2142, 4
        %v2462 = vadd.f32 %v2142, %v2461
        %v2463 = vrot.slane %v2462, 2
        %v2464 = vadd.f32 %v2462, %v2463
        %v2465 = vrot.slane %v2464, 1
        %v2466 = vadd.f32 %v2464, %v2465
        %v2467 = vrot.slane %v2145, 4
        %v2468 = vadd.f32 %v2145, %v2467
        %v2469 = vrot.slane %v2468, 2
        %v2470 = vadd.f32 %v2468, %v2469
        %v2471 = vrot.slane %v2470, 1
        %v2472 = vadd.f32 %v2470, %v2471
        %v2473 = vrot.slane %v2148, 4
        %v2474 = vadd.f32 %v2148, %v2473
        %v2475 = vrot.slane %v2474, 2
        %v2476 = vadd.f32 %v2474, %v2475
        %v2477 = vrot.slane %v2476, 1
        %v2478 = vadd.f32 %v2476, %v2477
        %v2479 = vrot.slane %v2151, 4
        %v2480 = vadd.f32 %v2151, %v2479
        %v2481 = vrot.slane %v2480, 2
        %v2482 = vadd.f32 %v2480, %v2481
        %v2483 = vrot.slane %v2482, 1
        %v2484 = vadd.f32 %v2482, %v2483
        %v2485 = vrot.slane %v2154, 4
        %v2486 = vadd.f32 %v2154, %v2485
        %v2487 = vrot.slane %v2486, 2
        %v2488 = vadd.f32 %v2486, %v2487
        %v2489 = vrot.slane %v2488, 1
        %v2490 = vadd.f32 %v2488, %v2489
        %v2491 = vrot.slane %v2157, 4
        %v2492 = vadd.f32 %v2157, %v2491
        %v2493 = vrot.slane %v2492, 2
        %v2494 = vadd.f32 %v2492, %v2493
        %v2495 = vrot.slane %v2494, 1
        %v2496 = vadd.f32 %v2494, %v2495
        %v2497 = vrot.slane %v2160, 4
        %v2498 = vadd.f32 %v2160, %v2497
        %v2499 = vrot.slane %v2498, 2
        %v2500 = vadd.f32 %v2498, %v2499
        %v2501 = vrot.slane %v2500, 1
        %v2502 = vadd.f32 %v2500, %v2501
        %v2503 = vrot.slane %v2163, 4
        %v2504 = vadd.f32 %v2163, %v2503
        %v2505 = vrot.slane %v2504, 2
        %v2506 = vadd.f32 %v2504, %v2505
        %v2507 = vrot.slane %v2506, 1
        %v2508 = vadd.f32 %v2506, %v2507
        %v2509 = vrot.slane %v2166, 4
        %v2510 = vadd.f32 %v2166, %v2509
        %v2511 = vrot.slane %v2510, 2
        %v2512 = vadd.f32 %v2510, %v2511
        %v2513 = vrot.slane %v2512, 1
        %v2514 = vadd.f32 %v2512, %v2513
        %v2515 = vrot.slane %v2169, 4
        %v2516 = vadd.f32 %v2169, %v2515
        %v2517 = vrot.slane %v2516, 2
        %v2518 = vadd.f32 %v2516, %v2517
        %v2519 = vrot.slane %v2518, 1
        %v2520 = vadd.f32 %v2518, %v2519
        %v2521 = vrot.slane %v2172, 4
        %v2522 = vadd.f32 %v2172, %v2521
        %v2523 = vrot.slane %v2522, 2
        %v2524 = vadd.f32 %v2522, %v2523
        %v2525 = vrot.slane %v2524, 1
        %v2526 = vadd.f32 %v2524, %v2525
        %v2527 = vrot.slane %v2175, 4
        %v2528 = vadd.f32 %v2175, %v2527
        %v2529 = vrot.slane %v2528, 2
        %v2530 = vadd.f32 %v2528, %v2529
        %v2531 = vrot.slane %v2530, 1
        %v2532 = vadd.f32 %v2530, %v2531
        %v2533 = vrot.slane %v2178, 4
        %v2534 = vadd.f32 %v2178, %v2533
        %v2535 = vrot.slane %v2534, 2
        %v2536 = vadd.f32 %v2534, %v2535
        %v2537 = vrot.slane %v2536, 1
        %v2538 = vadd.f32 %v2536, %v2537
        %v2539 = vrot.slane %v2181, 4
        %v2540 = vadd.f32 %v2181, %v2539
        %v2541 = vrot.slane %v2540, 2
        %v2542 = vadd.f32 %v2540, %v2541
        %v2543 = vrot.slane %v2542, 1
        %v2544 = vadd.f32 %v2542, %v2543
        %v2545 = vrot.slane %v2184, 4
        %v2546 = vadd.f32 %v2184, %v2545
        %v2547 = vrot.slane %v2546, 2
        %v2548 = vadd.f32 %v2546, %v2547
        %v2549 = vrot.slane %v2548, 1
        %v2550 = vadd.f32 %v2548, %v2549
        %v2551 = vrot.slane %v2187, 4
        %v2552 = vadd.f32 %v2187, %v2551
        %v2553 = vrot.slane %v2552, 2
        %v2554 = vadd.f32 %v2552, %v2553
        %v2555 = vrot.slane %v2554, 1
        %v2556 = vadd.f32 %v2554, %v2555
        %v2557 = vrot.slane %v2190, 4
        %v2558 = vadd.f32 %v2190, %v2557
        %v2559 = vrot.slane %v2558, 2
        %v2560 = vadd.f32 %v2558, %v2559
        %v2561 = vrot.slane %v2560, 1
        %v2562 = vadd.f32 %v2560, %v2561
        %v2563 = vrot.slane %v2193, 4
        %v2564 = vadd.f32 %v2193, %v2563
        %v2565 = vrot.slane %v2564, 2
        %v2566 = vadd.f32 %v2564, %v2565
        %v2567 = vrot.slane %v2566, 1
        %v2568 = vadd.f32 %v2566, %v2567
        %v2569 = vrot.slane %v2196, 4
        %v2570 = vadd.f32 %v2196, %v2569
        %v2571 = vrot.slane %v2570, 2
        %v2572 = vadd.f32 %v2570, %v2571
        %v2573 = vrot.slane %v2572, 1
        %v2574 = vadd.f32 %v2572, %v2573
        %v2575 = vrot.slane %v2199, 4
        %v2576 = vadd.f32 %v2199, %v2575
        %v2577 = vrot.slane %v2576, 2
        %v2578 = vadd.f32 %v2576, %v2577
        %v2579 = vrot.slane %v2578, 1
        %v2580 = vadd.f32 %v2578, %v2579
        %v2581 = vrot.slane %v2202, 4
        %v2582 = vadd.f32 %v2202, %v2581
        %v2583 = vrot.slane %v2582, 2
        %v2584 = vadd.f32 %v2582, %v2583
        %v2585 = vrot.slane %v2584, 1
        %v2586 = vadd.f32 %v2584, %v2585
        %v2587 = vmul.f32 %v1568, 0.001953125
        %v2588 = vmul.f32 %v1574, 0.001953125
        %v2589 = vmul.f32 %v1580, 0.001953125
        %v2590 = vmul.f32 %v1586, 0.001953125
        %v2591 = vmul.f32 %v1592, 0.001953125
        %v2592 = vmul.f32 %v1598, 0.001953125
        %v2593 = vmul.f32 %v1604, 0.001953125
        %v2594 = vmul.f32 %v1610, 0.001953125
        %v2595 = vmul.f32 %v1616, 0.001953125
        %v2596 = vmul.f32 %v1622, 0.001953125
        %v2597 = vmul.f32 %v1628, 0.001953125
        %v2598 = vmul.f32 %v1634, 0.001953125
        %v2599 = vmul.f32 %v1640, 0.001953125
        %v2600 = vmul.f32 %v1646, 0.001953125
        %v2601 = vmul.f32 %v1652, 0.001953125
        %v2602 = vmul.f32 %v1658, 0.001953125
        %v2603 = vmul.f32 %v1664, 0.001953125
        %v2604 = vmul.f32 %v1670, 0.001953125
        %v2605 = vmul.f32 %v1676, 0.001953125
        %v2606 = vmul.f32 %v1682, 0.001953125
        %v2607 = vmul.f32 %v1688, 0.001953125
        %v2608 = vmul.f32 %v1694, 0.001953125
        %v2609 = vmul.f32 %v1700, 0.001953125
        %v2610 = vmul.f32 %v1706, 0.001953125
        %v2611 = vmul.f32 %v1712, 0.001953125
        %v2612 = vmul.f32 %v1718, 0.001953125
        %v2613 = vmul.f32 %v1724, 0.001953125
        %v2614 = vmul.f32 %v1730, 0.001953125
        %v2615 = vmul.f32 %v1736, 0.001953125
        %v2616 = vmul.f32 %v1742, 0.001953125
        %v2617 = vmul.f32 %v1748, 0.001953125
        %v2618 = vmul.f32 %v1754, 0.001953125
        %v2619 = vmul.f32 %v1760, 0.001953125
        %v2620 = vmul.f32 %v1766, 0.001953125
        %v2621 = vmul.f32 %v1772, 0.001953125
        %v2622 = vmul.f32 %v1778, 0.001953125
        %v2623 = vmul.f32 %v1784, 0.001953125
        %v2624 = vmul.f32 %v1790, 0.001953125
        %v2625 = vmul.f32 %v1796, 0.001953125
        %v2626 = vmul.f32 %v1802, 0.001953125
        %v2627 = vmul.f32 %v1808, 0.001953125
        %v2628 = vmul.f32 %v1814, 0.001953125
        %v2629 = vmul.f32 %v1820, 0.001953125
        %v2630 = vmul.f32 %v1826, 0.001953125
        %v2631 = vmul.f32 %v1832, 0.001953125
        %v2632 = vmul.f32 %v1838, 0.001953125
        %v2633 = vmul.f32 %v1844, 0.001953125
        %v2634 = vmul.f32 %v1850, 0.001953125
        %v2635 = vmul.f32 %v1856, 0.001953125
        %v2636 = vmul.f32 %v1862, 0.001953125
        %v2637 = vmul.f32 %v1868, 0.001953125
        %v2638 = vmul.f32 %v1874, 0.001953125
        %v2639 = vmul.f32 %v1880, 0.001953125
        %v2640 = vmul.f32 %v1886, 0.001953125
        %v2641 = vmul.f32 %v1892, 0.001953125
        %v2642 = vmul.f32 %v1898, 0.001953125
        %v2643 = vmul.f32 %v1904, 0.001953125
        %v2644 = vmul.f32 %v1910, 0.001953125
        %v2645 = vmul.f32 %v1916, 0.001953125
        %v2646 = vmul.f32 %v1922, 0.001953125
        %v2647 = vmul.f32 %v1928, 0.001953125
        %v2648 = vmul.f32 %v1934, 0.001953125
        %v2649 = vmul.f32 %v1940, 0.001953125
        %v2650 = vmul.f32 %v1946, 0.001953125
        %v2651 = vmul.f32 %v2208, 0.001953125
        %v2652 = vmul.f32 %v2214, 0.001953125
        %v2653 = vmul.f32 %v2220, 0.001953125
        %v2654 = vmul.f32 %v2226, 0.001953125
        %v2655 = vmul.f32 %v2232, 0.001953125
        %v2656 = vmul.f32 %v2238, 0.001953125
        %v2657 = vmul.f32 %v2244, 0.001953125
        %v2658 = vmul.f32 %v2250, 0.001953125
        %v2659 = vmul.f32 %v2256, 0.001953125
        %v2660 = vmul.f32 %v2262, 0.001953125
        %v2661 = vmul.f32 %v2268, 0.001953125
        %v2662 = vmul.f32 %v2274, 0.001953125
        %v2663 = vmul.f32 %v2280, 0.001953125
        %v2664 = vmul.f32 %v2286, 0.001953125
        %v2665 = vmul.f32 %v2292, 0.001953125
        %v2666 = vmul.f32 %v2298, 0.001953125
        %v2667 = vmul.f32 %v2304, 0.001953125
        %v2668 = vmul.f32 %v2310, 0.001953125
        %v2669 = vmul.f32 %v2316, 0.001953125
        %v2670 = vmul.f32 %v2322, 0.001953125
        %v2671 = vmul.f32 %v2328, 0.001953125
        %v2672 = vmul.f32 %v2334, 0.001953125
        %v2673 = vmul.f32 %v2340, 0.001953125
        %v2674 = vmul.f32 %v2346, 0.001953125
        %v2675 = vmul.f32 %v2352, 0.001953125
        %v2676 = vmul.f32 %v2358, 0.001953125
        %v2677 = vmul.f32 %v2364, 0.001953125
        %v2678 = vmul.f32 %v2370, 0.001953125
        %v2679 = vmul.f32 %v2376, 0.001953125
        %v2680 = vmul.f32 %v2382, 0.001953125
        %v2681 = vmul.f32 %v2388, 0.001953125
        %v2682 = vmul.f32 %v2394, 0.001953125
        %v2683 = vmul.f32 %v2400, 0.001953125
        %v2684 = vmul.f32 %v2406, 0.001953125
        %v2685 = vmul.f32 %v2412, 0.001953125
        %v2686 = vmul.f32 %v2418, 0.001953125
        %v2687 = vmul.f32 %v2424, 0.001953125
        %v2688 = vmul.f32 %v2430, 0.001953125
        %v2689 = vmul.f32 %v2436, 0.001953125
        %v2690 = vmul.f32 %v2442, 0.001953125
        %v2691 = vmul.f32 %v2448, 0.001953125
        %v2692 = vmul.f32 %v2454, 0.001953125
        %v2693 = vmul.f32 %v2460, 0.001953125
        %v2694 = vmul.f32 %v2466, 0.001953125
        %v2695 = vmul.f32 %v2472, 0.001953125
        %v2696 = vmul.f32 %v2478, 0.001953125
        %v2697 = vmul.f32 %v2484, 0.001953125
        %v2698 = vmul.f32 %v2490, 0.001953125
        %v2699 = vmul.f32 %v2496, 0.001953125
        %v2700 = vmul.f32 %v2502, 0.001953125
        %v2701 = vmul.f32 %v2508, 0.001953125
        %v2702 = vmul.f32 %v2514, 0.001953125
        %v2703 = vmul.f32 %v2520, 0.001953125
        %v2704 = vmul.f32 %v2526, 0.001953125
        %v2705 = vmul.f32 %v2532, 0.001953125
        %v2706 = vmul.f32 %v2538, 0.001953125
        %v2707 = vmul.f32 %v2544, 0.001953125
        %v2708 = vmul.f32 %v2550, 0.001953125
        %v2709 = vmul.f32 %v2556, 0.001953125
        %v2710 = vmul.f32 %v2562, 0.001953125
        %v2711 = vmul.f32 %v2568, 0.001953125
        %v2712 = vmul.f32 %v2574, 0.001953125
        %v2713 = vmul.f32 %v2580, 0.001953125
        %v2714 = vmul.f32 %v2586, 0.001953125
        %v2715 = vmul.f32 %v2587, %v2587
        %v2716 = vmul.f32 %v2588, %v2588
        %v2717 = vmul.f32 %v2589, %v2589
        %v2718 = vmul.f32 %v2590, %v2590
        %v2719 = vmul.f32 %v2591, %v2591
        %v2720 = vmul.f32 %v2592, %v2592
        %v2721 = vmul.f32 %v2593, %v2593
        %v2722 = vmul.f32 %v2594, %v2594
        %v2723 = vmul.f32 %v2595, %v2595
        %v2724 = vmul.f32 %v2596, %v2596
        %v2725 = vmul.f32 %v2597, %v2597
        %v2726 = vmul.f32 %v2598, %v2598
        %v2727 = vmul.f32 %v2599, %v2599
        %v2728 = vmul.f32 %v2600, %v2600
        %v2729 = vmul.f32 %v2601, %v2601
        %v2730 = vmul.f32 %v2602, %v2602
        %v2731 = vmul.f32 %v2603, %v2603
        %v2732 = vmul.f32 %v2604, %v2604
        %v2733 = vmul.f32 %v2605, %v2605
        %v2734 = vmul.f32 %v2606, %v2606
        %v2735 = vmul.f32 %v2607, %v2607
        %v2736 = vmul.f32 %v2608, %v2608
        %v2737 = vmul.f32 %v2609, %v2609
        %v2738 = vmul.f32 %v2610, %v2610
        %v2739 = vmul.f32 %v2611, %v2611
        %v2740 = vmul.f32 %v2612, %v2612
        %v2741 = vmul.f32 %v2613, %v2613
        %v2742 = vmul.f32 %v2614, %v2614
        %v2743 = vmul.f32 %v2615, %v2615
        %v2744 = vmul.f32 %v2616, %v2616
        %v2745 = vmul.f32 %v2617, %v2617
        %v2746 = vmul.f32 %v2618, %v2618
        %v2747 = vmul.f32 %v2619, %v2619
        %v2748 = vmul.f32 %v2620, %v2620
        %v2749 = vmul.f32 %v2621, %v2621
        %v2750 = vmul.f32 %v2622, %v2622
        %v2751 = vmul.f32 %v2623, %v2623
        %v2752 = vmul.f32 %v2624, %v2624
        %v2753 = vmul.f32 %v2625, %v2625
        %v2754 = vmul.f32 %v2626, %v2626
        %v2755 = vmul.f32 %v2627, %v2627
        %v2756 = vmul.f32 %v2628, %v2628
        %v2757 = vmul.f32 %v2629, %v2629
        %v2758 = vmul.f32 %v2630, %v2630
        %v2759 = vmul.f32 %v2631, %v2631
        %v2760 = vmul.f32 %v2632, %v2632
        %v2761 = vmul.f32 %v2633, %v2633
        %v2762 = vmul.f32 %v2634, %v2634
        %v2763 = vmul.f32 %v2635, %v2635
        %v2764 = vmul.f32 %v2636, %v2636
        %v2765 = vmul.f32 %v2637, %v2637
        %v2766 = vmul.f32 %v2638, %v2638
        %v2767 = vmul.f32 %v2639, %v2639
        %v2768 = vmul.f32 %v2640, %v2640
        %v2769 = vmul.f32 %v2641, %v2641
        %v2770 = vmul.f32 %v2642, %v2642
        %v2771 = vmul.f32 %v2643, %v2643
        %v2772 = vmul.f32 %v2644, %v2644
        %v2773 = vmul.f32 %v2645, %v2645
        %v2774 = vmul.f32 %v2646, %v2646
        %v2775 = vmul.f32 %v2647, %v2647
        %v2776 = vmul.f32 %v2648, %v2648
        %v2777 = vmul.f32 %v2649, %v2649
        %v2778 = vmul.f32 %v2650, %v2650
        %v2779 = vsub.f32 %v2651, %v2715
        %v2780 = vsub.f32 %v2652, %v2716
        %v2781 = vsub.f32 %v2653, %v2717
        %v2782 = vsub.f32 %v2654, %v2718
        %v2783 = vsub.f32 %v2655, %v2719
        %v2784 = vsub.f32 %v2656, %v2720
        %v2785 = vsub.f32 %v2657, %v2721
        %v2786 = vsub.f32 %v2658, %v2722
        %v2787 = vsub.f32 %v2659, %v2723
        %v2788 = vsub.f32 %v2660, %v2724
        %v2789 = vsub.f32 %v2661, %v2725
        %v2790 = vsub.f32 %v2662, %v2726
        %v2791 = vsub.f32 %v2663, %v2727
        %v2792 = vsub.f32 %v2664, %v2728
        %v2793 = vsub.f32 %v2665, %v2729
        %v2794 = vsub.f32 %v2666, %v2730
        %v2795 = vsub.f32 %v2667, %v2731
        %v2796 = vsub.f32 %v2668, %v2732
        %v2797 = vsub.f32 %v2669, %v2733
        %v2798 = vsub.f32 %v2670, %v2734
        %v2799 = vsub.f32 %v2671, %v2735
        %v2800 = vsub.f32 %v2672, %v2736
        %v2801 = vsub.f32 %v2673, %v2737
        %v2802 = vsub.f32 %v2674, %v2738
        %v2803 = vsub.f32 %v2675, %v2739
        %v2804 = vsub.f32 %v2676, %v2740
        %v2805 = vsub.f32 %v2677, %v2741
        %v2806 = vsub.f32 %v2678, %v2742
        %v2807 = vsub.f32 %v2679, %v2743
        %v2808 = vsub.f32 %v2680, %v2744
        %v2809 = vsub.f32 %v2681, %v2745
        %v2810 = vsub.f32 %v2682, %v2746
        %v2811 = vsub.f32 %v2683, %v2747
        %v2812 = vsub.f32 %v2684, %v2748
        %v2813 = vsub.f32 %v2685, %v2749
        %v2814 = vsub.f32 %v2686, %v2750
        %v2815 = vsub.f32 %v2687, %v2751
        %v2816 = vsub.f32 %v2688, %v2752
        %v2817 = vsub.f32 %v2689, %v2753
        %v2818 = vsub.f32 %v2690, %v2754
        %v2819 = vsub.f32 %v2691, %v2755
        %v2820 = vsub.f32 %v2692, %v2756
        %v2821 = vsub.f32 %v2693, %v2757
        %v2822 = vsub.f32 %v2694, %v2758
        %v2823 = vsub.f32 %v2695, %v2759
        %v2824 = vsub.f32 %v2696, %v2760
        %v2825 = vsub.f32 %v2697, %v2761
        %v2826 = vsub.f32 %v2698, %v2762
        %v2827 = vsub.f32 %v2699, %v2763
        %v2828 = vsub.f32 %v2700, %v2764
        %v2829 = vsub.f32 %v2701, %v2765
        %v2830 = vsub.f32 %v2702, %v2766
        %v2831 = vsub.f32 %v2703, %v2767
        %v2832 = vsub.f32 %v2704, %v2768
        %v2833 = vsub.f32 %v2705, %v2769
        %v2834 = vsub.f32 %v2706, %v2770
        %v2835 = vsub.f32 %v2707, %v2771
        %v2836 = vsub.f32 %v2708, %v2772
        %v2837 = vsub.f32 %v2709, %v2773
        %v2838 = vsub.f32 %v2710, %v2774
        %v2839 = vsub.f32 %v2711, %v2775
        %v2840 = vsub.f32 %v2712, %v2776
        %v2841 = vsub.f32 %v2713, %v2777
        %v2842 = vsub.f32 %v2714, %v2778
        %v2843 = vmax.f32 %v2779, 0.0
        %v2844 = vmax.f32 %v2780, 0.0
        %v2845 = vmax.f32 %v2781, 0.0
        %v2846 = vmax.f32 %v2782, 0.0
        %v2847 = vmax.f32 %v2783, 0.0
        %v2848 = vmax.f32 %v2784, 0.0
        %v2849 = vmax.f32 %v2785, 0.0
        %v2850 = vmax.f32 %v2786, 0.0
        %v2851 = vmax.f32 %v2787, 0.0
        %v2852 = vmax.f32 %v2788, 0.0
        %v2853 = vmax.f32 %v2789, 0.0
        %v2854 = vmax.f32 %v2790, 0.0
        %v2855 = vmax.f32 %v2791, 0.0
        %v2856 = vmax.f32 %v2792, 0.0
        %v2857 = vmax.f32 %v2793, 0.0
        %v2858 = vmax.f32 %v2794, 0.0
        %v2859 = vmax.f32 %v2795, 0.0
        %v2860 = vmax.f32 %v2796, 0.0
        %v2861 = vmax.f32 %v2797, 0.0
        %v2862 = vmax.f32 %v2798, 0.0
        %v2863 = vmax.f32 %v2799, 0.0
        %v2864 = vmax.f32 %v2800, 0.0
        %v2865 = vmax.f32 %v2801, 0.0
        %v2866 = vmax.f32 %v2802, 0.0
        %v2867 = vmax.f32 %v2803, 0.0
        %v2868 = vmax.f32 %v2804, 0.0
        %v2869 = vmax.f32 %v2805, 0.0
        %v2870 = vmax.f32 %v2806, 0.0
        %v2871 = vmax.f32 %v2807, 0.0
        %v2872 = vmax.f32 %v2808, 0.0
        %v2873 = vmax.f32 %v2809, 0.0
        %v2874 = vmax.f32 %v2810, 0.0
        %v2875 = vmax.f32 %v2811, 0.0
        %v2876 = vmax.f32 %v2812, 0.0
        %v2877 = vmax.f32 %v2813, 0.0
        %v2878 = vmax.f32 %v2814, 0.0
        %v2879 = vmax.f32 %v2815, 0.0
        %v2880 = vmax.f32 %v2816, 0.0
        %v2881 = vmax.f32 %v2817, 0.0
        %v2882 = vmax.f32 %v2818, 0.0
        %v2883 = vmax.f32 %v2819, 0.0
        %v2884 = vmax.f32 %v2820, 0.0
        %v2885 = vmax.f32 %v2821, 0.0
        %v2886 = vmax.f32 %v2822, 0.0
        %v2887 = vmax.f32 %v2823, 0.0
        %v2888 = vmax.f32 %v2824, 0.0
        %v2889 = vmax.f32 %v2825, 0.0
        %v2890 = vmax.f32 %v2826, 0.0
        %v2891 = vmax.f32 %v2827, 0.0
        %v2892 = vmax.f32 %v2828, 0.0
        %v2893 = vmax.f32 %v2829, 0.0
        %v2894 = vmax.f32 %v2830, 0.0
        %v2895 = vmax.f32 %v2831, 0.0
        %v2896 = vmax.f32 %v2832, 0.0
        %v2897 = vmax.f32 %v2833, 0.0
        %v2898 = vmax.f32 %v2834, 0.0
        %v2899 = vmax.f32 %v2835, 0.0
        %v2900 = vmax.f32 %v2836, 0.0
        %v2901 = vmax.f32 %v2837, 0.0
        %v2902 = vmax.f32 %v2838, 0.0
        %v2903 = vmax.f32 %v2839, 0.0
        %v2904 = vmax.f32 %v2840, 0.0
        %v2905 = vmax.f32 %v2841, 0.0
        %v2906 = vmax.f32 %v2842, 0.0
        %v2907 = vadd.f32 %v2843, 1e-05
        %v2908 = vadd.f32 %v2844, 1e-05
        %v2909 = vadd.f32 %v2845, 1e-05
        %v2910 = vadd.f32 %v2846, 1e-05
        %v2911 = vadd.f32 %v2847, 1e-05
        %v2912 = vadd.f32 %v2848, 1e-05
        %v2913 = vadd.f32 %v2849, 1e-05
        %v2914 = vadd.f32 %v2850, 1e-05
        %v2915 = vadd.f32 %v2851, 1e-05
        %v2916 = vadd.f32 %v2852, 1e-05
        %v2917 = vadd.f32 %v2853, 1e-05
        %v2918 = vadd.f32 %v2854, 1e-05
        %v2919 = vadd.f32 %v2855, 1e-05
        %v2920 = vadd.f32 %v2856, 1e-05
        %v2921 = vadd.f32 %v2857, 1e-05
        %v2922 = vadd.f32 %v2858, 1e-05
        %v2923 = vadd.f32 %v2859, 1e-05
        %v2924 = vadd.f32 %v2860, 1e-05
        %v2925 = vadd.f32 %v2861, 1e-05
        %v2926 = vadd.f32 %v2862, 1e-05
        %v2927 = vadd.f32 %v2863, 1e-05
        %v2928 = vadd.f32 %v2864, 1e-05
        %v2929 = vadd.f32 %v2865, 1e-05
        %v2930 = vadd.f32 %v2866, 1e-05
        %v2931 = vadd.f32 %v2867, 1e-05
        %v2932 = vadd.f32 %v2868, 1e-05
        %v2933 = vadd.f32 %v2869, 1e-05
        %v2934 = vadd.f32 %v2870, 1e-05
        %v2935 = vadd.f32 %v2871, 1e-05
        %v2936 = vadd.f32 %v2872, 1e-05
        %v2937 = vadd.f32 %v2873, 1e-05
        %v2938 = vadd.f32 %v2874, 1e-05
        %v2939 = vadd.f32 %v2875, 1e-05
        %v2940 = vadd.f32 %v2876, 1e-05
        %v2941 = vadd.f32 %v2877, 1e-05
        %v2942 = vadd.f32 %v2878, 1e-05
        %v2943 = vadd.f32 %v2879, 1e-05
        %v2944 = vadd.f32 %v2880, 1e-05
        %v2945 = vadd.f32 %v2881, 1e-05
        %v2946 = vadd.f32 %v2882, 1e-05
        %v2947 = vadd.f32 %v2883, 1e-05
        %v2948 = vadd.f32 %v2884, 1e-05
        %v2949 = vadd.f32 %v2885, 1e-05
        %v2950 = vadd.f32 %v2886, 1e-05
        %v2951 = vadd.f32 %v2887, 1e-05
        %v2952 = vadd.f32 %v2888, 1e-05
        %v2953 = vadd.f32 %v2889, 1e-05
        %v2954 = vadd.f32 %v2890, 1e-05
        %v2955 = vadd.f32 %v2891, 1e-05
        %v2956 = vadd.f32 %v2892, 1e-05
        %v2957 = vadd.f32 %v2893, 1e-05
        %v2958 = vadd.f32 %v2894, 1e-05
        %v2959 = vadd.f32 %v2895, 1e-05
        %v2960 = vadd.f32 %v2896, 1e-05
        %v2961 = vadd.f32 %v2897, 1e-05
        %v2962 = vadd.f32 %v2898, 1e-05
        %v2963 = vadd.f32 %v2899, 1e-05
        %v2964 = vadd.f32 %v2900, 1e-05
        %v2965 = vadd.f32 %v2901, 1e-05
        %v2966 = vadd.f32 %v2902, 1e-05
        %v2967 = vadd.f32 %v2903, 1e-05
        %v2968 = vadd.f32 %v2904, 1e-05
        %v2969 = vadd.f32 %v2905, 1e-05
        %v2970 = vadd.f32 %v2906, 1e-05
        %v2971 = vrsqrt.pop %v2907
        %v2972 = vrsqrt.pop %v2908
        %v2973 = vrsqrt.pop %v2909
        %v2974 = vrsqrt.pop %v2910
        %v2975 = vrsqrt.pop %v2911
        %v2976 = vrsqrt.pop %v2912
        %v2977 = vrsqrt.pop %v2913
        %v2978 = vrsqrt.pop %v2914
        %v2979 = vrsqrt.pop %v2915
        %v2980 = vrsqrt.pop %v2916
        %v2981 = vrsqrt.pop %v2917
        %v2982 = vrsqrt.pop %v2918
        %v2983 = vrsqrt.pop %v2919
        %v2984 = vrsqrt.pop %v2920
        %v2985 = vrsqrt.pop %v2921
        %v2986 = vrsqrt.pop %v2922
        %v2987 = vrsqrt.pop %v2923
        %v2988 = vrsqrt.pop %v2924
        %v2989 = vrsqrt.pop %v2925
        %v2990 = vrsqrt.pop %v2926
        %v2991 = vrsqrt.pop %v2927
        %v2992 = vrsqrt.pop %v2928
        %v2993 = vrsqrt.pop %v2929
        %v2994 = vrsqrt.pop %v2930
        %v2995 = vrsqrt.pop %v2931
        %v2996 = vrsqrt.pop %v2932
        %v2997 = vrsqrt.pop %v2933
        %v2998 = vrsqrt.pop %v2934
        %v2999 = vrsqrt.pop %v2935
        %v3000 = vrsqrt.pop %v2936
        %v3001 = vrsqrt.pop %v2937
        %v3002 = vrsqrt.pop %v2938
        %v3003 = vrsqrt.pop %v2939
        %v3004 = vrsqrt.pop %v2940
        %v3005 = vrsqrt.pop %v2941
        %v3006 = vrsqrt.pop %v2942
        %v3007 = vrsqrt.pop %v2943
        %v3008 = vrsqrt.pop %v2944
        %v3009 = vrsqrt.pop %v2945
        %v3010 = vrsqrt.pop %v2946
        %v3011 = vrsqrt.pop %v2947
        %v3012 = vrsqrt.pop %v2948
        %v3013 = vrsqrt.pop %v2949
        %v3014 = vrsqrt.pop %v2950
        %v3015 = vrsqrt.pop %v2951
        %v3016 = vrsqrt.pop %v2952
        %v3017 = vrsqrt.pop %v2953
        %v3018 = vrsqrt.pop %v2954
        %v3019 = vrsqrt.pop %v2955
        %v3020 = vrsqrt.pop %v2956
        %v3021 = vrsqrt.pop %v2957
        %v3022 = vrsqrt.pop %v2958
        %v3023 = vrsqrt.pop %v2959
        %v3024 = vrsqrt.pop %v2960
        %v3025 = vrsqrt.pop %v2961
        %v3026 = vrsqrt.pop %v2962
        %v3027 = vrsqrt.pop %v2963
        %v3028 = vrsqrt.pop %v2964
        %v3029 = vrsqrt.pop %v2965
        %v3030 = vrsqrt.pop %v2966
        %v3031 = vrsqrt.pop %v2967
        %v3032 = vrsqrt.pop %v2968
        %v3033 = vrsqrt.pop %v2969
        %v3034 = vrsqrt.pop %v2970
        %v3035 = vsub.f32 %v1052, %v2587
        %v3036 = vsub.f32 %v1057, %v2588
        %v3037 = vsub.f32 %v1062, %v2589
        %v3038 = vsub.f32 %v1067, %v2590
        %v3039 = vsub.f32 %v1072, %v2591
        %v3040 = vsub.f32 %v1077, %v2592
        %v3041 = vsub.f32 %v1082, %v2593
        %v3042 = vsub.f32 %v1087, %v2594
        %v3043 = vsub.f32 %v1092, %v2595
        %v3044 = vsub.f32 %v1097, %v2596
        %v3045 = vsub.f32 %v1102, %v2597
        %v3046 = vsub.f32 %v1107, %v2598
        %v3047 = vsub.f32 %v1112, %v2599
        %v3048 = vsub.f32 %v1117, %v2600
        %v3049 = vsub.f32 %v1122, %v2601
        %v3050 = vsub.f32 %v1127, %v2602
        %v3051 = vsub.f32 %v1132, %v2603
        %v3052 = vsub.f32 %v1137, %v2604
        %v3053 = vsub.f32 %v1142, %v2605
        %v3054 = vsub.f32 %v1147, %v2606
        %v3055 = vsub.f32 %v1152, %v2607
        %v3056 = vsub.f32 %v1157, %v2608
        %v3057 = vsub.f32 %v1162, %v2609
        %v3058 = vsub.f32 %v1167, %v2610
        %v3059 = vsub.f32 %v1172, %v2611
        %v3060 = vsub.f32 %v1177, %v2612
        %v3061 = vsub.f32 %v1182, %v2613
        %v3062 = vsub.f32 %v1187, %v2614
        %v3063 = vsub.f32 %v1192, %v2615
        %v3064 = vsub.f32 %v1197, %v2616
        %v3065 = vsub.f32 %v1202, %v2617
        %v3066 = vsub.f32 %v1207, %v2618
        %v3067 = vsub.f32 %v1212, %v2619
        %v3068 = vsub.f32 %v1217, %v2620
        %v3069 = vsub.f32 %v1222, %v2621
        %v3070 = vsub.f32 %v1227, %v2622
        %v3071 = vsub.f32 %v1232, %v2623
        %v3072 = vsub.f32 %v1237, %v2624
        %v3073 = vsub.f32 %v1242, %v2625
        %v3074 = vsub.f32 %v1247, %v2626
        %v3075 = vsub.f32 %v1252, %v2627
        %v3076 = vsub.f32 %v1257, %v2628
        %v3077 = vsub.f32 %v1262, %v2629
        %v3078 = vsub.f32 %v1267, %v2630
        %v3079 = vsub.f32 %v1272, %v2631
        %v3080 = vsub.f32 %v1277, %v2632
        %v3081 = vsub.f32 %v1282, %v2633
        %v3082 = vsub.f32 %v1287, %v2634
        %v3083 = vsub.f32 %v1292, %v2635
        %v3084 = vsub.f32 %v1297, %v2636
        %v3085 = vsub.f32 %v1302, %v2637
        %v3086 = vsub.f32 %v1307, %v2638
        %v3087 = vsub.f32 %v1312, %v2639
        %v3088 = vsub.f32 %v1317, %v2640
        %v3089 = vsub.f32 %v1322, %v2641
        %v3090 = vsub.f32 %v1327, %v2642
        %v3091 = vsub.f32 %v1332, %v2643
        %v3092 = vsub.f32 %v1337, %v2644
        %v3093 = vsub.f32 %v1342, %v2645
        %v3094 = vsub.f32 %v1347, %v2646
        %v3095 = vsub.f32 %v1352, %v2647
        %v3096 = vsub.f32 %v1357, %v2648
        %v3097 = vsub.f32 %v1362, %v2649
        %v3098 = vsub.f32 %v1367, %v2650
        %v3099 = vmul.f32 %v3035, %v2971
        %v3100 = vmul.f32 %v3036, %v2972
        %v3101 = vmul.f32 %v3037, %v2973
        %v3102 = vmul.f32 %v3038, %v2974
        %v3103 = vmul.f32 %v3039, %v2975
        %v3104 = vmul.f32 %v3040, %v2976
        %v3105 = vmul.f32 %v3041, %v2977
        %v3106 = vmul.f32 %v3042, %v2978
        %v3107 = vmul.f32 %v3043, %v2979
        %v3108 = vmul.f32 %v3044, %v2980
        %v3109 = vmul.f32 %v3045, %v2981
        %v3110 = vmul.f32 %v3046, %v2982
        %v3111 = vmul.f32 %v3047, %v2983
        %v3112 = vmul.f32 %v3048, %v2984
        %v3113 = vmul.f32 %v3049, %v2985
        %v3114 = vmul.f32 %v3050, %v2986
        %v3115 = vmul.f32 %v3051, %v2987
        %v3116 = vmul.f32 %v3052, %v2988
        %v3117 = vmul.f32 %v3053, %v2989
        %v3118 = vmul.f32 %v3054, %v2990
        %v3119 = vmul.f32 %v3055, %v2991
        %v3120 = vmul.f32 %v3056, %v2992
        %v3121 = vmul.f32 %v3057, %v2993
        %v3122 = vmul.f32 %v3058, %v2994
        %v3123 = vmul.f32 %v3059, %v2995
        %v3124 = vmul.f32 %v3060, %v2996
        %v3125 = vmul.f32 %v3061, %v2997
        %v3126 = vmul.f32 %v3062, %v2998
        %v3127 = vmul.f32 %v3063, %v2999
        %v3128 = vmul.f32 %v3064, %v3000
        %v3129 = vmul.f32 %v3065, %v3001
        %v3130 = vmul.f32 %v3066, %v3002
        %v3131 = vmul.f32 %v3067, %v3003
        %v3132 = vmul.f32 %v3068, %v3004
        %v3133 = vmul.f32 %v3069, %v3005
        %v3134 = vmul.f32 %v3070, %v3006
        %v3135 = vmul.f32 %v3071, %v3007
        %v3136 = vmul.f32 %v3072, %v3008
        %v3137 = vmul.f32 %v3073, %v3009
        %v3138 = vmul.f32 %v3074, %v3010
        %v3139 = vmul.f32 %v3075, %v3011
        %v3140 = vmul.f32 %v3076, %v3012
        %v3141 = vmul.f32 %v3077, %v3013
        %v3142 = vmul.f32 %v3078, %v3014
        %v3143 = vmul.f32 %v3079, %v3015
        %v3144 = vmul.f32 %v3080, %v3016
        %v3145 = vmul.f32 %v3081, %v3017
        %v3146 = vmul.f32 %v3082, %v3018
        %v3147 = vmul.f32 %v3083, %v3019
        %v3148 = vmul.f32 %v3084, %v3020
        %v3149 = vmul.f32 %v3085, %v3021
        %v3150 = vmul.f32 %v3086, %v3022
        %v3151 = vmul.f32 %v3087, %v3023
        %v3152 = vmul.f32 %v3088, %v3024
        %v3153 = vmul.f32 %v3089, %v3025
        %v3154 = vmul.f32 %v3090, %v3026
        %v3155 = vmul.f32 %v3091, %v3027
        %v3156 = vmul.f32 %v3092, %v3028
        %v3157 = vmul.f32 %v3093, %v3029
        %v3158 = vmul.f32 %v3094, %v3030
        %v3159 = vmul.f32 %v3095, %v3031
        %v3160 = vmul.f32 %v3096, %v3032
        %v3161 = vmul.f32 %v3097, %v3033
        %v3162 = vmul.f32 %v3098, %v3034
        %v3163 = vmax.f32 %v3099, 0.0
        %v3164 = vmax.f32 %v3100, 0.0
        %v3165 = vmax.f32 %v3101, 0.0
        %v3166 = vmax.f32 %v3102, 0.0
        %v3167 = vmax.f32 %v3103, 0.0
        %v3168 = vmax.f32 %v3104, 0.0
        %v3169 = vmax.f32 %v3105, 0.0
        %v3170 = vmax.f32 %v3106, 0.0
        %v3171 = vmax.f32 %v3107, 0.0
        %v3172 = vmax.f32 %v3108, 0.0
        %v3173 = vmax.f32 %v3109, 0.0
        %v3174 = vmax.f32 %v3110, 0.0
        %v3175 = vmax.f32 %v3111, 0.0
        %v3176 = vmax.f32 %v3112, 0.0
        %v3177 = vmax.f32 %v3113, 0.0
        %v3178 = vmax.f32 %v3114, 0.0
        %v3179 = vmax.f32 %v3115, 0.0
        %v3180 = vmax.f32 %v3116, 0.0
        %v3181 = vmax.f32 %v3117, 0.0
        %v3182 = vmax.f32 %v3118, 0.0
        %v3183 = vmax.f32 %v3119, 0.0
        %v3184 = vmax.f32 %v3120, 0.0
        %v3185 = vmax.f32 %v3121, 0.0
        %v3186 = vmax.f32 %v3122, 0.0
        %v3187 = vmax.f32 %v3123, 0.0
        %v3188 = vmax.f32 %v3124, 0.0
        %v3189 = vmax.f32 %v3125, 0.0
        %v3190 = vmax.f32 %v3126, 0.0
        %v3191 = vmax.f32 %v3127, 0.0
        %v3192 = vmax.f32 %v3128, 0.0
        %v3193 = vmax.f32 %v3129, 0.0
        %v3194 = vmax.f32 %v3130, 0.0
        %v3195 = vmax.f32 %v3131, 0.0
        %v3196 = vmax.f32 %v3132, 0.0
        %v3197 = vmax.f32 %v3133, 0.0
        %v3198 = vmax.f32 %v3134, 0.0
        %v3199 = vmax.f32 %v3135, 0.0
        %v3200 = vmax.f32 %v3136, 0.0
        %v3201 = vmax.f32 %v3137, 0.0
        %v3202 = vmax.f32 %v3138, 0.0
        %v3203 = vmax.f32 %v3139, 0.0
        %v3204 = vmax.f32 %v3140, 0.0
        %v3205 = vmax.f32 %v3141, 0.0
        %v3206 = vmax.f32 %v3142, 0.0
        %v3207 = vmax.f32 %v3143, 0.0
        %v3208 = vmax.f32 %v3144, 0.0
        %v3209 = vmax.f32 %v3145, 0.0
        %v3210 = vmax.f32 %v3146, 0.0
        %v3211 = vmax.f32 %v3147, 0.0
        %v3212 = vmax.f32 %v3148, 0.0
        %v3213 = vmax.f32 %v3149, 0.0
        %v3214 = vmax.f32 %v3150, 0.0
        %v3215 = vmax.f32 %v3151, 0.0
        %v3216 = vmax.f32 %v3152, 0.0
        %v3217 = vmax.f32 %v3153, 0.0
        %v3218 = vmax.f32 %v3154, 0.0
        %v3219 = vmax.f32 %v3155, 0.0
        %v3220 = vmax.f32 %v3156, 0.0
        %v3221 = vmax.f32 %v3157, 0.0
        %v3222 = vmax.f32 %v3158, 0.0
        %v3223 = vmax.f32 %v3159, 0.0
        %v3224 = vmax.f32 %v3160, 0.0
        %v3225 = vmax.f32 %v3161, 0.0
        %v3226 = vmax.f32 %v3162, 0.0
        %v3227 = vsel %vm1370, %v3163, -inf
        %v3228 = vrot.slane %v3227, 4
        %v3229 = vmax.f32 %v3227, %v3228
        %v3230 = vrot.slane %v3229, 2
        %v3231 = vmax.f32 %v3229, %v3230
        %v3232 = vrot.slane %v3231, 1
        %v3233 = vmax.f32 %v3231, %v3232
        %v3234 = vsel %vm1370, %v3164, -inf
        %v3235 = vrot.slane %v3234, 4
        %v3236 = vmax.f32 %v3234, %v3235
        %v3237 = vrot.slane %v3236, 2
        %v3238 = vmax.f32 %v3236, %v3237
        %v3239 = vrot.slane %v3238, 1
        %v3240 = vmax.f32 %v3238, %v3239
        %v3241 = vsel %vm1370, %v3165, -inf
        %v3242 = vrot.slane %v3241, 4
        %v3243 = vmax.f32 %v3241, %v3242
        %v3244 = vrot.slane %v3243, 2
        %v3245 = vmax.f32 %v3243, %v3244
        %v3246 = vrot.slane %v3245, 1
        %v3247 = vmax.f32 %v3245, %v3246
        %v3248 = vsel %vm1370, %v3166, -inf
        %v3249 = vrot.slane %v3248, 4
        %v3250 = vmax.f32 %v3248, %v3249
        %v3251 = vrot.slane %v3250, 2
        %v3252 = vmax.f32 %v3250, %v3251
        %v3253 = vrot.slane %v3252, 1
        %v3254 = vmax.f32 %v3252, %v3253
        %v3255 = vsel %vm1370, %v3167, -inf
        %v3256 = vrot.slane %v3255, 4
        %v3257 = vmax.f32 %v3255, %v3256
        %v3258 = vrot.slane %v3257, 2
        %v3259 = vmax.f32 %v3257, %v3258
        %v3260 = vrot.slane %v3259, 1
        %v3261 = vmax.f32 %v3259, %v3260
        %v3262 = vsel %vm1370, %v3168, -inf
        %v3263 = vrot.slane %v3262, 4
        %v3264 = vmax.f32 %v3262, %v3263
        %v3265 = vrot.slane %v3264, 2
        %v3266 = vmax.f32 %v3264, %v3265
        %v3267 = vrot.slane %v3266, 1
        %v3268 = vmax.f32 %v3266, %v3267
        %v3269 = vsel %vm1370, %v3169, -inf
        %v3270 = vrot.slane %v3269, 4
        %v3271 = vmax.f32 %v3269, %v3270
        %v3272 = vrot.slane %v3271, 2
        %v3273 = vmax.f32 %v3271, %v3272
        %v3274 = vrot.slane %v3273, 1
        %v3275 = vmax.f32 %v3273, %v3274
        %v3276 = vsel %vm1370, %v3170, -inf
        %v3277 = vrot.slane %v3276, 4
        %v3278 = vmax.f32 %v3276, %v3277
        %v3279 = vrot.slane %v3278, 2
        %v3280 = vmax.f32 %v3278, %v3279
        %v3281 = vrot.slane %v3280, 1
        %v3282 = vmax.f32 %v3280, %v3281
        %v3283 = vsel %vm1370, %v3171, -inf
        %v3284 = vrot.slane %v3283, 4
        %v3285 = vmax.f32 %v3283, %v3284
        %v3286 = vrot.slane %v3285, 2
        %v3287 = vmax.f32 %v3285, %v3286
        %v3288 = vrot.slane %v3287, 1
        %v3289 = vmax.f32 %v3287, %v3288
        %v3290 = vsel %vm1370, %v3172, -inf
        %v3291 = vrot.slane %v3290, 4
        %v3292 = vmax.f32 %v3290, %v3291
        %v3293 = vrot.slane %v3292, 2
        %v3294 = vmax.f32 %v3292, %v3293
        %v3295 = vrot.slane %v3294, 1
        %v3296 = vmax.f32 %v3294, %v3295
        %v3297 = vsel %vm1370, %v3173, -inf
        %v3298 = vrot.slane %v3297, 4
        %v3299 = vmax.f32 %v3297, %v3298
        %v3300 = vrot.slane %v3299, 2
        %v3301 = vmax.f32 %v3299, %v3300
        %v3302 = vrot.slane %v3301, 1
        %v3303 = vmax.f32 %v3301, %v3302
        %v3304 = vsel %vm1370, %v3174, -inf
        %v3305 = vrot.slane %v3304, 4
        %v3306 = vmax.f32 %v3304, %v3305
        %v3307 = vrot.slane %v3306, 2
        %v3308 = vmax.f32 %v3306, %v3307
        %v3309 = vrot.slane %v3308, 1
        %v3310 = vmax.f32 %v3308, %v3309
        %v3311 = vsel %vm1370, %v3175, -inf
        %v3312 = vrot.slane %v3311, 4
        %v3313 = vmax.f32 %v3311, %v3312
        %v3314 = vrot.slane %v3313, 2
        %v3315 = vmax.f32 %v3313, %v3314
        %v3316 = vrot.slane %v3315, 1
        %v3317 = vmax.f32 %v3315, %v3316
        %v3318 = vsel %vm1370, %v3176, -inf
        %v3319 = vrot.slane %v3318, 4
        %v3320 = vmax.f32 %v3318, %v3319
        %v3321 = vrot.slane %v3320, 2
        %v3322 = vmax.f32 %v3320, %v3321
        %v3323 = vrot.slane %v3322, 1
        %v3324 = vmax.f32 %v3322, %v3323
        %v3325 = vsel %vm1370, %v3177, -inf
        %v3326 = vrot.slane %v3325, 4
        %v3327 = vmax.f32 %v3325, %v3326
        %v3328 = vrot.slane %v3327, 2
        %v3329 = vmax.f32 %v3327, %v3328
        %v3330 = vrot.slane %v3329, 1
        %v3331 = vmax.f32 %v3329, %v3330
        %v3332 = vsel %vm1370, %v3178, -inf
        %v3333 = vrot.slane %v3332, 4
        %v3334 = vmax.f32 %v3332, %v3333
        %v3335 = vrot.slane %v3334, 2
        %v3336 = vmax.f32 %v3334, %v3335
        %v3337 = vrot.slane %v3336, 1
        %v3338 = vmax.f32 %v3336, %v3337
        %v3339 = vsel %vm1370, %v3179, -inf
        %v3340 = vrot.slane %v3339, 4
        %v3341 = vmax.f32 %v3339, %v3340
        %v3342 = vrot.slane %v3341, 2
        %v3343 = vmax.f32 %v3341, %v3342
        %v3344 = vrot.slane %v3343, 1
        %v3345 = vmax.f32 %v3343, %v3344
        %v3346 = vsel %vm1370, %v3180, -inf
        %v3347 = vrot.slane %v3346, 4
        %v3348 = vmax.f32 %v3346, %v3347
        %v3349 = vrot.slane %v3348, 2
        %v3350 = vmax.f32 %v3348, %v3349
        %v3351 = vrot.slane %v3350, 1
        %v3352 = vmax.f32 %v3350, %v3351
        %v3353 = vsel %vm1370, %v3181, -inf
        %v3354 = vrot.slane %v3353, 4
        %v3355 = vmax.f32 %v3353, %v3354
        %v3356 = vrot.slane %v3355, 2
        %v3357 = vmax.f32 %v3355, %v3356
        %v3358 = vrot.slane %v3357, 1
        %v3359 = vmax.f32 %v3357, %v3358
        %v3360 = vsel %vm1370, %v3182, -inf
        %v3361 = vrot.slane %v3360, 4
        %v3362 = vmax.f32 %v3360, %v3361
        %v3363 = vrot.slane %v3362, 2
        %v3364 = vmax.f32 %v3362, %v3363
        %v3365 = vrot.slane %v3364, 1
        %v3366 = vmax.f32 %v3364, %v3365
        %v3367 = vsel %vm1370, %v3183, -inf
        %v3368 = vrot.slane %v3367, 4
        %v3369 = vmax.f32 %v3367, %v3368
        %v3370 = vrot.slane %v3369, 2
        %v3371 = vmax.f32 %v3369, %v3370
        %v3372 = vrot.slane %v3371, 1
        %v3373 = vmax.f32 %v3371, %v3372
        %v3374 = vsel %vm1370, %v3184, -inf
        %v3375 = vrot.slane %v3374, 4
        %v3376 = vmax.f32 %v3374, %v3375
        %v3377 = vrot.slane %v3376, 2
        %v3378 = vmax.f32 %v3376, %v3377
        %v3379 = vrot.slane %v3378, 1
        %v3380 = vmax.f32 %v3378, %v3379
        %v3381 = vsel %vm1370, %v3185, -inf
        %v3382 = vrot.slane %v3381, 4
        %v3383 = vmax.f32 %v3381, %v3382
        %v3384 = vrot.slane %v3383, 2
        %v3385 = vmax.f32 %v3383, %v3384
        %v3386 = vrot.slane %v3385, 1
        %v3387 = vmax.f32 %v3385, %v3386
        %v3388 = vsel %vm1370, %v3186, -inf
        %v3389 = vrot.slane %v3388, 4
        %v3390 = vmax.f32 %v3388, %v3389
        %v3391 = vrot.slane %v3390, 2
        %v3392 = vmax.f32 %v3390, %v3391
        %v3393 = vrot.slane %v3392, 1
        %v3394 = vmax.f32 %v3392, %v3393
        %v3395 = vsel %vm1370, %v3187, -inf
        %v3396 = vrot.slane %v3395, 4
        %v3397 = vmax.f32 %v3395, %v3396
        %v3398 = vrot.slane %v3397, 2
        %v3399 = vmax.f32 %v3397, %v3398
        %v3400 = vrot.slane %v3399, 1
        %v3401 = vmax.f32 %v3399, %v3400
        %v3402 = vsel %vm1370, %v3188, -inf
        %v3403 = vrot.slane %v3402, 4
        %v3404 = vmax.f32 %v3402, %v3403
        %v3405 = vrot.slane %v3404, 2
        %v3406 = vmax.f32 %v3404, %v3405
        %v3407 = vrot.slane %v3406, 1
        %v3408 = vmax.f32 %v3406, %v3407
        %v3409 = vsel %vm1370, %v3189, -inf
        %v3410 = vrot.slane %v3409, 4
        %v3411 = vmax.f32 %v3409, %v3410
        %v3412 = vrot.slane %v3411, 2
        %v3413 = vmax.f32 %v3411, %v3412
        %v3414 = vrot.slane %v3413, 1
        %v3415 = vmax.f32 %v3413, %v3414
        %v3416 = vsel %vm1370, %v3190, -inf
        %v3417 = vrot.slane %v3416, 4
        %v3418 = vmax.f32 %v3416, %v3417
        %v3419 = vrot.slane %v3418, 2
        %v3420 = vmax.f32 %v3418, %v3419
        %v3421 = vrot.slane %v3420, 1
        %v3422 = vmax.f32 %v3420, %v3421
        %v3423 = vsel %vm1370, %v3191, -inf
        %v3424 = vrot.slane %v3423, 4
        %v3425 = vmax.f32 %v3423, %v3424
        %v3426 = vrot.slane %v3425, 2
        %v3427 = vmax.f32 %v3425, %v3426
        %v3428 = vrot.slane %v3427, 1
        %v3429 = vmax.f32 %v3427, %v3428
        %v3430 = vsel %vm1370, %v3192, -inf
        %v3431 = vrot.slane %v3430, 4
        %v3432 = vmax.f32 %v3430, %v3431
        %v3433 = vrot.slane %v3432, 2
        %v3434 = vmax.f32 %v3432, %v3433
        %v3435 = vrot.slane %v3434, 1
        %v3436 = vmax.f32 %v3434, %v3435
        %v3437 = vsel %vm1370, %v3193, -inf
        %v3438 = vrot.slane %v3437, 4
        %v3439 = vmax.f32 %v3437, %v3438
        %v3440 = vrot.slane %v3439, 2
        %v3441 = vmax.f32 %v3439, %v3440
        %v3442 = vrot.slane %v3441, 1
        %v3443 = vmax.f32 %v3441, %v3442
        %v3444 = vsel %vm1370, %v3194, -inf
        %v3445 = vrot.slane %v3444, 4
        %v3446 = vmax.f32 %v3444, %v3445
        %v3447 = vrot.slane %v3446, 2
        %v3448 = vmax.f32 %v3446, %v3447
        %v3449 = vrot.slane %v3448, 1
        %v3450 = vmax.f32 %v3448, %v3449
        %v3451 = vsel %vm1370, %v3195, -inf
        %v3452 = vrot.slane %v3451, 4
        %v3453 = vmax.f32 %v3451, %v3452
        %v3454 = vrot.slane %v3453, 2
        %v3455 = vmax.f32 %v3453, %v3454
        %v3456 = vrot.slane %v3455, 1
        %v3457 = vmax.f32 %v3455, %v3456
        %v3458 = vsel %vm1370, %v3196, -inf
        %v3459 = vrot.slane %v3458, 4
        %v3460 = vmax.f32 %v3458, %v3459
        %v3461 = vrot.slane %v3460, 2
        %v3462 = vmax.f32 %v3460, %v3461
        %v3463 = vrot.slane %v3462, 1
        %v3464 = vmax.f32 %v3462, %v3463
        %v3465 = vsel %vm1370, %v3197, -inf
        %v3466 = vrot.slane %v3465, 4
        %v3467 = vmax.f32 %v3465, %v3466
        %v3468 = vrot.slane %v3467, 2
        %v3469 = vmax.f32 %v3467, %v3468
        %v3470 = vrot.slane %v3469, 1
        %v3471 = vmax.f32 %v3469, %v3470
        %v3472 = vsel %vm1370, %v3198, -inf
        %v3473 = vrot.slane %v3472, 4
        %v3474 = vmax.f32 %v3472, %v3473
        %v3475 = vrot.slane %v3474, 2
        %v3476 = vmax.f32 %v3474, %v3475
        %v3477 = vrot.slane %v3476, 1
        %v3478 = vmax.f32 %v3476, %v3477
        %v3479 = vsel %vm1370, %v3199, -inf
        %v3480 = vrot.slane %v3479, 4
        %v3481 = vmax.f32 %v3479, %v3480
        %v3482 = vrot.slane %v3481, 2
        %v3483 = vmax.f32 %v3481, %v3482
        %v3484 = vrot.slane %v3483, 1
        %v3485 = vmax.f32 %v3483, %v3484
        %v3486 = vsel %vm1370, %v3200, -inf
        %v3487 = vrot.slane %v3486, 4
        %v3488 = vmax.f32 %v3486, %v3487
        %v3489 = vrot.slane %v3488, 2
        %v3490 = vmax.f32 %v3488, %v3489
        %v3491 = vrot.slane %v3490, 1
        %v3492 = vmax.f32 %v3490, %v3491
        %v3493 = vsel %vm1370, %v3201, -inf
        %v3494 = vrot.slane %v3493, 4
        %v3495 = vmax.f32 %v3493, %v3494
        %v3496 = vrot.slane %v3495, 2
        %v3497 = vmax.f32 %v3495, %v3496
        %v3498 = vrot.slane %v3497, 1
        %v3499 = vmax.f32 %v3497, %v3498
        %v3500 = vsel %vm1370, %v3202, -inf
        %v3501 = vrot.slane %v3500, 4
        %v3502 = vmax.f32 %v3500, %v3501
        %v3503 = vrot.slane %v3502, 2
        %v3504 = vmax.f32 %v3502, %v3503
        %v3505 = vrot.slane %v3504, 1
        %v3506 = vmax.f32 %v3504, %v3505
        %v3507 = vsel %vm1370, %v3203, -inf
        %v3508 = vrot.slane %v3507, 4
        %v3509 = vmax.f32 %v3507, %v3508
        %v3510 = vrot.slane %v3509, 2
        %v3511 = vmax.f32 %v3509, %v3510
        %v3512 = vrot.slane %v3511, 1
        %v3513 = vmax.f32 %v3511, %v3512
        %v3514 = vsel %vm1370, %v3204, -inf
        %v3515 = vrot.slane %v3514, 4
        %v3516 = vmax.f32 %v3514, %v3515
        %v3517 = vrot.slane %v3516, 2
        %v3518 = vmax.f32 %v3516, %v3517
        %v3519 = vrot.slane %v3518, 1
        %v3520 = vmax.f32 %v3518, %v3519
        %v3521 = vsel %vm1370, %v3205, -inf
        %v3522 = vrot.slane %v3521, 4
        %v3523 = vmax.f32 %v3521, %v3522
        %v3524 = vrot.slane %v3523, 2
        %v3525 = vmax.f32 %v3523, %v3524
        %v3526 = vrot.slane %v3525, 1
        %v3527 = vmax.f32 %v3525, %v3526
        %v3528 = vsel %vm1370, %v3206, -inf
        %v3529 = vrot.slane %v3528, 4
        %v3530 = vmax.f32 %v3528, %v3529
        %v3531 = vrot.slane %v3530, 2
        %v3532 = vmax.f32 %v3530, %v3531
        %v3533 = vrot.slane %v3532, 1
        %v3534 = vmax.f32 %v3532, %v3533
        %v3535 = vsel %vm1370, %v3207, -inf
        %v3536 = vrot.slane %v3535, 4
        %v3537 = vmax.f32 %v3535, %v3536
        %v3538 = vrot.slane %v3537, 2
        %v3539 = vmax.f32 %v3537, %v3538
        %v3540 = vrot.slane %v3539, 1
        %v3541 = vmax.f32 %v3539, %v3540
        %v3542 = vsel %vm1370, %v3208, -inf
        %v3543 = vrot.slane %v3542, 4
        %v3544 = vmax.f32 %v3542, %v3543
        %v3545 = vrot.slane %v3544, 2
        %v3546 = vmax.f32 %v3544, %v3545
        %v3547 = vrot.slane %v3546, 1
        %v3548 = vmax.f32 %v3546, %v3547
        %v3549 = vsel %vm1370, %v3209, -inf
        %v3550 = vrot.slane %v3549, 4
        %v3551 = vmax.f32 %v3549, %v3550
        %v3552 = vrot.slane %v3551, 2
        %v3553 = vmax.f32 %v3551, %v3552
        %v3554 = vrot.slane %v3553, 1
        %v3555 = vmax.f32 %v3553, %v3554
        %v3556 = vsel %vm1370, %v3210, -inf
        %v3557 = vrot.slane %v3556, 4
        %v3558 = vmax.f32 %v3556, %v3557
        %v3559 = vrot.slane %v3558, 2
        %v3560 = vmax.f32 %v3558, %v3559
        %v3561 = vrot.slane %v3560, 1
        %v3562 = vmax.f32 %v3560, %v3561
        %v3563 = vsel %vm1370, %v3211, -inf
        %v3564 = vrot.slane %v3563, 4
        %v3565 = vmax.f32 %v3563, %v3564
        %v3566 = vrot.slane %v3565, 2
        %v3567 = vmax.f32 %v3565, %v3566
        %v3568 = vrot.slane %v3567, 1
        %v3569 = vmax.f32 %v3567, %v3568
        %v3570 = vsel %vm1370, %v3212, -inf
        %v3571 = vrot.slane %v3570, 4
        %v3572 = vmax.f32 %v3570, %v3571
        %v3573 = vrot.slane %v3572, 2
        %v3574 = vmax.f32 %v3572, %v3573
        %v3575 = vrot.slane %v3574, 1
        %v3576 = vmax.f32 %v3574, %v3575
        %v3577 = vsel %vm1370, %v3213, -inf
        %v3578 = vrot.slane %v3577, 4
        %v3579 = vmax.f32 %v3577, %v3578
        %v3580 = vrot.slane %v3579, 2
        %v3581 = vmax.f32 %v3579, %v3580
        %v3582 = vrot.slane %v3581, 1
        %v3583 = vmax.f32 %v3581, %v3582
        %v3584 = vsel %vm1370, %v3214, -inf
        %v3585 = vrot.slane %v3584, 4
        %v3586 = vmax.f32 %v3584, %v3585
        %v3587 = vrot.slane %v3586, 2
        %v3588 = vmax.f32 %v3586, %v3587
        %v3589 = vrot.slane %v3588, 1
        %v3590 = vmax.f32 %v3588, %v3589
        %v3591 = vsel %vm1370, %v3215, -inf
        %v3592 = vrot.slane %v3591, 4
        %v3593 = vmax.f32 %v3591, %v3592
        %v3594 = vrot.slane %v3593, 2
        %v3595 = vmax.f32 %v3593, %v3594
        %v3596 = vrot.slane %v3595, 1
        %v3597 = vmax.f32 %v3595, %v3596
        %v3598 = vsel %vm1370, %v3216, -inf
        %v3599 = vrot.slane %v3598, 4
        %v3600 = vmax.f32 %v3598, %v3599
        %v3601 = vrot.slane %v3600, 2
        %v3602 = vmax.f32 %v3600, %v3601
        %v3603 = vrot.slane %v3602, 1
        %v3604 = vmax.f32 %v3602, %v3603
        %v3605 = vsel %vm1370, %v3217, -inf
        %v3606 = vrot.slane %v3605, 4
        %v3607 = vmax.f32 %v3605, %v3606
        %v3608 = vrot.slane %v3607, 2
        %v3609 = vmax.f32 %v3607, %v3608
        %v3610 = vrot.slane %v3609, 1
        %v3611 = vmax.f32 %v3609, %v3610
        %v3612 = vsel %vm1370, %v3218, -inf
        %v3613 = vrot.slane %v3612, 4
        %v3614 = vmax.f32 %v3612, %v3613
        %v3615 = vrot.slane %v3614, 2
        %v3616 = vmax.f32 %v3614, %v3615
        %v3617 = vrot.slane %v3616, 1
        %v3618 = vmax.f32 %v3616, %v3617
        %v3619 = vsel %vm1370, %v3219, -inf
        %v3620 = vrot.slane %v3619, 4
        %v3621 = vmax.f32 %v3619, %v3620
        %v3622 = vrot.slane %v3621, 2
        %v3623 = vmax.f32 %v3621, %v3622
        %v3624 = vrot.slane %v3623, 1
        %v3625 = vmax.f32 %v3623, %v3624
        %v3626 = vsel %vm1370, %v3220, -inf
        %v3627 = vrot.slane %v3626, 4
        %v3628 = vmax.f32 %v3626, %v3627
        %v3629 = vrot.slane %v3628, 2
        %v3630 = vmax.f32 %v3628, %v3629
        %v3631 = vrot.slane %v3630, 1
        %v3632 = vmax.f32 %v3630, %v3631
        %v3633 = vsel %vm1370, %v3221, -inf
        %v3634 = vrot.slane %v3633, 4
        %v3635 = vmax.f32 %v3633, %v3634
        %v3636 = vrot.slane %v3635, 2
        %v3637 = vmax.f32 %v3635, %v3636
        %v3638 = vrot.slane %v3637, 1
        %v3639 = vmax.f32 %v3637, %v3638
        %v3640 = vsel %vm1370, %v3222, -inf
        %v3641 = vrot.slane %v3640, 4
        %v3642 = vmax.f32 %v3640, %v3641
        %v3643 = vrot.slane %v3642, 2
        %v3644 = vmax.f32 %v3642, %v3643
        %v3645 = vrot.slane %v3644, 1
        %v3646 = vmax.f32 %v3644, %v3645
        %v3647 = vsel %vm1370, %v3223, -inf
        %v3648 = vrot.slane %v3647, 4
        %v3649 = vmax.f32 %v3647, %v3648
        %v3650 = vrot.slane %v3649, 2
        %v3651 = vmax.f32 %v3649, %v3650
        %v3652 = vrot.slane %v3651, 1
        %v3653 = vmax.f32 %v3651, %v3652
        %v3654 = vsel %vm1370, %v3224, -inf
        %v3655 = vrot.slane %v3654, 4
        %v3656 = vmax.f32 %v3654, %v3655
        %v3657 = vrot.slane %v3656, 2
        %v3658 = vmax.f32 %v3656, %v3657
        %v3659 = vrot.slane %v3658, 1
        %v3660 = vmax.f32 %v3658, %v3659
        %v3661 = vsel %vm1370, %v3225, -inf
        %v3662 = vrot.slane %v3661, 4
        %v3663 = vmax.f32 %v3661, %v3662
        %v3664 = vrot.slane %v3663, 2
        %v3665 = vmax.f32 %v3663, %v3664
        %v3666 = vrot.slane %v3665, 1
        %v3667 = vmax.f32 %v3665, %v3666
        %v3668 = vsel %vm1370, %v3226, -inf
        %v3669 = vrot.slane %v3668, 4
        %v3670 = vmax.f32 %v3668, %v3669
        %v3671 = vrot.slane %v3670, 2
        %v3672 = vmax.f32 %v3670, %v3671
        %v3673 = vrot.slane %v3672, 1
        %v3674 = vmax.f32 %v3672, %v3673
        %3739 = vrot.lane.b32.xlu0 %v3233, 64
        %v3740 = vpop.permute.xlu0 %3739
        %3741 = vrot.lane.b32.xlu0 %v3240, 64
        %v3742 = vpop.permute.xlu0 %3741
        %3743 = vrot.lane.b32.xlu0 %v3247, 64
        %v3744 = vpop.permute.xlu0 %3743
        %3745 = vrot.lane.b32.xlu0 %v3254, 64
        %v3746 = vpop.permute.xlu0 %3745
        %3747 = vrot.lane.b32.xlu0 %v3261, 64
        %v3748 = vpop.permute.xlu0 %3747
        %3749 = vrot.lane.b32.xlu0 %v3268, 64
        %v3750 = vpop.permute.xlu0 %3749
        %3751 = vrot.lane.b32.xlu0 %v3275, 64
        %v3752 = vpop.permute.xlu0 %3751
        %3753 = vrot.lane.b32.xlu0 %v3282, 64
        %v3754 = vpop.permute.xlu0 %3753
        %3755 = vrot.lane.b32.xlu0 %v3289, 64
        %v3756 = vpop.permute.xlu0 %3755
        %3757 = vrot.lane.b32.xlu0 %v3296, 64
        %v3758 = vpop.permute.xlu0 %3757
        %3759 = vrot.lane.b32.xlu0 %v3303, 64
        %v3760 = vpop.permute.xlu0 %3759
        %3761 = vrot.lane.b32.xlu0 %v3310, 64
        %v3762 = vpop.permute.xlu0 %3761
        %3763 = vrot.lane.b32.xlu0 %v3317, 64
        %v3764 = vpop.permute.xlu0 %3763
        %3765 = vrot.lane.b32.xlu0 %v3324, 64
        %v3766 = vpop.permute.xlu0 %3765
        %3767 = vrot.lane.b32.xlu0 %v3331, 64
        %v3768 = vpop.permute.xlu0 %3767
        %3769 = vrot.lane.b32.xlu0 %v3338, 64
        %v3770 = vpop.permute.xlu0 %3769
        %3771 = vrot.lane.b32.xlu0 %v3345, 64
        %v3772 = vpop.permute.xlu0 %3771
        %3773 = vrot.lane.b32.xlu0 %v3352, 64
        %v3774 = vpop.permute.xlu0 %3773
        %3775 = vrot.lane.b32.xlu0 %v3359, 64
        %v3776 = vpop.permute.xlu0 %3775
        %3777 = vrot.lane.b32.xlu0 %v3366, 64
        %v3778 = vpop.permute.xlu0 %3777
        %3779 = vrot.lane.b32.xlu0 %v3373, 64
        %v3780 = vpop.permute.xlu0 %3779
        %3781 = vrot.lane.b32.xlu0 %v3380, 64
        %v3782 = vpop.permute.xlu0 %3781
        %3783 = vrot.lane.b32.xlu0 %v3387, 64
        %v3784 = vpop.permute.xlu0 %3783
        %3785 = vrot.lane.b32.xlu0 %v3394, 64
        %v3786 = vpop.permute.xlu0 %3785
        %3787 = vrot.lane.b32.xlu0 %v3401, 64
        %v3788 = vpop.permute.xlu0 %3787
        %3789 = vrot.lane.b32.xlu0 %v3408, 64
        %v3790 = vpop.permute.xlu0 %3789
        %3791 = vrot.lane.b32.xlu0 %v3415, 64
        %v3792 = vpop.permute.xlu0 %3791
        %3793 = vrot.lane.b32.xlu0 %v3422, 64
        %v3794 = vpop.permute.xlu0 %3793
        %3795 = vrot.lane.b32.xlu0 %v3429, 64
        %v3796 = vpop.permute.xlu0 %3795
        %3797 = vrot.lane.b32.xlu0 %v3436, 64
        %v3798 = vpop.permute.xlu0 %3797
        %3799 = vrot.lane.b32.xlu0 %v3443, 64
        %v3800 = vpop.permute.xlu0 %3799
        %3801 = vrot.lane.b32.xlu0 %v3450, 64
        %v3802 = vpop.permute.xlu0 %3801
        %3803 = vrot.lane.b32.xlu0 %v3457, 64
        %v3804 = vpop.permute.xlu0 %3803
        %3805 = vrot.lane.b32.xlu0 %v3464, 64
        %v3806 = vpop.permute.xlu0 %3805
        %3807 = vrot.lane.b32.xlu0 %v3471, 64
        %v3808 = vpop.permute.xlu0 %3807
        %3809 = vrot.lane.b32.xlu0 %v3478, 64
        %v3810 = vpop.permute.xlu0 %3809
        %3811 = vrot.lane.b32.xlu0 %v3485, 64
        %v3812 = vpop.permute.xlu0 %3811
        %3813 = vrot.lane.b32.xlu0 %v3492, 64
        %v3814 = vpop.permute.xlu0 %3813
        %3815 = vrot.lane.b32.xlu0 %v3499, 64
        %v3816 = vpop.permute.xlu0 %3815
        %3817 = vrot.lane.b32.xlu0 %v3506, 64
        %v3818 = vpop.permute.xlu0 %3817
        %3819 = vrot.lane.b32.xlu0 %v3513, 64
        %v3820 = vpop.permute.xlu0 %3819
        %3821 = vrot.lane.b32.xlu0 %v3520, 64
        %v3822 = vpop.permute.xlu0 %3821
        %3823 = vrot.lane.b32.xlu0 %v3527, 64
        %v3824 = vpop.permute.xlu0 %3823
        %3825 = vrot.lane.b32.xlu0 %v3534, 64
        %v3826 = vpop.permute.xlu0 %3825
        %3827 = vrot.lane.b32.xlu0 %v3541, 64
        %v3828 = vpop.permute.xlu0 %3827
        %3829 = vrot.lane.b32.xlu0 %v3548, 64
        %v3830 = vpop.permute.xlu0 %3829
        %3831 = vrot.lane.b32.xlu0 %v3555, 64
        %v3832 = vpop.permute.xlu0 %3831
        %3833 = vrot.lane.b32.xlu0 %v3562, 64
        %v3834 = vpop.permute.xlu0 %3833
        %3835 = vrot.lane.b32.xlu0 %v3569, 64
        %v3836 = vpop.permute.xlu0 %3835
        %3837 = vrot.lane.b32.xlu0 %v3576, 64
        %v3838 = vpop.permute.xlu0 %3837
        %3839 = vrot.lane.b32.xlu0 %v3583, 64
        %v3840 = vpop.permute.xlu0 %3839
        %3841 = vrot.lane.b32.xlu0 %v3590, 64
        %v3842 = vpop.permute.xlu0 %3841
        %3843 = vrot.lane.b32.xlu0 %v3597, 64
        %v3844 = vpop.permute.xlu0 %3843
        %3845 = vrot.lane.b32.xlu0 %v3604, 64
        %v3846 = vpop.permute.xlu0 %3845
        %3847 = vrot.lane.b32.xlu0 %v3611, 64
        %v3848 = vpop.permute.xlu0 %3847
        %3849 = vrot.lane.b32.xlu0 %v3618, 64
        %v3850 = vpop.permute.xlu0 %3849
        %3851 = vrot.lane.b32.xlu0 %v3625, 64
        %v3852 = vpop.permute.xlu0 %3851
        %3853 = vrot.lane.b32.xlu0 %v3632, 64
        %v3854 = vpop.permute.xlu0 %3853
        %3855 = vrot.lane.b32.xlu0 %v3639, 64
        %v3856 = vpop.permute.xlu0 %3855
        %3857 = vrot.lane.b32.xlu0 %v3646, 64
        %v3858 = vpop.permute.xlu0 %3857
        %3859 = vrot.lane.b32.xlu0 %v3653, 64
        %v3860 = vpop.permute.xlu0 %3859
        %3861 = vrot.lane.b32.xlu0 %v3660, 64
        %v3862 = vpop.permute.xlu0 %3861
        %3863 = vrot.lane.b32.xlu0 %v3667, 64
        %v3864 = vpop.permute.xlu0 %3863
        %3865 = vrot.lane.b32.xlu0 %v3674, 64
        %v3866 = vpop.permute.xlu0 %3865
        %v3931 = vsel %vm1370, %v3163, %v3740
        %v3932 = vsel %vm1370, %v3164, %v3742
        %v3933 = vsel %vm1370, %v3165, %v3744
        %v3934 = vsel %vm1370, %v3166, %v3746
        %v3935 = vsel %vm1370, %v3167, %v3748
        %v3936 = vsel %vm1370, %v3168, %v3750
        %v3937 = vsel %vm1370, %v3169, %v3752
        %v3938 = vsel %vm1370, %v3170, %v3754
        %v3939 = vsel %vm1370, %v3171, %v3756
        %v3940 = vsel %vm1370, %v3172, %v3758
        %v3941 = vsel %vm1370, %v3173, %v3760
        %v3942 = vsel %vm1370, %v3174, %v3762
        %v3943 = vsel %vm1370, %v3175, %v3764
        %v3944 = vsel %vm1370, %v3176, %v3766
        %v3945 = vsel %vm1370, %v3177, %v3768
        %v3946 = vsel %vm1370, %v3178, %v3770
        %v3947 = vsel %vm1370, %v3179, %v3772
        %v3948 = vsel %vm1370, %v3180, %v3774
        %v3949 = vsel %vm1370, %v3181, %v3776
        %v3950 = vsel %vm1370, %v3182, %v3778
        %v3951 = vsel %vm1370, %v3183, %v3780
        %v3952 = vsel %vm1370, %v3184, %v3782
        %v3953 = vsel %vm1370, %v3185, %v3784
        %v3954 = vsel %vm1370, %v3186, %v3786
        %v3955 = vsel %vm1370, %v3187, %v3788
        %v3956 = vsel %vm1370, %v3188, %v3790
        %v3957 = vsel %vm1370, %v3189, %v3792
        %v3958 = vsel %vm1370, %v3190, %v3794
        %v3959 = vsel %vm1370, %v3191, %v3796
        %v3960 = vsel %vm1370, %v3192, %v3798
        %v3961 = vsel %vm1370, %v3193, %v3800
        %v3962 = vsel %vm1370, %v3194, %v3802
        %v3963 = vsel %vm1370, %v3195, %v3804
        %v3964 = vsel %vm1370, %v3196, %v3806
        %v3965 = vsel %vm1370, %v3197, %v3808
        %v3966 = vsel %vm1370, %v3198, %v3810
        %v3967 = vsel %vm1370, %v3199, %v3812
        %v3968 = vsel %vm1370, %v3200, %v3814
        %v3969 = vsel %vm1370, %v3201, %v3816
        %v3970 = vsel %vm1370, %v3202, %v3818
        %v3971 = vsel %vm1370, %v3203, %v3820
        %v3972 = vsel %vm1370, %v3204, %v3822
        %v3973 = vsel %vm1370, %v3205, %v3824
        %v3974 = vsel %vm1370, %v3206, %v3826
        %v3975 = vsel %vm1370, %v3207, %v3828
        %v3976 = vsel %vm1370, %v3208, %v3830
        %v3977 = vsel %vm1370, %v3209, %v3832
        %v3978 = vsel %vm1370, %v3210, %v3834
        %v3979 = vsel %vm1370, %v3211, %v3836
        %v3980 = vsel %vm1370, %v3212, %v3838
        %v3981 = vsel %vm1370, %v3213, %v3840
        %v3982 = vsel %vm1370, %v3214, %v3842
        %v3983 = vsel %vm1370, %v3215, %v3844
        %v3984 = vsel %vm1370, %v3216, %v3846
        %v3985 = vsel %vm1370, %v3217, %v3848
        %v3986 = vsel %vm1370, %v3218, %v3850
        %v3987 = vsel %vm1370, %v3219, %v3852
        %v3988 = vsel %vm1370, %v3220, %v3854
        %v3989 = vsel %vm1370, %v3221, %v3856
        %v3990 = vsel %vm1370, %v3222, %v3858
        %v3991 = vsel %vm1370, %v3223, %v3860
        %v3992 = vsel %vm1370, %v3224, %v3862
        %v3993 = vsel %vm1370, %v3225, %v3864
        %v3994 = vsel %vm1370, %v3226, %v3866
        %3995 = vst [vmem:[%s242] sm:$0xff] %v3931
        %3996 = vst [vmem:[%s242 + $0x8] sm:$0xff] %v3932
        %3997 = vst [vmem:[%s242 + $0x10] sm:$0xff] %v3933
        %3998 = vst [vmem:[%s242 + $0x18] sm:$0xff] %v3934
        %3999 = vst [vmem:[%s242 + $0x20] sm:$0xff] %v3935
        %4000 = vst [vmem:[%s242 + $0x28] sm:$0xff] %v3936
        %4001 = vst [vmem:[%s242 + $0x30] sm:$0xff] %v3937
        %4002 = vst [vmem:[%s242 + $0x38] sm:$0xff] %v3938
        %4003 = vst [vmem:[%s242 + $0x40] sm:$0xff] %v3939
        %4004 = vst [vmem:[%s242 + $0x48] sm:$0xff] %v3940
        %4005 = vst [vmem:[%s242 + $0x50] sm:$0xff] %v3941
        %4006 = vst [vmem:[%s242 + $0x58] sm:$0xff] %v3942
        %4007 = vst [vmem:[%s242 + $0x60] sm:$0xff] %v3943
        %4008 = vst [vmem:[%s242 + $0x68] sm:$0xff] %v3944
        %4009 = vst [vmem:[%s242 + $0x70] sm:$0xff] %v3945
        %4010 = vst [vmem:[%s242 + $0x78] sm:$0xff] %v3946
        %4011 = vst [vmem:[%s242 + $0x80] sm:$0xff] %v3947
        %4012 = vst [vmem:[%s242 + $0x88] sm:$0xff] %v3948
        %4013 = vst [vmem:[%s242 + $0x90] sm:$0xff] %v3949
        %4014 = vst [vmem:[%s242 + $0x98] sm:$0xff] %v3950
        %4015 = vst [vmem:[%s242 + $0xa0] sm:$0xff] %v3951
        %4016 = vst [vmem:[%s242 + $0xa8] sm:$0xff] %v3952
        %4017 = vst [vmem:[%s242 + $0xb0] sm:$0xff] %v3953
        %4018 = vst [vmem:[%s242 + $0xb8] sm:$0xff] %v3954
        %4019 = vst [vmem:[%s242 + $0xc0] sm:$0xff] %v3955
        %4020 = vst [vmem:[%s242 + $0xc8] sm:$0xff] %v3956
        %4021 = vst [vmem:[%s242 + $0xd0] sm:$0xff] %v3957
        %4022 = vst [vmem:[%s242 + $0xd8] sm:$0xff] %v3958
        %4023 = vst [vmem:[%s242 + $0xe0] sm:$0xff] %v3959
        %4024 = vst [vmem:[%s242 + $0xe8] sm:$0xff] %v3960
        %4025 = vst [vmem:[%s242 + $0xf0] sm:$0xff] %v3961
        %4026 = vst [vmem:[%s242 + $0xf8] sm:$0xff] %v3962
        %4027 = vst [vmem:[%s242 + $0x100] sm:$0xff] %v3963
        %4028 = vst [vmem:[%s242 + $0x108] sm:$0xff] %v3964
        %4029 = vst [vmem:[%s242 + $0x110] sm:$0xff] %v3965
        %4030 = vst [vmem:[%s242 + $0x118] sm:$0xff] %v3966
        %4031 = vst [vmem:[%s242 + $0x120] sm:$0xff] %v3967
        %4032 = vst [vmem:[%s242 + $0x128] sm:$0xff] %v3968
        %4033 = vst [vmem:[%s242 + $0x130] sm:$0xff] %v3969
        %4034 = vst [vmem:[%s242 + $0x138] sm:$0xff] %v3970
        %4035 = vst [vmem:[%s242 + $0x140] sm:$0xff] %v3971
        %4036 = vst [vmem:[%s242 + $0x148] sm:$0xff] %v3972
        %4037 = vst [vmem:[%s242 + $0x150] sm:$0xff] %v3973
        %4038 = vst [vmem:[%s242 + $0x158] sm:$0xff] %v3974
        %4039 = vst [vmem:[%s242 + $0x160] sm:$0xff] %v3975
        %4040 = vst [vmem:[%s242 + $0x168] sm:$0xff] %v3976
        %4041 = vst [vmem:[%s242 + $0x170] sm:$0xff] %v3977
        %4042 = vst [vmem:[%s242 + $0x178] sm:$0xff] %v3978
        %4043 = vst [vmem:[%s242 + $0x180] sm:$0xff] %v3979
        %4044 = vst [vmem:[%s242 + $0x188] sm:$0xff] %v3980
        %4045 = vst [vmem:[%s242 + $0x190] sm:$0xff] %v3981
        %4046 = vst [vmem:[%s242 + $0x198] sm:$0xff] %v3982
        %4047 = vst [vmem:[%s242 + $0x1a0] sm:$0xff] %v3983
        %4048 = vst [vmem:[%s242 + $0x1a8] sm:$0xff] %v3984
        %4049 = vst [vmem:[%s242 + $0x1b0] sm:$0xff] %v3985
        %4050 = vst [vmem:[%s242 + $0x1b8] sm:$0xff] %v3986
        %4051 = vst [vmem:[%s242 + $0x1c0] sm:$0xff] %v3987
        %4052 = vst [vmem:[%s242 + $0x1c8] sm:$0xff] %v3988
        %4053 = vst [vmem:[%s242 + $0x1d0] sm:$0xff] %v3989
        %4054 = vst [vmem:[%s242 + $0x1d8] sm:$0xff] %v3990
        %4055 = vst [vmem:[%s242 + $0x1e0] sm:$0xff] %v3991
        %4056 = vst [vmem:[%s242 + $0x1e8] sm:$0xff] %v3992
        %4057 = vst [vmem:[%s242 + $0x1f0] sm:$0xff] %v3993
        %4058 = vst [vmem:[%s242 + $0x1f8] sm:$0xff] %v3994
        %s4059 = sand.u32 %s140, 1
        %s4060 = scalar_lea.sflag [#allocation4], %s4059
        %s4061 = sand.u32 %s140, 1
        %s4062 = smul.addr %s4061, 512
        %s4063 = scalar_lea.vmem [#allocation5], %s4062
        // Predicated region
        $region45: #{tpu_custom_call.1} parent=39 // pred_check
          %p4064 = pneg %p150
        $region46: #{tpu_custom_call.1} parent=39 // pred_check_branch
          %4066 = sbr.rel (%p4064) target = $region48
        $region47: #{tpu_custom_call.1} parent=39 // pred_region
          %s4067 = smul.u32 64, %s22
          %s4069 = ssub.s32 8192, 8192
          %4070 = vsyncadd %s4060, %s4069
          %s4071 = smul.addr %s4067, 128
          %s4072 = scalar_lea.hbm %s5, %s4071
          %s4073 = sshll.u32 %s4063, 4
          %s4074 = int_to_ptr.vmem [resolvable:$true] %s4073
          %4079 = dma.vmem_to_hbm [thread:$0]  %s4074, 8192, %s4072, %s4060, 128, 128, 8
        $region48: #{tpu_custom_call.1} parent=39 // pred_fallthru
          _
      $region40: #{tpu_custom_call.1} parent=5 // pred_fallthru
        _
      %p4080 = scmp.le.s32.totalorder 2, %s17
      // Predicated region
      $region49: #{tpu_custom_call.1} parent=5 // pred_check
        %p4081 = pneg %p4080
      $region50: #{tpu_custom_call.1} parent=5 // pred_check_branch
        %4083 = sbr.rel (%p4081) target = $region52
      $region51: #{tpu_custom_call.1} parent=5 // pred_region
        %s4084 = ssub.s32 %s17, 2
        // Predicated region
        $region53: #{tpu_custom_call.1} parent=51 // pred_check
          %p4085 = pneg %p156
        $region54: #{tpu_custom_call.1} parent=51 // pred_check_branch
          %4087 = sbr.rel (%p4085) target = $region56
        $region55: #{tpu_custom_call.1} parent=51 // pred_region
          %s4088 = sand.u32 %s141, 1
          %s4089 = scalar_lea.sflag [#allocation4], %s4088
          %s4090 = sand.u32 %s141, 1
          %s4091 = smul.addr %s4090, 512
          %s4092 = scalar_lea.vmem [#allocation5], %s4091
          %4093 = dma.done %s4089, 8192
        $region56: #{tpu_custom_call.1} parent=51 // pred_fallthru
          _
      $region52: #{tpu_custom_call.1} parent=5 // pred_fallthru
        _
    $region6: #{tpu_custom_call.1} parent=1 // loop_footer
      %s21 = sadd.s32 1, %s17
    $region7: #{tpu_custom_call.1} parent=1 // loop_footer_branch
      %16 = sbr.rel target = $region3
    $region8: #{tpu_custom_call.1} parent=1 // loop_exit
      _
    %4094 = vsyncpa [#allocation3], 1
    %s4095 = scalar_lea.sflag [#allocation3], 1
    %4096 = vsyncpa %s4095, 1
    %4097 = vsyncpa [#allocation4], 1
    %s4098 = scalar_lea.sflag [#allocation4], 1
    %4099 = vsyncpa %s4098, 1

</llo_original>
